<compile_context>
chip_gen: v7x
topology: tpu7x:2x2x1
jax: 0.10.0
libtpu: 0.0.40
codegen_flags: <defaults>
</compile_context>

<pallas_src>
import math
import numpy as np
import jax
import jax.numpy as jnp
from jax.experimental import pallas as pl
from jax.experimental.pallas import tpu as pltpu


# ----------------------------------------------------------------------------
# DirectionalUnraveling.__init__ ported to pure Python/numpy (static indices).
# ----------------------------------------------------------------------------
def build_unraveling_levels(n, channels, scales, patch_size):
    groups = channels // 3
    quadrants = []
    for quadrant in range(3):
        directions = []
        for c in range(0, channels // (3 * scales)):
            levels = []
            for i in range(0, n // 2):
                level = []
                for j in range(i, n - i):
                    if quadrant == 0:
                        level.append((j, i, c))
                        level.append((j, i, c + 1 * groups))
                        level.append((j, i, c + 2 * groups))
                    if quadrant == 1:
                        level.append((i, j, c))
                        level.append((i, j, c + 1 * groups))
                        level.append((i, j, c + 2 * groups))
                    if quadrant == 2:
                        if j > n // 2 or n - (i + 1) > n // 2:
                            level.append((j, n - (i + 1), c))
                            level.append((n - (i + 1), j, c))
                            level.append((j, n - (i + 1), c + 1 * groups))
                            level.append((n - (i + 1), j, c + 1 * groups))
                            level.append((j, n - (i + 1), c + 2 * groups))
                            level.append((n - (i + 1), j, c + 2 * groups))
                # torch code uses set(); order is irrelevant because the
                # per-level Linear weights are ours to initialize -> use sorted.
                level = sorted(set(level))
                a = np.array([t[0] for t in level], dtype=np.int32)
                b = np.array([t[1] for t in level], dtype=np.int32)
                cc = np.array([t[2] for t in level], dtype=np.int32)
                levels.append((a, b, cc))
            directions.append(levels)
        quadrants.append(directions)

    out_levels = []
    for quadrant in quadrants:
        for direction in quadrant:
            for i in range(len(direction) // patch_size):
                sl = range(i * patch_size, (i + 1) * patch_size)
                a = np.concatenate([direction[j][0] for j in sl], 0)
                b = np.concatenate([direction[j][1] for j in sl], 0)
                cc = np.concatenate([direction[j][2] for j in sl], 0)
                out_levels.append((a, b, cc))
    return out_levels


# ----------------------------------------------------------------------------
# Pallas kernel: batched per-level Linear projection (bias folded into w).
#   g_ref : (LB, B, K)  f32   gathered frequency values, column K-1 == 1.0
#   w_ref : (LB, K, E)  bf16  padded per-level weight; row K-1 == bias
#   o_ref : (LB, B, E)  f32
# ----------------------------------------------------------------------------
def _embed_kernel(g_ref, w_ref, o_ref):
    g = g_ref[...]                               # (LB, B, K) f32
    w = w_ref[...].astype(jnp.float32)           # (LB, K, E) bf16 -> f32 (VPU)
    out = jnp.einsum("lbk,lke->lbe", g, w,
                     preferred_element_type=jnp.float32)   # MXU, f32 accum
    o_ref[...] = out.astype(o_ref.dtype)


def _pick_level_block(num_patches, max_lb=16):
    """Largest divisor of num_patches <= max_lb (keeps grid even-ish and the
    double-buffered blocks far under v7x's 32 MiB scoped VMEM)."""
    for lb in range(min(max_lb, num_patches), 0, -1):
        if num_patches % lb == 0:
            return lb
    return 1


def directional_freq_embed(x, flat_idx, w_pad):
    """x: (B, C, H, W) f32 -> tokens (B, num_patches, embed_dim) f32."""
    B, C, H, W = x.shape
    num_patches, K, E = w_pad.shape
    chw = C * H * W

    # Append a constant-1 slot so index CHW gathers the folded-bias input.
    src = jnp.concatenate([x.reshape(B, chw), jnp.ones((B, 1), x.dtype)], axis=1)

    # TODO(synk): fuse this static-index gather into the kernel (jnp.take on a
    # fully-VMEM-resident x) to remove the extra HBM round trip for `g`.
    g = jnp.take(src, flat_idx.reshape(-1), axis=1)          # (B, P*K)
    g = g.reshape(B, num_patches, K).transpose(1, 0, 2)      # (P, B, K)

    LB = _pick_level_block(num_patches)
    grid = (num_patches // LB,)

    out = pl.pallas_call(
        _embed_kernel,
        out_shape=jax.ShapeDtypeStruct((num_patches, B, E), jnp.float32),
        grid_spec=pltpu.PrefetchScalarGridSpec(
            num_scalar_prefetch=0,
            grid=grid,
            in_specs=[
                pl.BlockSpec((LB, B, K), lambda l: (l, 0, 0)),
                pl.BlockSpec((LB, K, E), lambda l: (l, 0, 0)),
            ],
            out_specs=pl.BlockSpec((LB, B, E), lambda l: (l, 0, 0)),
        ),
        compiler_params=pltpu.CompilerParams(
            dimension_semantics=("parallel",)),
    )(g, w_pad)
    return jnp.transpose(out, (1, 0, 2))                      # (B, P, E) — tiny


# ----------------------------------------------------------------------------
# Module setup: deterministic parameter init + padding to common K (+1 lane
# reserved for the folded bias), weights stored in bf16.
# ----------------------------------------------------------------------------
def make_directional_freq_embed(img_size, patch_size, in_chans, embed_dim, scales, key):
    levels = build_unraveling_levels(img_size, in_chans, scales, patch_size)
    num_patches = math.ceil((img_size // 2) / patch_size) * 3 * (in_chans // (scales * 3))
    assert len(levels) == num_patches

    H = W = img_size
    chw = in_chans * H * W
    lens = [len(a) for (a, b, c) in levels]
    lmax_raw = max(max(lens), 1)
    # +1 reserves the constant-1 / bias lane; round up to a 128-lane multiple.
    K = ((lmax_raw + 1 + 127) // 128) * 128

    flat_idx = np.zeros((num_patches, K), dtype=np.int32)     # pad slots -> 0 (weight rows are 0)
    w_pad = np.zeros((num_patches, K, embed_dim), dtype=np.float32)
    w_list, b_list = [], []

    keys = jax.random.split(key, 2 * num_patches)
    for l, (a, b, c) in enumerate(levels):
        L = len(a)
        # Linear(L * (in_chans // (scales*30)), embed_dim): with this config the
        # factor is 1, so in_features == L, exactly as the forward requires.
        Wl = 0.02 * jax.random.normal(keys[2 * l], (L, embed_dim), jnp.float32)
        bl = 0.02 * jax.random.normal(keys[2 * l + 1], (embed_dim,), jnp.float32)
        # Store weights/bias in bf16 (halves the dominant HBM stream). The
        # reference uses the same bf16-rounded values (zero padding is exact in
        # bf16, preserving the "padded rows contribute nothing" invariant).
        Wl = np.asarray(Wl.astype(jnp.bfloat16).astype(jnp.float32))
        bl = np.asarray(bl.astype(jnp.bfloat16).astype(jnp.float32))
        w_list.append(Wl)
        b_list.append(bl)
        if L > 0:
            flat_idx[l, :L] = c.astype(np.int64) * H * W + a.astype(np.int64) * W + b
            w_pad[l, :L, :] = Wl
        flat_idx[l, K - 1] = chw          # gathers the appended constant-1 slot
        w_pad[l, K - 1, :] = bl           # bias folded into the matmul

    params = dict(flat_idx=jnp.asarray(flat_idx),
                  w_pad=jnp.asarray(w_pad, dtype=jnp.bfloat16))
    return params, levels, w_list, b_list


def reference_forward(x, levels, w_list, b_list):
    toks = []
    for (a, b, c), Wl, bl in zip(levels, w_list, b_list):
        vals = x[:, jnp.asarray(c), jnp.asarray(a), jnp.asarray(b)]   # (B, L)
        toks.append(jnp.einsum("bl,le->be", vals, jnp.asarray(Wl),
                               precision=jax.lax.Precision.HIGHEST) + jnp.asarray(bl))
    return jnp.stack(toks, axis=-2)                                    # (B, P, E)


if __name__ == "__main__":
    # small but consistent config: in_chans // (scales*30) must be 1 so that the
    # per-level Linear in_features matches the level length (as in the module).
    B, img_size, patch_size, in_chans, embed_dim, scales = 2, 16, 4, 30, 32, 1

    key = jax.random.PRNGKey(0)
    kx, kp = jax.random.split(key)
    x = jax.random.normal(kx, (B, in_chans, img_size, img_size), jnp.float32)

    params, levels, w_list, b_list = make_directional_freq_embed(
        img_size, patch_size, in_chans, embed_dim, scales, kp)

    fwd = jax.jit(directional_freq_embed)
    tokens = jax.block_until_ready(fwd(x, params["flat_idx"], params["w_pad"]))

    ref = jax.block_until_ready(reference_forward(x, levels, w_list, b_list))
    assert tokens.shape == (B, len(levels), embed_dim), tokens.shape
    np.testing.assert_allclose(np.asarray(tokens), np.asarray(ref), rtol=1e-4, atol=1e-4)

    print("KERNEL_OK")
</pallas_src>

<mosaic_0001>
module attributes {stable_mosaic.version = 11 : i64} {
  func.func @_embed_kernel(%arg0: i32, %arg1: memref<15x2x384xf32, #tpu.memory_space<vmem>>, %arg2: memref<15x384x32xbf16, #tpu.memory_space<vmem>>, %arg3: memref<15x2x32xf32, #tpu.memory_space<vmem>>) attributes {dimension_semantics = [#tpu.dimension_semantics<parallel>], iteration_bounds = array<i64: 4>, scalar_prefetch = 0 : i64, scratch_operands = 0 : i64, tpu.core_type = #tpu.core_type<tc>, window_params = [{transform_indices = @transform_0, window_bounds = array<i64: 15, 2, 384>}, {transform_indices = @transform_1, window_bounds = array<i64: 15, 384, 32>}, {transform_indices = @transform_2, window_bounds = array<i64: 15, 2, 32>}]} {
    %c0 = arith.constant 0 : index
    %c0_0 = arith.constant 0 : index
    %c0_1 = arith.constant 0 : index
    %0 = vector.load %arg1[%c0, %c0_0, %c0_1] : memref<15x2x384xf32, #tpu.memory_space<vmem>>, vector<15x2x384xf32>
    %c0_2 = arith.constant 0 : index
    %c0_3 = arith.constant 0 : index
    %c0_4 = arith.constant 0 : index
    %1 = vector.load %arg2[%c0_2, %c0_3, %c0_4] : memref<15x384x32xbf16, #tpu.memory_space<vmem>>, vector<15x384x32xbf16>
    %2 = arith.extf %1 : vector<15x384x32xbf16> to vector<15x384x32xf32>
    "tpu.trace_start"() <{level = 10 : i32, message = "lbk,lke->lbe"}> : () -> ()
    %cst = arith.constant dense<0.000000e+00> : vector<15x2x32xf32>
    %3 = tpu.matmul %0, %2, %cst {dimension_numbers = #tpu.dot_dimension_numbers<[2], [1], [1], [2], [0, 0, 0, 1, 1, 2], [0], [0]>} : vector<15x2x384xf32>, vector<15x384x32xf32>, vector<15x2x32xf32> -> vector<15x2x32xf32>
    "tpu.trace_stop"() : () -> ()
    %c0_5 = arith.constant 0 : index
    %c0_6 = arith.constant 0 : index
    %c0_7 = arith.constant 0 : index
    %4 = vector.load %arg3[%c0_5, %c0_6, %c0_7] : memref<15x2x32xf32, #tpu.memory_space<vmem>>, vector<15x2x32xf32>
    tpu.vector_store %arg3[%c0_5, %c0_6, %c0_7], %3 {strides = array<i32>} : memref<15x2x32xf32, #tpu.memory_space<vmem>>, vector<15x2x32xf32>,
    return
  }
  func.func @transform_0(%arg0: i32) -> (i32, i32, i32) {
    %c0_i32 = arith.constant 0 : i32
    %c0_i32_0 = arith.constant 0 : i32
    %c0_i32_1 = arith.constant 0 : i32
    return %arg0, %c0_i32, %c0_i32_0 : i32, i32, i32
  }
  func.func @transform_1(%arg0: i32) -> (i32, i32, i32) {
    %c0_i32 = arith.constant 0 : i32
    %c0_i32_0 = arith.constant 0 : i32
    %c0_i32_1 = arith.constant 0 : i32
    return %arg0, %c0_i32, %c0_i32_0 : i32, i32, i32
  }
  func.func @transform_2(%arg0: i32) -> (i32, i32, i32) {
    %c0_i32 = arith.constant 0 : i32
    %c0_i32_0 = arith.constant 0 : i32
    %c0_i32_1 = arith.constant 0 : i32
    return %arg0, %c0_i32, %c0_i32_0 : i32, i32, i32
  }
}

</mosaic_0001>

<llo_original>
// kernel: directional_freq_embed.1
$region0: #{directional_freq_embed.1}
  #allocation0 [shape = 'u32[]', space=smem, size = 0x4, offset = 0x4, fixed_abs, tag = 'smem constant byte address 0x4 - core index']
  #allocation1 [shape = 'u32[144,128]{1,0:T(1,128)}', space=vmem, size = 0x12000, scoped, tag = 'internal scratch']
  %s0 = inlined_call_operand.vmem [shape: f32[60,2,384], index: 0, kind: input, shape index: {}]
  %s1 = inlined_call_operand.vmem [shape: bf16[60,384,32], index: 1, kind: input, shape index: {}]
  %s2 = inlined_call_operand.vmem [shape: f32[60,2,32], index: 2, kind: output, shape index: {}]
  %s3 = sld [smem:[#allocation0]]
  $region41: #{directional_freq_embed.1} parent=0
    _
  %s5 = ssub.s32 1, %s3
  %s6 = scalar_select 0, %s5, %s3
  loop: start=0, step=1, limit=6
  $region2: #{directional_freq_embed.1} parent=0 // loop_pre_header
    _
  $region3: #{directional_freq_embed.1} parent=0 // loop_header
    %s8 = sphi 0, %s12
    %p9 = scmp.ge.s32.totalorder %s8, 6
    %s18 = sphi 0, %s20
    %s21 = sphi 0, %s18
    %s22 = sphi 0, %s21
    %s38 = sphi 0, %s22
    %s44 = sphi 0, %s46
    %s47 = sphi 0, %s44
    %s48 = sphi 0, %s47
    %s64 = sphi 0, %s48
    %s70 = sphi 0, %s72
    %s73 = sphi 0, %s70
    %s74 = sphi 0, %s73
    %s90 = sphi 0, %s74
  $region4: #{directional_freq_embed.1} parent=0 // loop_header_branch
    %11 = sbr.rel (%p9) target = $region8
  $region5: #{directional_freq_embed.1} parent=0 // loop_body
    %s13 = ssub.s32 %s8, 1
    %s14 = ssub.s32 %s8, 2
    %s15 = sadd.s32 %s8, 1
    %s16 = ssub.s32 %s8, %s15
    %p17 = scmp.eq.s32.totalorder %s16, 0
    %s19 = sadd.s32 %s18, 1
    %s20 = scalar_select %p17, %s18, %s19
    %p23 = pneg %p17
    %p24 = scmp.eq.s32.totalorder %s8, 3
    %p25 = por %p23, %p24
    %p26 = scmp.ne.s32.totalorder %s18, %s21
    %p27 = scmp.eq.s32.totalorder %s8, 0
    %p28 = por %p26, %p27
    %p29 = scmp.ne.s32.totalorder %s18, %s21
    %p30 = scmp.eq.s32.totalorder %s13, 3
    %p31 = por %p29, %p30
    %p32 = scmp.ne.s32.totalorder %s21, %s22
    %p33 = scmp.eq.s32.totalorder %s13, 0
    %p34 = por %p32, %p33
    %p35 = scmp.ne.s32.totalorder %s21, %s22
    %p36 = scmp.eq.s32.totalorder %s14, 3
    %p37 = por %p35, %p36
    %p39 = scmp.ne.s32.totalorder %s22, %s38
    %p40 = scmp.eq.s32.totalorder %s14, 0
    %p41 = por %p39, %p40
    %s42 = ssub.s32 %s8, %s15
    %p43 = scmp.eq.s32.totalorder %s42, 0
    %s45 = sadd.s32 %s44, 1
    %s46 = scalar_select %p43, %s44, %s45
    %p49 = pneg %p43
    %p50 = scmp.eq.s32.totalorder %s8, 3
    %p51 = por %p49, %p50
    %p52 = scmp.ne.s32.totalorder %s44, %s47
    %p53 = scmp.eq.s32.totalorder %s8, 0
    %p54 = por %p52, %p53
    %p55 = scmp.ne.s32.totalorder %s44, %s47
    %p56 = scmp.eq.s32.totalorder %s13, 3
    %p57 = por %p55, %p56
    %p58 = scmp.ne.s32.totalorder %s47, %s48
    %p59 = scmp.eq.s32.totalorder %s13, 0
    %p60 = por %p58, %p59
    %p61 = scmp.ne.s32.totalorder %s47, %s48
    %p62 = scmp.eq.s32.totalorder %s14, 3
    %p63 = por %p61, %p62
    %p65 = scmp.ne.s32.totalorder %s48, %s64
    %p66 = scmp.eq.s32.totalorder %s14, 0
    %p67 = por %p65, %p66
    %s68 = ssub.s32 %s8, %s15
    %p69 = scmp.eq.s32.totalorder %s68, 0
    %s71 = sadd.s32 %s70, 1
    %s72 = scalar_select %p69, %s70, %s71
    %p75 = pneg %p69
    %p76 = scmp.eq.s32.totalorder %s8, 3
    %p77 = por %p75, %p76
    %p78 = scmp.ne.s32.totalorder %s70, %s73
    %p79 = scmp.eq.s32.totalorder %s8, 0
    %p80 = por %p78, %p79
    %p81 = scmp.ne.s32.totalorder %s70, %s73
    %p82 = scmp.eq.s32.totalorder %s13, 3
    %p83 = por %p81, %p82
    %p84 = scmp.ne.s32.totalorder %s73, %s74
    %p85 = scmp.eq.s32.totalorder %s13, 0
    %p86 = por %p84, %p85
    %p87 = scmp.ne.s32.totalorder %s73, %s74
    %p88 = scmp.eq.s32.totalorder %s14, 3
    %p89 = por %p87, %p88
    %p91 = scmp.ne.s32.totalorder %s74, %s90
    %p92 = scmp.eq.s32.totalorder %s14, 0
    %p93 = por %p91, %p92
    %p94 = scmp.le.s32.totalorder 1, %s8
    %p95 = scmp.lt.s32.totalorder %s8, 5
    %p96 = pnand %p94, %p95
    %p97 = pneg %p96
    // Predicated region
    $region9: #{directional_freq_embed.1} parent=5 // pred_check
      _
    $region10: #{directional_freq_embed.1} parent=5 // pred_check_branch
      %99 = sbr.rel (%p96) target = $region12
    $region11: #{directional_freq_embed.1} parent=5 // pred_region
      %s100 = ssub.s32 %s8, 1
    $region12: #{directional_freq_embed.1} parent=5 // pred_fallthru
      _
    %p101 = scmp.lt.s32.totalorder %s8, 4
    // Predicated region
    $region13: #{directional_freq_embed.1} parent=5 // pred_check
      %p102 = pneg %p101
    $region14: #{directional_freq_embed.1} parent=5 // pred_check_branch
      %104 = sbr.rel (%p102) target = $region16
    $region15: #{directional_freq_embed.1} parent=5 // pred_region
      // Predicated region
      $region17: #{directional_freq_embed.1} parent=15 // pred_check
        %p105 = pneg %p28
      $region18: #{directional_freq_embed.1} parent=15 // pred_check_branch
        %107 = sbr.rel (%p105) target = $region20
      $region19: #{directional_freq_embed.1} parent=15 // pred_region
        %s108 = smul.u32 15, %s8
        %p109 = scmp.lt.s32.totalorder %s108, 59
        %s110 = scalar_select %p109, %s108, 59
        %s111 = smul.addr %s110, 3
        %s112 = smul.addr %s111, 2
        %s113 = scalar_lea.vmem %s0, %s112
        %s114 = smul.u32 15, %s8
      $region20: #{directional_freq_embed.1} parent=15 // pred_fallthru
        _
      // Predicated region
      $region21: #{directional_freq_embed.1} parent=15 // pred_check
        %p115 = pneg %p54
      $region22: #{directional_freq_embed.1} parent=15 // pred_check_branch
        %117 = sbr.rel (%p115) target = $region24
      $region23: #{directional_freq_embed.1} parent=15 // pred_region
        %s118 = smul.u32 15, %s8
        %p119 = scmp.lt.s32.totalorder %s118, 59
        %s120 = scalar_select %p119, %s118, 59
        %s121 = smul.addr %s120, 48
        %s122 = smul.addr %s121, 4
        %s123 = scalar_lea.vmem %s1, %s122
        %s124 = smul.u32 15, %s8
      $region24: #{directional_freq_embed.1} parent=15 // pred_fallthru
        _
    $region16: #{directional_freq_embed.1} parent=5 // pred_fallthru
      _
    %p125 = scmp.le.s32.totalorder 1, %s8
    %p126 = scmp.lt.s32.totalorder %s8, 5
    %p127 = pnand %p125, %p126
    %p128 = pneg %p127
    // Predicated region
    $region25: #{directional_freq_embed.1} parent=5 // pred_check
      _
    $region26: #{directional_freq_embed.1} parent=5 // pred_check_branch
      %130 = sbr.rel (%p127) target = $region28
    $region27: #{directional_freq_embed.1} parent=5 // pred_region
      %s131 = ssub.s32 %s8, 1
      %s132 = smul.u32 15, %s13
      %p133 = scmp.lt.s32.totalorder %s132, 59
      %s134 = scalar_select %p133, %s132, 59
      %s135 = smul.addr %s134, 3
      %s136 = smul.addr %s135, 2
      %s137 = scalar_lea.vmem %s0, %s136
      %p138 = pneg %p34
      %p139 = pneg %p31
      %s140 = smul.u32 15, %s13
      %p141 = scmp.lt.s32.totalorder %s140, 59
      %s142 = scalar_select %p141, %s140, 59
      %s143 = smul.addr %s142, 48
      %s144 = smul.addr %s143, 4
      %s145 = scalar_lea.vmem %s1, %s144
      %p146 = pneg %p60
      %p147 = pneg %p57
      %p148 = pneg %p86
      %p149 = pneg %p83
      %s150 = smul.u32 15, %s13
      %p151 = scmp.lt.s32.totalorder %s150, 59
      %s152 = scalar_select %p151, %s150, 59
      %s153 = smul.addr %s152, 2
      %s154 = scalar_lea.vmem %s2, %s153
      %s155 = smul.u32 15, %s13
      %p156 = scmp.lt.s32.totalorder %s155, 59
      %s157 = scalar_select %p156, %s155, 59
      %s158 = smul.addr %s157, 3
      %s159 = smul.addr %s158, 2
      %s160 = scalar_lea.vmem %s0, %s159
      %s161 = smul.u32 15, %s13
      %s162 = smul.u32 15, %s13
      %p163 = scmp.lt.s32.totalorder %s162, 59
      %s164 = scalar_select %p163, %s162, 59
      %s165 = smul.addr %s164, 48
      %s166 = smul.addr %s165, 4
      %s167 = scalar_lea.vmem %s1, %s166
      %s168 = smul.u32 15, %s13
      %s169 = smul.u32 15, %s13
      %p170 = scmp.lt.s32.totalorder %s169, 59
      %s171 = scalar_select %p170, %s169, 59
      %s172 = smul.addr %s171, 2
      %s173 = scalar_lea.vmem %s2, %s172
      %s174 = smul.u32 15, %s13
      %v175 = vld [vmem:[%s160] sm:$0x3f]
      %v176 = vld [vmem:[%s160 + $0x6] sm:$0x3f]
      %v177 = vld [vmem:[%s160 + $0xc] sm:$0x3f]
      %v178 = vld [vmem:[%s160 + $0x12] sm:$0x3f]
      %v179 = vld [vmem:[%s160 + $0x18] sm:$0x3f]
      %v180 = vld [vmem:[%s160 + $0x1e] sm:$0x3f]
      %v181 = vld [vmem:[%s160 + $0x24] sm:$0x3f]
      %v182 = vld [vmem:[%s160 + $0x2a] sm:$0x3f]
      %v183 = vld [vmem:[%s160 + $0x30] sm:$0x3f]
      %v184 = vld [vmem:[%s160 + $0x36] sm:$0x3f]
      %v185 = vld [vmem:[%s160 + $0x3c] sm:$0x3f]
      %v186 = vld [vmem:[%s160 + $0x42] sm:$0x3f]
      %v187 = vld [vmem:[%s160 + $0x48] sm:$0x3f]
      %v188 = vld [vmem:[%s160 + $0x4e] sm:$0x3f]
      %v189 = vld [vmem:[%s160 + $0x54] sm:$0x3f]
      %v190 = vld [vmem:[%s167] sm:$0xf]
      %v191 = vld [vmem:[%s167 + $0x4] sm:$0xf]
      %v192 = vld [vmem:[%s167 + $0x8] sm:$0xf]
      %v193 = vld [vmem:[%s167 + $0xc] sm:$0xf]
      %v194 = vld [vmem:[%s167 + $0x10] sm:$0xf]
      %v195 = vld [vmem:[%s167 + $0x14] sm:$0xf]
      %v196 = vld [vmem:[%s167 + $0x18] sm:$0xf]
      %v197 = vld [vmem:[%s167 + $0x1c] sm:$0xf]
      %v198 = vld [vmem:[%s167 + $0x20] sm:$0xf]
      %v199 = vld [vmem:[%s167 + $0x24] sm:$0xf]
      %v200 = vld [vmem:[%s167 + $0x28] sm:$0xf]
      %v201 = vld [vmem:[%s167 + $0x2c] sm:$0xf]
      %v202 = vld [vmem:[%s167 + $0x30] sm:$0xf]
      %v203 = vld [vmem:[%s167 + $0x34] sm:$0xf]
      %v204 = vld [vmem:[%s167 + $0x38] sm:$0xf]
      %v205 = vld [vmem:[%s167 + $0x3c] sm:$0xf]
      %v206 = vld [vmem:[%s167 + $0x40] sm:$0xf]
      %v207 = vld [vmem:[%s167 + $0x44] sm:$0xf]
      %v208 = vld [vmem:[%s167 + $0x48] sm:$0xf]
      %v209 = vld [vmem:[%s167 + $0x4c] sm:$0xf]
      %v210 = vld [vmem:[%s167 + $0x50] sm:$0xf]
      %v211 = vld [vmem:[%s167 + $0x54] sm:$0xf]
      %v212 = vld [vmem:[%s167 + $0x58] sm:$0xf]
      %v213 = vld [vmem:[%s167 + $0x5c] sm:$0xf]
      %v214 = vld [vmem:[%s167 + $0x60] sm:$0xf]
      %v215 = vld [vmem:[%s167 + $0x64] sm:$0xf]
      %v216 = vld [vmem:[%s167 + $0x68] sm:$0xf]
      %v217 = vld [vmem:[%s167 + $0x6c] sm:$0xf]
      %v218 = vld [vmem:[%s167 + $0x70] sm:$0xf]
      %v219 = vld [vmem:[%s167 + $0x74] sm:$0xf]
      %v220 = vld [vmem:[%s167 + $0x78] sm:$0xf]
      %v221 = vld [vmem:[%s167 + $0x7c] sm:$0xf]
      %v222 = vld [vmem:[%s167 + $0x80] sm:$0xf]
      %v223 = vld [vmem:[%s167 + $0x84] sm:$0xf]
      %v224 = vld [vmem:[%s167 + $0x88] sm:$0xf]
      %v225 = vld [vmem:[%s167 + $0x8c] sm:$0xf]
      %v226 = vld [vmem:[%s167 + $0x90] sm:$0xf]
      %v227 = vld [vmem:[%s167 + $0x94] sm:$0xf]
      %v228 = vld [vmem:[%s167 + $0x98] sm:$0xf]
      %v229 = vld [vmem:[%s167 + $0x9c] sm:$0xf]
      %v230 = vld [vmem:[%s167 + $0xa0] sm:$0xf]
      %v231 = vld [vmem:[%s167 + $0xa4] sm:$0xf]
      %v232 = vld [vmem:[%s167 + $0xa8] sm:$0xf]
      %v233 = vld [vmem:[%s167 + $0xac] sm:$0xf]
      %v234 = vld [vmem:[%s167 + $0xb0] sm:$0xf]
      %v235 = vld [vmem:[%s167 + $0xb4] sm:$0xf]
      %v236 = vld [vmem:[%s167 + $0xb8] sm:$0xf]
      %v237 = vld [vmem:[%s167 + $0xbc] sm:$0xf]
      %v238 = vld [vmem:[%s167 + $0xc0] sm:$0xf]
      %v239 = vld [vmem:[%s167 + $0xc4] sm:$0xf]
      %v240 = vld [vmem:[%s167 + $0xc8] sm:$0xf]
      %v241 = vld [vmem:[%s167 + $0xcc] sm:$0xf]
      %v242 = vld [vmem:[%s167 + $0xd0] sm:$0xf]
      %v243 = vld [vmem:[%s167 + $0xd4] sm:$0xf]
      %v244 = vld [vmem:[%s167 + $0xd8] sm:$0xf]
      %v245 = vld [vmem:[%s167 + $0xdc] sm:$0xf]
      %v246 = vld [vmem:[%s167 + $0xe0] sm:$0xf]
      %v247 = vld [vmem:[%s167 + $0xe4] sm:$0xf]
      %v248 = vld [vmem:[%s167 + $0xe8] sm:$0xf]
      %v249 = vld [vmem:[%s167 + $0xec] sm:$0xf]
      %v250 = vld [vmem:[%s167 + $0xf0] sm:$0xf]
      %v251 = vld [vmem:[%s167 + $0xf4] sm:$0xf]
      %v252 = vld [vmem:[%s167 + $0xf8] sm:$0xf]
      %v253 = vld [vmem:[%s167 + $0xfc] sm:$0xf]
      %v254 = vld [vmem:[%s167 + $0x100] sm:$0xf]
      %v255 = vld [vmem:[%s167 + $0x104] sm:$0xf]
      %v256 = vld [vmem:[%s167 + $0x108] sm:$0xf]
      %v257 = vld [vmem:[%s167 + $0x10c] sm:$0xf]
      %v258 = vld [vmem:[%s167 + $0x110] sm:$0xf]
      %v259 = vld [vmem:[%s167 + $0x114] sm:$0xf]
      %v260 = vld [vmem:[%s167 + $0x118] sm:$0xf]
      %v261 = vld [vmem:[%s167 + $0x11c] sm:$0xf]
      %v262 = vld [vmem:[%s167 + $0x120] sm:$0xf]
      %v263 = vld [vmem:[%s167 + $0x124] sm:$0xf]
      %v264 = vld [vmem:[%s167 + $0x128] sm:$0xf]
      %v265 = vld [vmem:[%s167 + $0x12c] sm:$0xf]
      %v266 = vld [vmem:[%s167 + $0x130] sm:$0xf]
      %v267 = vld [vmem:[%s167 + $0x134] sm:$0xf]
      %v268 = vld [vmem:[%s167 + $0x138] sm:$0xf]
      %v269 = vld [vmem:[%s167 + $0x13c] sm:$0xf]
      %v270 = vld [vmem:[%s167 + $0x140] sm:$0xf]
      %v271 = vld [vmem:[%s167 + $0x144] sm:$0xf]
      %v272 = vld [vmem:[%s167 + $0x148] sm:$0xf]
      %v273 = vld [vmem:[%s167 + $0x14c] sm:$0xf]
      %v274 = vld [vmem:[%s167 + $0x150] sm:$0xf]
      %v275 = vld [vmem:[%s167 + $0x154] sm:$0xf]
      %v276 = vld [vmem:[%s167 + $0x158] sm:$0xf]
      %v277 = vld [vmem:[%s167 + $0x15c] sm:$0xf]
      %v278 = vld [vmem:[%s167 + $0x160] sm:$0xf]
      %v279 = vld [vmem:[%s167 + $0x164] sm:$0xf]
      %v280 = vld [vmem:[%s167 + $0x168] sm:$0xf]
      %v281 = vld [vmem:[%s167 + $0x16c] sm:$0xf]
      %v282 = vld [vmem:[%s167 + $0x170] sm:$0xf]
      %v283 = vld [vmem:[%s167 + $0x174] sm:$0xf]
      %v284 = vld [vmem:[%s167 + $0x178] sm:$0xf]
      %v285 = vld [vmem:[%s167 + $0x17c] sm:$0xf]
      %v286 = vld [vmem:[%s167 + $0x180] sm:$0xf]
      %v287 = vld [vmem:[%s167 + $0x184] sm:$0xf]
      %v288 = vld [vmem:[%s167 + $0x188] sm:$0xf]
      %v289 = vld [vmem:[%s167 + $0x18c] sm:$0xf]
      %v290 = vld [vmem:[%s167 + $0x190] sm:$0xf]
      %v291 = vld [vmem:[%s167 + $0x194] sm:$0xf]
      %v292 = vld [vmem:[%s167 + $0x198] sm:$0xf]
      %v293 = vld [vmem:[%s167 + $0x19c] sm:$0xf]
      %v294 = vld [vmem:[%s167 + $0x1a0] sm:$0xf]
      %v295 = vld [vmem:[%s167 + $0x1a4] sm:$0xf]
      %v296 = vld [vmem:[%s167 + $0x1a8] sm:$0xf]
      %v297 = vld [vmem:[%s167 + $0x1ac] sm:$0xf]
      %v298 = vld [vmem:[%s167 + $0x1b0] sm:$0xf]
      %v299 = vld [vmem:[%s167 + $0x1b4] sm:$0xf]
      %v300 = vld [vmem:[%s167 + $0x1b8] sm:$0xf]
      %v301 = vld [vmem:[%s167 + $0x1bc] sm:$0xf]
      %v302 = vld [vmem:[%s167 + $0x1c0] sm:$0xf]
      %v303 = vld [vmem:[%s167 + $0x1c4] sm:$0xf]
      %v304 = vld [vmem:[%s167 + $0x1c8] sm:$0xf]
      %v305 = vld [vmem:[%s167 + $0x1cc] sm:$0xf]
      %v306 = vld [vmem:[%s167 + $0x1d0] sm:$0xf]
      %v307 = vld [vmem:[%s167 + $0x1d4] sm:$0xf]
      %v308 = vld [vmem:[%s167 + $0x1d8] sm:$0xf]
      %v309 = vld [vmem:[%s167 + $0x1dc] sm:$0xf]
      %v310 = vld [vmem:[%s167 + $0x1e0] sm:$0xf]
      %v311 = vld [vmem:[%s167 + $0x1e4] sm:$0xf]
      %v312 = vld [vmem:[%s167 + $0x1e8] sm:$0xf]
      %v313 = vld [vmem:[%s167 + $0x1ec] sm:$0xf]
      %v314 = vld [vmem:[%s167 + $0x1f0] sm:$0xf]
      %v315 = vld [vmem:[%s167 + $0x1f4] sm:$0xf]
      %v316 = vld [vmem:[%s167 + $0x1f8] sm:$0xf]
      %v317 = vld [vmem:[%s167 + $0x1fc] sm:$0xf]
      %v318 = vld [vmem:[%s167 + $0x200] sm:$0xf]
      %v319 = vld [vmem:[%s167 + $0x204] sm:$0xf]
      %v320 = vld [vmem:[%s167 + $0x208] sm:$0xf]
      %v321 = vld [vmem:[%s167 + $0x20c] sm:$0xf]
      %v322 = vld [vmem:[%s167 + $0x210] sm:$0xf]
      %v323 = vld [vmem:[%s167 + $0x214] sm:$0xf]
      %v324 = vld [vmem:[%s167 + $0x218] sm:$0xf]
      %v325 = vld [vmem:[%s167 + $0x21c] sm:$0xf]
      %v326 = vld [vmem:[%s167 + $0x220] sm:$0xf]
      %v327 = vld [vmem:[%s167 + $0x224] sm:$0xf]
      %v328 = vld [vmem:[%s167 + $0x228] sm:$0xf]
      %v329 = vld [vmem:[%s167 + $0x22c] sm:$0xf]
      %v330 = vld [vmem:[%s167 + $0x230] sm:$0xf]
      %v331 = vld [vmem:[%s167 + $0x234] sm:$0xf]
      %v332 = vld [vmem:[%s167 + $0x238] sm:$0xf]
      %v333 = vld [vmem:[%s167 + $0x23c] sm:$0xf]
      %v334 = vld [vmem:[%s167 + $0x240] sm:$0xf]
      %v335 = vld [vmem:[%s167 + $0x244] sm:$0xf]
      %v336 = vld [vmem:[%s167 + $0x248] sm:$0xf]
      %v337 = vld [vmem:[%s167 + $0x24c] sm:$0xf]
      %v338 = vld [vmem:[%s167 + $0x250] sm:$0xf]
      %v339 = vld [vmem:[%s167 + $0x254] sm:$0xf]
      %v340 = vld [vmem:[%s167 + $0x258] sm:$0xf]
      %v341 = vld [vmem:[%s167 + $0x25c] sm:$0xf]
      %v342 = vld [vmem:[%s167 + $0x260] sm:$0xf]
      %v343 = vld [vmem:[%s167 + $0x264] sm:$0xf]
      %v344 = vld [vmem:[%s167 + $0x268] sm:$0xf]
      %v345 = vld [vmem:[%s167 + $0x26c] sm:$0xf]
      %v346 = vld [vmem:[%s167 + $0x270] sm:$0xf]
      %v347 = vld [vmem:[%s167 + $0x274] sm:$0xf]
      %v348 = vld [vmem:[%s167 + $0x278] sm:$0xf]
      %v349 = vld [vmem:[%s167 + $0x27c] sm:$0xf]
      %v350 = vld [vmem:[%s167 + $0x280] sm:$0xf]
      %v351 = vld [vmem:[%s167 + $0x284] sm:$0xf]
      %v352 = vld [vmem:[%s167 + $0x288] sm:$0xf]
      %v353 = vld [vmem:[%s167 + $0x28c] sm:$0xf]
      %v354 = vld [vmem:[%s167 + $0x290] sm:$0xf]
      %v355 = vld [vmem:[%s167 + $0x294] sm:$0xf]
      %v356 = vld [vmem:[%s167 + $0x298] sm:$0xf]
      %v357 = vld [vmem:[%s167 + $0x29c] sm:$0xf]
      %v358 = vld [vmem:[%s167 + $0x2a0] sm:$0xf]
      %v359 = vld [vmem:[%s167 + $0x2a4] sm:$0xf]
      %v360 = vld [vmem:[%s167 + $0x2a8] sm:$0xf]
      %v361 = vld [vmem:[%s167 + $0x2ac] sm:$0xf]
      %v362 = vld [vmem:[%s167 + $0x2b0] sm:$0xf]
      %v363 = vld [vmem:[%s167 + $0x2b4] sm:$0xf]
      %v364 = vld [vmem:[%s167 + $0x2b8] sm:$0xf]
      %v365 = vld [vmem:[%s167 + $0x2bc] sm:$0xf]
      %v366 = vld [vmem:[%s167 + $0x2c0] sm:$0xf]
      %v367 = vld [vmem:[%s167 + $0x2c4] sm:$0xf]
      %v368 = vld [vmem:[%s167 + $0x2c8] sm:$0xf]
      %v369 = vld [vmem:[%s167 + $0x2cc] sm:$0xf]
      %v370 = vld [vmem:[%s167 + $0x2d0] sm:$0xf]
      %v371 = vld [vmem:[%s167 + $0x2d4] sm:$0xf]
      %v372 = vld [vmem:[%s167 + $0x2d8] sm:$0xf]
      %v373 = vld [vmem:[%s167 + $0x2dc] sm:$0xf]
      %v374 = vld [vmem:[%s167 + $0x2e0] sm:$0xf]
      %v375 = vld [vmem:[%s167 + $0x2e4] sm:$0xf]
      %v376 = vld [vmem:[%s167 + $0x2e8] sm:$0xf]
      %v377 = vld [vmem:[%s167 + $0x2ec] sm:$0xf]
      %v378 = vld [vmem:[%s167 + $0x2f0] sm:$0xf]
      %v379 = vld [vmem:[%s167 + $0x2f4] sm:$0xf]
      %v380 = vld [vmem:[%s167 + $0x2f8] sm:$0xf]
      %v381 = vld [vmem:[%s167 + $0x2fc] sm:$0xf]
      %v382 = vld [vmem:[%s167 + $0x300] sm:$0xf]
      %v383 = vld [vmem:[%s167 + $0x304] sm:$0xf]
      %v384 = vld [vmem:[%s167 + $0x308] sm:$0xf]
      %v385 = vld [vmem:[%s167 + $0x30c] sm:$0xf]
      %v386 = vld [vmem:[%s167 + $0x310] sm:$0xf]
      %v387 = vld [vmem:[%s167 + $0x314] sm:$0xf]
      %v388 = vld [vmem:[%s167 + $0x318] sm:$0xf]
      %v389 = vld [vmem:[%s167 + $0x31c] sm:$0xf]
      %v390 = vld [vmem:[%s167 + $0x320] sm:$0xf]
      %v391 = vld [vmem:[%s167 + $0x324] sm:$0xf]
      %v392 = vld [vmem:[%s167 + $0x328] sm:$0xf]
      %v393 = vld [vmem:[%s167 + $0x32c] sm:$0xf]
      %v394 = vld [vmem:[%s167 + $0x330] sm:$0xf]
      %v395 = vld [vmem:[%s167 + $0x334] sm:$0xf]
      %v396 = vld [vmem:[%s167 + $0x338] sm:$0xf]
      %v397 = vld [vmem:[%s167 + $0x33c] sm:$0xf]
      %v398 = vld [vmem:[%s167 + $0x340] sm:$0xf]
      %v399 = vld [vmem:[%s167 + $0x344] sm:$0xf]
      %v400 = vld [vmem:[%s167 + $0x348] sm:$0xf]
      %v401 = vld [vmem:[%s167 + $0x34c] sm:$0xf]
      %v402 = vld [vmem:[%s167 + $0x350] sm:$0xf]
      %v403 = vld [vmem:[%s167 + $0x354] sm:$0xf]
      %v404 = vld [vmem:[%s167 + $0x358] sm:$0xf]
      %v405 = vld [vmem:[%s167 + $0x35c] sm:$0xf]
      %v406 = vld [vmem:[%s167 + $0x360] sm:$0xf]
      %v407 = vld [vmem:[%s167 + $0x364] sm:$0xf]
      %v408 = vld [vmem:[%s167 + $0x368] sm:$0xf]
      %v409 = vld [vmem:[%s167 + $0x36c] sm:$0xf]
      %v410 = vld [vmem:[%s167 + $0x370] sm:$0xf]
      %v411 = vld [vmem:[%s167 + $0x374] sm:$0xf]
      %v412 = vld [vmem:[%s167 + $0x378] sm:$0xf]
      %v413 = vld [vmem:[%s167 + $0x37c] sm:$0xf]
      %v414 = vld [vmem:[%s167 + $0x380] sm:$0xf]
      %v415 = vld [vmem:[%s167 + $0x384] sm:$0xf]
      %v416 = vld [vmem:[%s167 + $0x388] sm:$0xf]
      %v417 = vld [vmem:[%s167 + $0x38c] sm:$0xf]
      %v418 = vld [vmem:[%s167 + $0x390] sm:$0xf]
      %v419 = vld [vmem:[%s167 + $0x394] sm:$0xf]
      %v420 = vld [vmem:[%s167 + $0x398] sm:$0xf]
      %v421 = vld [vmem:[%s167 + $0x39c] sm:$0xf]
      %v422 = vld [vmem:[%s167 + $0x3a0] sm:$0xf]
      %v423 = vld [vmem:[%s167 + $0x3a4] sm:$0xf]
      %v424 = vld [vmem:[%s167 + $0x3a8] sm:$0xf]
      %v425 = vld [vmem:[%s167 + $0x3ac] sm:$0xf]
      %v426 = vld [vmem:[%s167 + $0x3b0] sm:$0xf]
      %v427 = vld [vmem:[%s167 + $0x3b4] sm:$0xf]
      %v428 = vld [vmem:[%s167 + $0x3b8] sm:$0xf]
      %v429 = vld [vmem:[%s167 + $0x3bc] sm:$0xf]
      %v430 = vld [vmem:[%s167 + $0x3c0] sm:$0xf]
      %v431 = vld [vmem:[%s167 + $0x3c4] sm:$0xf]
      %v432 = vld [vmem:[%s167 + $0x3c8] sm:$0xf]
      %v433 = vld [vmem:[%s167 + $0x3cc] sm:$0xf]
      %v434 = vld [vmem:[%s167 + $0x3d0] sm:$0xf]
      %v435 = vld [vmem:[%s167 + $0x3d4] sm:$0xf]
      %v436 = vld [vmem:[%s167 + $0x3d8] sm:$0xf]
      %v437 = vld [vmem:[%s167 + $0x3dc] sm:$0xf]
      %v438 = vld [vmem:[%s167 + $0x3e0] sm:$0xf]
      %v439 = vld [vmem:[%s167 + $0x3e4] sm:$0xf]
      %v440 = vld [vmem:[%s167 + $0x3e8] sm:$0xf]
      %v441 = vld [vmem:[%s167 + $0x3ec] sm:$0xf]
      %v442 = vld [vmem:[%s167 + $0x3f0] sm:$0xf]
      %v443 = vld [vmem:[%s167 + $0x3f4] sm:$0xf]
      %v444 = vld [vmem:[%s167 + $0x3f8] sm:$0xf]
      %v445 = vld [vmem:[%s167 + $0x3fc] sm:$0xf]
      %v446 = vld [vmem:[%s167 + $0x400] sm:$0xf]
      %v447 = vld [vmem:[%s167 + $0x404] sm:$0xf]
      %v448 = vld [vmem:[%s167 + $0x408] sm:$0xf]
      %v449 = vld [vmem:[%s167 + $0x40c] sm:$0xf]
      %v450 = vld [vmem:[%s167 + $0x410] sm:$0xf]
      %v451 = vld [vmem:[%s167 + $0x414] sm:$0xf]
      %v452 = vld [vmem:[%s167 + $0x418] sm:$0xf]
      %v453 = vld [vmem:[%s167 + $0x41c] sm:$0xf]
      %v454 = vld [vmem:[%s167 + $0x420] sm:$0xf]
      %v455 = vld [vmem:[%s167 + $0x424] sm:$0xf]
      %v456 = vld [vmem:[%s167 + $0x428] sm:$0xf]
      %v457 = vld [vmem:[%s167 + $0x42c] sm:$0xf]
      %v458 = vld [vmem:[%s167 + $0x430] sm:$0xf]
      %v459 = vld [vmem:[%s167 + $0x434] sm:$0xf]
      %v460 = vld [vmem:[%s167 + $0x438] sm:$0xf]
      %v461 = vld [vmem:[%s167 + $0x43c] sm:$0xf]
      %v462 = vld [vmem:[%s167 + $0x440] sm:$0xf]
      %v463 = vld [vmem:[%s167 + $0x444] sm:$0xf]
      %v464 = vld [vmem:[%s167 + $0x448] sm:$0xf]
      %v465 = vld [vmem:[%s167 + $0x44c] sm:$0xf]
      %v466 = vld [vmem:[%s167 + $0x450] sm:$0xf]
      %v467 = vld [vmem:[%s167 + $0x454] sm:$0xf]
      %v468 = vld [vmem:[%s167 + $0x458] sm:$0xf]
      %v469 = vld [vmem:[%s167 + $0x45c] sm:$0xf]
      %v470 = vld [vmem:[%s167 + $0x460] sm:$0xf]
      %v471 = vld [vmem:[%s167 + $0x464] sm:$0xf]
      %v472 = vld [vmem:[%s167 + $0x468] sm:$0xf]
      %v473 = vld [vmem:[%s167 + $0x46c] sm:$0xf]
      %v474 = vld [vmem:[%s167 + $0x470] sm:$0xf]
      %v475 = vld [vmem:[%s167 + $0x474] sm:$0xf]
      %v476 = vld [vmem:[%s167 + $0x478] sm:$0xf]
      %v477 = vld [vmem:[%s167 + $0x47c] sm:$0xf]
      %v478 = vld [vmem:[%s167 + $0x480] sm:$0xf]
      %v479 = vld [vmem:[%s167 + $0x484] sm:$0xf]
      %v480 = vld [vmem:[%s167 + $0x488] sm:$0xf]
      %v481 = vld [vmem:[%s167 + $0x48c] sm:$0xf]
      %v482 = vld [vmem:[%s167 + $0x490] sm:$0xf]
      %v483 = vld [vmem:[%s167 + $0x494] sm:$0xf]
      %v484 = vld [vmem:[%s167 + $0x498] sm:$0xf]
      %v485 = vld [vmem:[%s167 + $0x49c] sm:$0xf]
      %v486 = vld [vmem:[%s167 + $0x4a0] sm:$0xf]
      %v487 = vld [vmem:[%s167 + $0x4a4] sm:$0xf]
      %v488 = vld [vmem:[%s167 + $0x4a8] sm:$0xf]
      %v489 = vld [vmem:[%s167 + $0x4ac] sm:$0xf]
      %v490 = vld [vmem:[%s167 + $0x4b0] sm:$0xf]
      %v491 = vld [vmem:[%s167 + $0x4b4] sm:$0xf]
      %v492 = vld [vmem:[%s167 + $0x4b8] sm:$0xf]
      %v493 = vld [vmem:[%s167 + $0x4bc] sm:$0xf]
      %v494 = vld [vmem:[%s167 + $0x4c0] sm:$0xf]
      %v495 = vld [vmem:[%s167 + $0x4c4] sm:$0xf]
      %v496 = vld [vmem:[%s167 + $0x4c8] sm:$0xf]
      %v497 = vld [vmem:[%s167 + $0x4cc] sm:$0xf]
      %v498 = vld [vmem:[%s167 + $0x4d0] sm:$0xf]
      %v499 = vld [vmem:[%s167 + $0x4d4] sm:$0xf]
      %v500 = vld [vmem:[%s167 + $0x4d8] sm:$0xf]
      %v501 = vld [vmem:[%s167 + $0x4dc] sm:$0xf]
      %v502 = vld [vmem:[%s167 + $0x4e0] sm:$0xf]
      %v503 = vld [vmem:[%s167 + $0x4e4] sm:$0xf]
      %v504 = vld [vmem:[%s167 + $0x4e8] sm:$0xf]
      %v505 = vld [vmem:[%s167 + $0x4ec] sm:$0xf]
      %v506 = vld [vmem:[%s167 + $0x4f0] sm:$0xf]
      %v507 = vld [vmem:[%s167 + $0x4f4] sm:$0xf]
      %v508 = vld [vmem:[%s167 + $0x4f8] sm:$0xf]
      %v509 = vld [vmem:[%s167 + $0x4fc] sm:$0xf]
      %v510 = vld [vmem:[%s167 + $0x500] sm:$0xf]
      %v511 = vld [vmem:[%s167 + $0x504] sm:$0xf]
      %v512 = vld [vmem:[%s167 + $0x508] sm:$0xf]
      %v513 = vld [vmem:[%s167 + $0x50c] sm:$0xf]
      %v514 = vld [vmem:[%s167 + $0x510] sm:$0xf]
      %v515 = vld [vmem:[%s167 + $0x514] sm:$0xf]
      %v516 = vld [vmem:[%s167 + $0x518] sm:$0xf]
      %v517 = vld [vmem:[%s167 + $0x51c] sm:$0xf]
      %v518 = vld [vmem:[%s167 + $0x520] sm:$0xf]
      %v519 = vld [vmem:[%s167 + $0x524] sm:$0xf]
      %v520 = vld [vmem:[%s167 + $0x528] sm:$0xf]
      %v521 = vld [vmem:[%s167 + $0x52c] sm:$0xf]
      %v522 = vld [vmem:[%s167 + $0x530] sm:$0xf]
      %v523 = vld [vmem:[%s167 + $0x534] sm:$0xf]
      %v524 = vld [vmem:[%s167 + $0x538] sm:$0xf]
      %v525 = vld [vmem:[%s167 + $0x53c] sm:$0xf]
      %v526 = vld [vmem:[%s167 + $0x540] sm:$0xf]
      %v527 = vld [vmem:[%s167 + $0x544] sm:$0xf]
      %v528 = vld [vmem:[%s167 + $0x548] sm:$0xf]
      %v529 = vld [vmem:[%s167 + $0x54c] sm:$0xf]
      %v530 = vld [vmem:[%s167 + $0x550] sm:$0xf]
      %v531 = vld [vmem:[%s167 + $0x554] sm:$0xf]
      %v532 = vld [vmem:[%s167 + $0x558] sm:$0xf]
      %v533 = vld [vmem:[%s167 + $0x55c] sm:$0xf]
      %v534 = vld [vmem:[%s167 + $0x560] sm:$0xf]
      %v535 = vld [vmem:[%s167 + $0x564] sm:$0xf]
      %v536 = vld [vmem:[%s167 + $0x568] sm:$0xf]
      %v537 = vld [vmem:[%s167 + $0x56c] sm:$0xf]
      %v538 = vld [vmem:[%s167 + $0x570] sm:$0xf]
      %v539 = vld [vmem:[%s167 + $0x574] sm:$0xf]
      %v540 = vld [vmem:[%s167 + $0x578] sm:$0xf]
      %v541 = vld [vmem:[%s167 + $0x57c] sm:$0xf]
      %v542 = vld [vmem:[%s167 + $0x580] sm:$0xf]
      %v543 = vld [vmem:[%s167 + $0x584] sm:$0xf]
      %v544 = vld [vmem:[%s167 + $0x588] sm:$0xf]
      %v545 = vld [vmem:[%s167 + $0x58c] sm:$0xf]
      %v546 = vld [vmem:[%s167 + $0x590] sm:$0xf]
      %v547 = vld [vmem:[%s167 + $0x594] sm:$0xf]
      %v548 = vld [vmem:[%s167 + $0x598] sm:$0xf]
      %v549 = vld [vmem:[%s167 + $0x59c] sm:$0xf]
      %v550 = vld [vmem:[%s167 + $0x5a0] sm:$0xf]
      %v551 = vld [vmem:[%s167 + $0x5a4] sm:$0xf]
      %v552 = vld [vmem:[%s167 + $0x5a8] sm:$0xf]
      %v553 = vld [vmem:[%s167 + $0x5ac] sm:$0xf]
      %v554 = vld [vmem:[%s167 + $0x5b0] sm:$0xf]
      %v555 = vld [vmem:[%s167 + $0x5b4] sm:$0xf]
      %v556 = vld [vmem:[%s167 + $0x5b8] sm:$0xf]
      %v557 = vld [vmem:[%s167 + $0x5bc] sm:$0xf]
      %v558 = vld [vmem:[%s167 + $0x5c0] sm:$0xf]
      %v559 = vld [vmem:[%s167 + $0x5c4] sm:$0xf]
      %v560 = vld [vmem:[%s167 + $0x5c8] sm:$0xf]
      %v561 = vld [vmem:[%s167 + $0x5cc] sm:$0xf]
      %v562 = vld [vmem:[%s167 + $0x5d0] sm:$0xf]
      %v563 = vld [vmem:[%s167 + $0x5d4] sm:$0xf]
      %v564 = vld [vmem:[%s167 + $0x5d8] sm:$0xf]
      %v565 = vld [vmem:[%s167 + $0x5dc] sm:$0xf]
      %v566 = vld [vmem:[%s167 + $0x5e0] sm:$0xf]
      %v567 = vld [vmem:[%s167 + $0x5e4] sm:$0xf]
      %v568 = vld [vmem:[%s167 + $0x5e8] sm:$0xf]
      %v569 = vld [vmem:[%s167 + $0x5ec] sm:$0xf]
      %v570 = vld [vmem:[%s167 + $0x5f0] sm:$0xf]
      %v571 = vld [vmem:[%s167 + $0x5f4] sm:$0xf]
      %v572 = vld [vmem:[%s167 + $0x5f8] sm:$0xf]
      %v573 = vld [vmem:[%s167 + $0x5fc] sm:$0xf]
      %v574 = vld [vmem:[%s167 + $0x600] sm:$0xf]
      %v575 = vld [vmem:[%s167 + $0x604] sm:$0xf]
      %v576 = vld [vmem:[%s167 + $0x608] sm:$0xf]
      %v577 = vld [vmem:[%s167 + $0x60c] sm:$0xf]
      %v578 = vld [vmem:[%s167 + $0x610] sm:$0xf]
      %v579 = vld [vmem:[%s167 + $0x614] sm:$0xf]
      %v580 = vld [vmem:[%s167 + $0x618] sm:$0xf]
      %v581 = vld [vmem:[%s167 + $0x61c] sm:$0xf]
      %v582 = vld [vmem:[%s167 + $0x620] sm:$0xf]
      %v583 = vld [vmem:[%s167 + $0x624] sm:$0xf]
      %v584 = vld [vmem:[%s167 + $0x628] sm:$0xf]
      %v585 = vld [vmem:[%s167 + $0x62c] sm:$0xf]
      %v586 = vld [vmem:[%s167 + $0x630] sm:$0xf]
      %v587 = vld [vmem:[%s167 + $0x634] sm:$0xf]
      %v588 = vld [vmem:[%s167 + $0x638] sm:$0xf]
      %v589 = vld [vmem:[%s167 + $0x63c] sm:$0xf]
      %v590 = vld [vmem:[%s167 + $0x640] sm:$0xf]
      %v591 = vld [vmem:[%s167 + $0x644] sm:$0xf]
      %v592 = vld [vmem:[%s167 + $0x648] sm:$0xf]
      %v593 = vld [vmem:[%s167 + $0x64c] sm:$0xf]
      %v594 = vld [vmem:[%s167 + $0x650] sm:$0xf]
      %v595 = vld [vmem:[%s167 + $0x654] sm:$0xf]
      %v596 = vld [vmem:[%s167 + $0x658] sm:$0xf]
      %v597 = vld [vmem:[%s167 + $0x65c] sm:$0xf]
      %v598 = vld [vmem:[%s167 + $0x660] sm:$0xf]
      %v599 = vld [vmem:[%s167 + $0x664] sm:$0xf]
      %v600 = vld [vmem:[%s167 + $0x668] sm:$0xf]
      %v601 = vld [vmem:[%s167 + $0x66c] sm:$0xf]
      %v602 = vld [vmem:[%s167 + $0x670] sm:$0xf]
      %v603 = vld [vmem:[%s167 + $0x674] sm:$0xf]
      %v604 = vld [vmem:[%s167 + $0x678] sm:$0xf]
      %v605 = vld [vmem:[%s167 + $0x67c] sm:$0xf]
      %v606 = vld [vmem:[%s167 + $0x680] sm:$0xf]
      %v607 = vld [vmem:[%s167 + $0x684] sm:$0xf]
      %v608 = vld [vmem:[%s167 + $0x688] sm:$0xf]
      %v609 = vld [vmem:[%s167 + $0x68c] sm:$0xf]
      %v610 = vld [vmem:[%s167 + $0x690] sm:$0xf]
      %v611 = vld [vmem:[%s167 + $0x694] sm:$0xf]
      %v612 = vld [vmem:[%s167 + $0x698] sm:$0xf]
      %v613 = vld [vmem:[%s167 + $0x69c] sm:$0xf]
      %v614 = vld [vmem:[%s167 + $0x6a0] sm:$0xf]
      %v615 = vld [vmem:[%s167 + $0x6a4] sm:$0xf]
      %v616 = vld [vmem:[%s167 + $0x6a8] sm:$0xf]
      %v617 = vld [vmem:[%s167 + $0x6ac] sm:$0xf]
      %v618 = vld [vmem:[%s167 + $0x6b0] sm:$0xf]
      %v619 = vld [vmem:[%s167 + $0x6b4] sm:$0xf]
      %v620 = vld [vmem:[%s167 + $0x6b8] sm:$0xf]
      %v621 = vld [vmem:[%s167 + $0x6bc] sm:$0xf]
      %v622 = vld [vmem:[%s167 + $0x6c0] sm:$0xf]
      %v623 = vld [vmem:[%s167 + $0x6c4] sm:$0xf]
      %v624 = vld [vmem:[%s167 + $0x6c8] sm:$0xf]
      %v625 = vld [vmem:[%s167 + $0x6cc] sm:$0xf]
      %v626 = vld [vmem:[%s167 + $0x6d0] sm:$0xf]
      %v627 = vld [vmem:[%s167 + $0x6d4] sm:$0xf]
      %v628 = vld [vmem:[%s167 + $0x6d8] sm:$0xf]
      %v629 = vld [vmem:[%s167 + $0x6dc] sm:$0xf]
      %v630 = vld [vmem:[%s167 + $0x6e0] sm:$0xf]
      %v631 = vld [vmem:[%s167 + $0x6e4] sm:$0xf]
      %v632 = vld [vmem:[%s167 + $0x6e8] sm:$0xf]
      %v633 = vld [vmem:[%s167 + $0x6ec] sm:$0xf]
      %v634 = vld [vmem:[%s167 + $0x6f0] sm:$0xf]
      %v635 = vld [vmem:[%s167 + $0x6f4] sm:$0xf]
      %v636 = vld [vmem:[%s167 + $0x6f8] sm:$0xf]
      %v637 = vld [vmem:[%s167 + $0x6fc] sm:$0xf]
      %v638 = vld [vmem:[%s167 + $0x700] sm:$0xf]
      %v639 = vld [vmem:[%s167 + $0x704] sm:$0xf]
      %v640 = vld [vmem:[%s167 + $0x708] sm:$0xf]
      %v641 = vld [vmem:[%s167 + $0x70c] sm:$0xf]
      %v642 = vld [vmem:[%s167 + $0x710] sm:$0xf]
      %v643 = vld [vmem:[%s167 + $0x714] sm:$0xf]
      %v644 = vld [vmem:[%s167 + $0x718] sm:$0xf]
      %v645 = vld [vmem:[%s167 + $0x71c] sm:$0xf]
      %v646 = vld [vmem:[%s167 + $0x720] sm:$0xf]
      %v647 = vld [vmem:[%s167 + $0x724] sm:$0xf]
      %v648 = vld [vmem:[%s167 + $0x728] sm:$0xf]
      %v649 = vld [vmem:[%s167 + $0x72c] sm:$0xf]
      %v650 = vld [vmem:[%s167 + $0x730] sm:$0xf]
      %v651 = vld [vmem:[%s167 + $0x734] sm:$0xf]
      %v652 = vld [vmem:[%s167 + $0x738] sm:$0xf]
      %v653 = vld [vmem:[%s167 + $0x73c] sm:$0xf]
      %v654 = vld [vmem:[%s167 + $0x740] sm:$0xf]
      %v655 = vld [vmem:[%s167 + $0x744] sm:$0xf]
      %v656 = vld [vmem:[%s167 + $0x748] sm:$0xf]
      %v657 = vld [vmem:[%s167 + $0x74c] sm:$0xf]
      %v658 = vld [vmem:[%s167 + $0x750] sm:$0xf]
      %v659 = vld [vmem:[%s167 + $0x754] sm:$0xf]
      %v660 = vld [vmem:[%s167 + $0x758] sm:$0xf]
      %v661 = vld [vmem:[%s167 + $0x75c] sm:$0xf]
      %v662 = vld [vmem:[%s167 + $0x760] sm:$0xf]
      %v663 = vld [vmem:[%s167 + $0x764] sm:$0xf]
      %v664 = vld [vmem:[%s167 + $0x768] sm:$0xf]
      %v665 = vld [vmem:[%s167 + $0x76c] sm:$0xf]
      %v666 = vld [vmem:[%s167 + $0x770] sm:$0xf]
      %v667 = vld [vmem:[%s167 + $0x774] sm:$0xf]
      %v668 = vld [vmem:[%s167 + $0x778] sm:$0xf]
      %v669 = vld [vmem:[%s167 + $0x77c] sm:$0xf]
      %v670 = vld [vmem:[%s167 + $0x780] sm:$0xf]
      %v671 = vld [vmem:[%s167 + $0x784] sm:$0xf]
      %v672 = vld [vmem:[%s167 + $0x788] sm:$0xf]
      %v673 = vld [vmem:[%s167 + $0x78c] sm:$0xf]
      %v674 = vld [vmem:[%s167 + $0x790] sm:$0xf]
      %v675 = vld [vmem:[%s167 + $0x794] sm:$0xf]
      %v676 = vld [vmem:[%s167 + $0x798] sm:$0xf]
      %v677 = vld [vmem:[%s167 + $0x79c] sm:$0xf]
      %v678 = vld [vmem:[%s167 + $0x7a0] sm:$0xf]
      %v679 = vld [vmem:[%s167 + $0x7a4] sm:$0xf]
      %v680 = vld [vmem:[%s167 + $0x7a8] sm:$0xf]
      %v681 = vld [vmem:[%s167 + $0x7ac] sm:$0xf]
      %v682 = vld [vmem:[%s167 + $0x7b0] sm:$0xf]
      %v683 = vld [vmem:[%s167 + $0x7b4] sm:$0xf]
      %v684 = vld [vmem:[%s167 + $0x7b8] sm:$0xf]
      %v685 = vld [vmem:[%s167 + $0x7bc] sm:$0xf]
      %v686 = vld [vmem:[%s167 + $0x7c0] sm:$0xf]
      %v687 = vld [vmem:[%s167 + $0x7c4] sm:$0xf]
      %v688 = vld [vmem:[%s167 + $0x7c8] sm:$0xf]
      %v689 = vld [vmem:[%s167 + $0x7cc] sm:$0xf]
      %v690 = vld [vmem:[%s167 + $0x7d0] sm:$0xf]
      %v691 = vld [vmem:[%s167 + $0x7d4] sm:$0xf]
      %v692 = vld [vmem:[%s167 + $0x7d8] sm:$0xf]
      %v693 = vld [vmem:[%s167 + $0x7dc] sm:$0xf]
      %v694 = vld [vmem:[%s167 + $0x7e0] sm:$0xf]
      %v695 = vld [vmem:[%s167 + $0x7e4] sm:$0xf]
      %v696 = vld [vmem:[%s167 + $0x7e8] sm:$0xf]
      %v697 = vld [vmem:[%s167 + $0x7ec] sm:$0xf]
      %v698 = vld [vmem:[%s167 + $0x7f0] sm:$0xf]
      %v699 = vld [vmem:[%s167 + $0x7f4] sm:$0xf]
      %v700 = vld [vmem:[%s167 + $0x7f8] sm:$0xf]
      %v701 = vld [vmem:[%s167 + $0x7fc] sm:$0xf]
      %v702 = vld [vmem:[%s167 + $0x800] sm:$0xf]
      %v703 = vld [vmem:[%s167 + $0x804] sm:$0xf]
      %v704 = vld [vmem:[%s167 + $0x808] sm:$0xf]
      %v705 = vld [vmem:[%s167 + $0x80c] sm:$0xf]
      %v706 = vld [vmem:[%s167 + $0x810] sm:$0xf]
      %v707 = vld [vmem:[%s167 + $0x814] sm:$0xf]
      %v708 = vld [vmem:[%s167 + $0x818] sm:$0xf]
      %v709 = vld [vmem:[%s167 + $0x81c] sm:$0xf]
      %v710 = vld [vmem:[%s167 + $0x820] sm:$0xf]
      %v711 = vld [vmem:[%s167 + $0x824] sm:$0xf]
      %v712 = vld [vmem:[%s167 + $0x828] sm:$0xf]
      %v713 = vld [vmem:[%s167 + $0x82c] sm:$0xf]
      %v714 = vld [vmem:[%s167 + $0x830] sm:$0xf]
      %v715 = vld [vmem:[%s167 + $0x834] sm:$0xf]
      %v716 = vld [vmem:[%s167 + $0x838] sm:$0xf]
      %v717 = vld [vmem:[%s167 + $0x83c] sm:$0xf]
      %v718 = vld [vmem:[%s167 + $0x840] sm:$0xf]
      %v719 = vld [vmem:[%s167 + $0x844] sm:$0xf]
      %v720 = vld [vmem:[%s167 + $0x848] sm:$0xf]
      %v721 = vld [vmem:[%s167 + $0x84c] sm:$0xf]
      %v722 = vld [vmem:[%s167 + $0x850] sm:$0xf]
      %v723 = vld [vmem:[%s167 + $0x854] sm:$0xf]
      %v724 = vld [vmem:[%s167 + $0x858] sm:$0xf]
      %v725 = vld [vmem:[%s167 + $0x85c] sm:$0xf]
      %v726 = vld [vmem:[%s167 + $0x860] sm:$0xf]
      %v727 = vld [vmem:[%s167 + $0x864] sm:$0xf]
      %v728 = vld [vmem:[%s167 + $0x868] sm:$0xf]
      %v729 = vld [vmem:[%s167 + $0x86c] sm:$0xf]
      %v730 = vld [vmem:[%s167 + $0x870] sm:$0xf]
      %v731 = vld [vmem:[%s167 + $0x874] sm:$0xf]
      %v732 = vld [vmem:[%s167 + $0x878] sm:$0xf]
      %v733 = vld [vmem:[%s167 + $0x87c] sm:$0xf]
      %v734 = vld [vmem:[%s167 + $0x880] sm:$0xf]
      %v735 = vld [vmem:[%s167 + $0x884] sm:$0xf]
      %v736 = vld [vmem:[%s167 + $0x888] sm:$0xf]
      %v737 = vld [vmem:[%s167 + $0x88c] sm:$0xf]
      %v738 = vld [vmem:[%s167 + $0x890] sm:$0xf]
      %v739 = vld [vmem:[%s167 + $0x894] sm:$0xf]
      %v740 = vld [vmem:[%s167 + $0x898] sm:$0xf]
      %v741 = vld [vmem:[%s167 + $0x89c] sm:$0xf]
      %v742 = vld [vmem:[%s167 + $0x8a0] sm:$0xf]
      %v743 = vld [vmem:[%s167 + $0x8a4] sm:$0xf]
      %v744 = vld [vmem:[%s167 + $0x8a8] sm:$0xf]
      %v745 = vld [vmem:[%s167 + $0x8ac] sm:$0xf]
      %v746 = vld [vmem:[%s167 + $0x8b0] sm:$0xf]
      %v747 = vld [vmem:[%s167 + $0x8b4] sm:$0xf]
      %v748 = vld [vmem:[%s167 + $0x8b8] sm:$0xf]
      %v749 = vld [vmem:[%s167 + $0x8bc] sm:$0xf]
      %v750 = vld [vmem:[%s167 + $0x8c0] sm:$0xf]
      %v751 = vld [vmem:[%s167 + $0x8c4] sm:$0xf]
      %v752 = vld [vmem:[%s167 + $0x8c8] sm:$0xf]
      %v753 = vld [vmem:[%s167 + $0x8cc] sm:$0xf]
      %v754 = vld [vmem:[%s167 + $0x8d0] sm:$0xf]
      %v755 = vld [vmem:[%s167 + $0x8d4] sm:$0xf]
      %v756 = vld [vmem:[%s167 + $0x8d8] sm:$0xf]
      %v757 = vld [vmem:[%s167 + $0x8dc] sm:$0xf]
      %v758 = vld [vmem:[%s167 + $0x8e0] sm:$0xf]
      %v759 = vld [vmem:[%s167 + $0x8e4] sm:$0xf]
      %v760 = vld [vmem:[%s167 + $0x8e8] sm:$0xf]
      %v761 = vld [vmem:[%s167 + $0x8ec] sm:$0xf]
      %v762 = vld [vmem:[%s167 + $0x8f0] sm:$0xf]
      %v763 = vld [vmem:[%s167 + $0x8f4] sm:$0xf]
      %v764 = vld [vmem:[%s167 + $0x8f8] sm:$0xf]
      %v765 = vld [vmem:[%s167 + $0x8fc] sm:$0xf]
      %v766 = vld [vmem:[%s167 + $0x900] sm:$0xf]
      %v767 = vld [vmem:[%s167 + $0x904] sm:$0xf]
      %v768 = vld [vmem:[%s167 + $0x908] sm:$0xf]
      %v769 = vld [vmem:[%s167 + $0x90c] sm:$0xf]
      %v770 = vld [vmem:[%s167 + $0x910] sm:$0xf]
      %v771 = vld [vmem:[%s167 + $0x914] sm:$0xf]
      %v772 = vld [vmem:[%s167 + $0x918] sm:$0xf]
      %v773 = vld [vmem:[%s167 + $0x91c] sm:$0xf]
      %v774 = vld [vmem:[%s167 + $0x920] sm:$0xf]
      %v775 = vld [vmem:[%s167 + $0x924] sm:$0xf]
      %v776 = vld [vmem:[%s167 + $0x928] sm:$0xf]
      %v777 = vld [vmem:[%s167 + $0x92c] sm:$0xf]
      %v778 = vld [vmem:[%s167 + $0x930] sm:$0xf]
      %v779 = vld [vmem:[%s167 + $0x934] sm:$0xf]
      %v780 = vld [vmem:[%s167 + $0x938] sm:$0xf]
      %v781 = vld [vmem:[%s167 + $0x93c] sm:$0xf]
      %v782 = vld [vmem:[%s167 + $0x940] sm:$0xf]
      %v783 = vld [vmem:[%s167 + $0x944] sm:$0xf]
      %v784 = vld [vmem:[%s167 + $0x948] sm:$0xf]
      %v785 = vld [vmem:[%s167 + $0x94c] sm:$0xf]
      %v786 = vld [vmem:[%s167 + $0x950] sm:$0xf]
      %v787 = vld [vmem:[%s167 + $0x954] sm:$0xf]
      %v788 = vld [vmem:[%s167 + $0x958] sm:$0xf]
      %v789 = vld [vmem:[%s167 + $0x95c] sm:$0xf]
      %v790 = vld [vmem:[%s167 + $0x960] sm:$0xf]
      %v791 = vld [vmem:[%s167 + $0x964] sm:$0xf]
      %v792 = vld [vmem:[%s167 + $0x968] sm:$0xf]
      %v793 = vld [vmem:[%s167 + $0x96c] sm:$0xf]
      %v794 = vld [vmem:[%s167 + $0x970] sm:$0xf]
      %v795 = vld [vmem:[%s167 + $0x974] sm:$0xf]
      %v796 = vld [vmem:[%s167 + $0x978] sm:$0xf]
      %v797 = vld [vmem:[%s167 + $0x97c] sm:$0xf]
      %v798 = vld [vmem:[%s167 + $0x980] sm:$0xf]
      %v799 = vld [vmem:[%s167 + $0x984] sm:$0xf]
      %v800 = vld [vmem:[%s167 + $0x988] sm:$0xf]
      %v801 = vld [vmem:[%s167 + $0x98c] sm:$0xf]
      %v802 = vld [vmem:[%s167 + $0x990] sm:$0xf]
      %v803 = vld [vmem:[%s167 + $0x994] sm:$0xf]
      %v804 = vld [vmem:[%s167 + $0x998] sm:$0xf]
      %v805 = vld [vmem:[%s167 + $0x99c] sm:$0xf]
      %v806 = vld [vmem:[%s167 + $0x9a0] sm:$0xf]
      %v807 = vld [vmem:[%s167 + $0x9a4] sm:$0xf]
      %v808 = vld [vmem:[%s167 + $0x9a8] sm:$0xf]
      %v809 = vld [vmem:[%s167 + $0x9ac] sm:$0xf]
      %v810 = vld [vmem:[%s167 + $0x9b0] sm:$0xf]
      %v811 = vld [vmem:[%s167 + $0x9b4] sm:$0xf]
      %v812 = vld [vmem:[%s167 + $0x9b8] sm:$0xf]
      %v813 = vld [vmem:[%s167 + $0x9bc] sm:$0xf]
      %v814 = vld [vmem:[%s167 + $0x9c0] sm:$0xf]
      %v815 = vld [vmem:[%s167 + $0x9c4] sm:$0xf]
      %v816 = vld [vmem:[%s167 + $0x9c8] sm:$0xf]
      %v817 = vld [vmem:[%s167 + $0x9cc] sm:$0xf]
      %v818 = vld [vmem:[%s167 + $0x9d0] sm:$0xf]
      %v819 = vld [vmem:[%s167 + $0x9d4] sm:$0xf]
      %v820 = vld [vmem:[%s167 + $0x9d8] sm:$0xf]
      %v821 = vld [vmem:[%s167 + $0x9dc] sm:$0xf]
      %v822 = vld [vmem:[%s167 + $0x9e0] sm:$0xf]
      %v823 = vld [vmem:[%s167 + $0x9e4] sm:$0xf]
      %v824 = vld [vmem:[%s167 + $0x9e8] sm:$0xf]
      %v825 = vld [vmem:[%s167 + $0x9ec] sm:$0xf]
      %v826 = vld [vmem:[%s167 + $0x9f0] sm:$0xf]
      %v827 = vld [vmem:[%s167 + $0x9f4] sm:$0xf]
      %v828 = vld [vmem:[%s167 + $0x9f8] sm:$0xf]
      %v829 = vld [vmem:[%s167 + $0x9fc] sm:$0xf]
      %v830 = vld [vmem:[%s167 + $0xa00] sm:$0xf]
      %v831 = vld [vmem:[%s167 + $0xa04] sm:$0xf]
      %v832 = vld [vmem:[%s167 + $0xa08] sm:$0xf]
      %v833 = vld [vmem:[%s167 + $0xa0c] sm:$0xf]
      %v834 = vld [vmem:[%s167 + $0xa10] sm:$0xf]
      %v835 = vld [vmem:[%s167 + $0xa14] sm:$0xf]
      %v836 = vld [vmem:[%s167 + $0xa18] sm:$0xf]
      %v837 = vld [vmem:[%s167 + $0xa1c] sm:$0xf]
      %v838 = vld [vmem:[%s167 + $0xa20] sm:$0xf]
      %v839 = vld [vmem:[%s167 + $0xa24] sm:$0xf]
      %v840 = vld [vmem:[%s167 + $0xa28] sm:$0xf]
      %v841 = vld [vmem:[%s167 + $0xa2c] sm:$0xf]
      %v842 = vld [vmem:[%s167 + $0xa30] sm:$0xf]
      %v843 = vld [vmem:[%s167 + $0xa34] sm:$0xf]
      %v844 = vld [vmem:[%s167 + $0xa38] sm:$0xf]
      %v845 = vld [vmem:[%s167 + $0xa3c] sm:$0xf]
      %v846 = vld [vmem:[%s167 + $0xa40] sm:$0xf]
      %v847 = vld [vmem:[%s167 + $0xa44] sm:$0xf]
      %v848 = vld [vmem:[%s167 + $0xa48] sm:$0xf]
      %v849 = vld [vmem:[%s167 + $0xa4c] sm:$0xf]
      %v850 = vld [vmem:[%s167 + $0xa50] sm:$0xf]
      %v851 = vld [vmem:[%s167 + $0xa54] sm:$0xf]
      %v852 = vld [vmem:[%s167 + $0xa58] sm:$0xf]
      %v853 = vld [vmem:[%s167 + $0xa5c] sm:$0xf]
      %v854 = vld [vmem:[%s167 + $0xa60] sm:$0xf]
      %v855 = vld [vmem:[%s167 + $0xa64] sm:$0xf]
      %v856 = vld [vmem:[%s167 + $0xa68] sm:$0xf]
      %v857 = vld [vmem:[%s167 + $0xa6c] sm:$0xf]
      %v858 = vld [vmem:[%s167 + $0xa70] sm:$0xf]
      %v859 = vld [vmem:[%s167 + $0xa74] sm:$0xf]
      %v860 = vld [vmem:[%s167 + $0xa78] sm:$0xf]
      %v861 = vld [vmem:[%s167 + $0xa7c] sm:$0xf]
      %v862 = vld [vmem:[%s167 + $0xa80] sm:$0xf]
      %v863 = vld [vmem:[%s167 + $0xa84] sm:$0xf]
      %v864 = vld [vmem:[%s167 + $0xa88] sm:$0xf]
      %v865 = vld [vmem:[%s167 + $0xa8c] sm:$0xf]
      %v866 = vld [vmem:[%s167 + $0xa90] sm:$0xf]
      %v867 = vld [vmem:[%s167 + $0xa94] sm:$0xf]
      %v868 = vld [vmem:[%s167 + $0xa98] sm:$0xf]
      %v869 = vld [vmem:[%s167 + $0xa9c] sm:$0xf]
      %v870 = vld [vmem:[%s167 + $0xaa0] sm:$0xf]
      %v871 = vld [vmem:[%s167 + $0xaa4] sm:$0xf]
      %v872 = vld [vmem:[%s167 + $0xaa8] sm:$0xf]
      %v873 = vld [vmem:[%s167 + $0xaac] sm:$0xf]
      %v874 = vld [vmem:[%s167 + $0xab0] sm:$0xf]
      %v875 = vld [vmem:[%s167 + $0xab4] sm:$0xf]
      %v876 = vld [vmem:[%s167 + $0xab8] sm:$0xf]
      %v877 = vld [vmem:[%s167 + $0xabc] sm:$0xf]
      %v878 = vld [vmem:[%s167 + $0xac0] sm:$0xf]
      %v879 = vld [vmem:[%s167 + $0xac4] sm:$0xf]
      %v880 = vld [vmem:[%s167 + $0xac8] sm:$0xf]
      %v881 = vld [vmem:[%s167 + $0xacc] sm:$0xf]
      %v882 = vld [vmem:[%s167 + $0xad0] sm:$0xf]
      %v883 = vld [vmem:[%s167 + $0xad4] sm:$0xf]
      %v884 = vld [vmem:[%s167 + $0xad8] sm:$0xf]
      %v885 = vld [vmem:[%s167 + $0xadc] sm:$0xf]
      %v886 = vld [vmem:[%s167 + $0xae0] sm:$0xf]
      %v887 = vld [vmem:[%s167 + $0xae4] sm:$0xf]
      %v888 = vld [vmem:[%s167 + $0xae8] sm:$0xf]
      %v889 = vld [vmem:[%s167 + $0xaec] sm:$0xf]
      %v890 = vld [vmem:[%s167 + $0xaf0] sm:$0xf]
      %v891 = vld [vmem:[%s167 + $0xaf4] sm:$0xf]
      %v892 = vld [vmem:[%s167 + $0xaf8] sm:$0xf]
      %v893 = vld [vmem:[%s167 + $0xafc] sm:$0xf]
      %v894 = vld [vmem:[%s167 + $0xb00] sm:$0xf]
      %v895 = vld [vmem:[%s167 + $0xb04] sm:$0xf]
      %v896 = vld [vmem:[%s167 + $0xb08] sm:$0xf]
      %v897 = vld [vmem:[%s167 + $0xb0c] sm:$0xf]
      %v898 = vld [vmem:[%s167 + $0xb10] sm:$0xf]
      %v899 = vld [vmem:[%s167 + $0xb14] sm:$0xf]
      %v900 = vld [vmem:[%s167 + $0xb18] sm:$0xf]
      %v901 = vld [vmem:[%s167 + $0xb1c] sm:$0xf]
      %v902 = vld [vmem:[%s167 + $0xb20] sm:$0xf]
      %v903 = vld [vmem:[%s167 + $0xb24] sm:$0xf]
      %v904 = vld [vmem:[%s167 + $0xb28] sm:$0xf]
      %v905 = vld [vmem:[%s167 + $0xb2c] sm:$0xf]
      %v906 = vld [vmem:[%s167 + $0xb30] sm:$0xf]
      %v907 = vld [vmem:[%s167 + $0xb34] sm:$0xf]
      %v908 = vld [vmem:[%s167 + $0xb38] sm:$0xf]
      %v909 = vld [vmem:[%s167 + $0xb3c] sm:$0xf]
      %v910 = vunpack.c.l.bf16 %v190
      %v911 = vunpack.c.l.bf16 %v191
      %v912 = vunpack.c.l.bf16 %v192
      %v913 = vunpack.c.l.bf16 %v193
      %v914 = vunpack.c.l.bf16 %v194
      %v915 = vunpack.c.l.bf16 %v195
      %v916 = vunpack.c.l.bf16 %v196
      %v917 = vunpack.c.l.bf16 %v197
      %v918 = vunpack.c.l.bf16 %v198
      %v919 = vunpack.c.l.bf16 %v199
      %v920 = vunpack.c.l.bf16 %v200
      %v921 = vunpack.c.l.bf16 %v201
      %v922 = vunpack.c.l.bf16 %v202
      %v923 = vunpack.c.l.bf16 %v203
      %v924 = vunpack.c.l.bf16 %v204
      %v925 = vunpack.c.l.bf16 %v205
      %v926 = vunpack.c.l.bf16 %v206
      %v927 = vunpack.c.l.bf16 %v207
      %v928 = vunpack.c.l.bf16 %v208
      %v929 = vunpack.c.l.bf16 %v209
      %v930 = vunpack.c.l.bf16 %v210
      %v931 = vunpack.c.l.bf16 %v211
      %v932 = vunpack.c.l.bf16 %v212
      %v933 = vunpack.c.l.bf16 %v213
      %v934 = vunpack.c.l.bf16 %v214
      %v935 = vunpack.c.l.bf16 %v215
      %v936 = vunpack.c.l.bf16 %v216
      %v937 = vunpack.c.l.bf16 %v217
      %v938 = vunpack.c.l.bf16 %v218
      %v939 = vunpack.c.l.bf16 %v219
      %v940 = vunpack.c.l.bf16 %v220
      %v941 = vunpack.c.l.bf16 %v221
      %v942 = vunpack.c.l.bf16 %v222
      %v943 = vunpack.c.l.bf16 %v223
      %v944 = vunpack.c.l.bf16 %v224
      %v945 = vunpack.c.l.bf16 %v225
      %v946 = vunpack.c.l.bf16 %v226
      %v947 = vunpack.c.l.bf16 %v227
      %v948 = vunpack.c.l.bf16 %v228
      %v949 = vunpack.c.l.bf16 %v229
      %v950 = vunpack.c.l.bf16 %v230
      %v951 = vunpack.c.l.bf16 %v231
      %v952 = vunpack.c.l.bf16 %v232
      %v953 = vunpack.c.l.bf16 %v233
      %v954 = vunpack.c.l.bf16 %v234
      %v955 = vunpack.c.l.bf16 %v235
      %v956 = vunpack.c.l.bf16 %v236
      %v957 = vunpack.c.l.bf16 %v237
      %v958 = vunpack.c.l.bf16 %v238
      %v959 = vunpack.c.l.bf16 %v239
      %v960 = vunpack.c.l.bf16 %v240
      %v961 = vunpack.c.l.bf16 %v241
      %v962 = vunpack.c.l.bf16 %v242
      %v963 = vunpack.c.l.bf16 %v243
      %v964 = vunpack.c.l.bf16 %v244
      %v965 = vunpack.c.l.bf16 %v245
      %v966 = vunpack.c.l.bf16 %v246
      %v967 = vunpack.c.l.bf16 %v247
      %v968 = vunpack.c.l.bf16 %v248
      %v969 = vunpack.c.l.bf16 %v249
      %v970 = vunpack.c.l.bf16 %v250
      %v971 = vunpack.c.l.bf16 %v251
      %v972 = vunpack.c.l.bf16 %v252
      %v973 = vunpack.c.l.bf16 %v253
      %v974 = vunpack.c.l.bf16 %v254
      %v975 = vunpack.c.l.bf16 %v255
      %v976 = vunpack.c.l.bf16 %v256
      %v977 = vunpack.c.l.bf16 %v257
      %v978 = vunpack.c.l.bf16 %v258
      %v979 = vunpack.c.l.bf16 %v259
      %v980 = vunpack.c.l.bf16 %v260
      %v981 = vunpack.c.l.bf16 %v261
      %v982 = vunpack.c.l.bf16 %v262
      %v983 = vunpack.c.l.bf16 %v263
      %v984 = vunpack.c.l.bf16 %v264
      %v985 = vunpack.c.l.bf16 %v265
      %v986 = vunpack.c.l.bf16 %v266
      %v987 = vunpack.c.l.bf16 %v267
      %v988 = vunpack.c.l.bf16 %v268
      %v989 = vunpack.c.l.bf16 %v269
      %v990 = vunpack.c.l.bf16 %v270
      %v991 = vunpack.c.l.bf16 %v271
      %v992 = vunpack.c.l.bf16 %v272
      %v993 = vunpack.c.l.bf16 %v273
      %v994 = vunpack.c.l.bf16 %v274
      %v995 = vunpack.c.l.bf16 %v275
      %v996 = vunpack.c.l.bf16 %v276
      %v997 = vunpack.c.l.bf16 %v277
      %v998 = vunpack.c.l.bf16 %v278
      %v999 = vunpack.c.l.bf16 %v279
      %v1000 = vunpack.c.l.bf16 %v280
      %v1001 = vunpack.c.l.bf16 %v281
      %v1002 = vunpack.c.l.bf16 %v282
      %v1003 = vunpack.c.l.bf16 %v283
      %v1004 = vunpack.c.l.bf16 %v284
      %v1005 = vunpack.c.l.bf16 %v285
      %v1006 = vunpack.c.l.bf16 %v286
      %v1007 = vunpack.c.l.bf16 %v287
      %v1008 = vunpack.c.l.bf16 %v288
      %v1009 = vunpack.c.l.bf16 %v289
      %v1010 = vunpack.c.l.bf16 %v290
      %v1011 = vunpack.c.l.bf16 %v291
      %v1012 = vunpack.c.l.bf16 %v292
      %v1013 = vunpack.c.l.bf16 %v293
      %v1014 = vunpack.c.l.bf16 %v294
      %v1015 = vunpack.c.l.bf16 %v295
      %v1016 = vunpack.c.l.bf16 %v296
      %v1017 = vunpack.c.l.bf16 %v297
      %v1018 = vunpack.c.l.bf16 %v298
      %v1019 = vunpack.c.l.bf16 %v299
      %v1020 = vunpack.c.l.bf16 %v300
      %v1021 = vunpack.c.l.bf16 %v301
      %v1022 = vunpack.c.l.bf16 %v302
      %v1023 = vunpack.c.l.bf16 %v303
      %v1024 = vunpack.c.l.bf16 %v304
      %v1025 = vunpack.c.l.bf16 %v305
      %v1026 = vunpack.c.l.bf16 %v306
      %v1027 = vunpack.c.l.bf16 %v307
      %v1028 = vunpack.c.l.bf16 %v308
      %v1029 = vunpack.c.l.bf16 %v309
      %v1030 = vunpack.c.l.bf16 %v310
      %v1031 = vunpack.c.l.bf16 %v311
      %v1032 = vunpack.c.l.bf16 %v312
      %v1033 = vunpack.c.l.bf16 %v313
      %v1034 = vunpack.c.l.bf16 %v314
      %v1035 = vunpack.c.l.bf16 %v315
      %v1036 = vunpack.c.l.bf16 %v316
      %v1037 = vunpack.c.l.bf16 %v317
      %v1038 = vunpack.c.l.bf16 %v318
      %v1039 = vunpack.c.l.bf16 %v319
      %v1040 = vunpack.c.l.bf16 %v320
      %v1041 = vunpack.c.l.bf16 %v321
      %v1042 = vunpack.c.l.bf16 %v322
      %v1043 = vunpack.c.l.bf16 %v323
      %v1044 = vunpack.c.l.bf16 %v324
      %v1045 = vunpack.c.l.bf16 %v325
      %v1046 = vunpack.c.l.bf16 %v326
      %v1047 = vunpack.c.l.bf16 %v327
      %v1048 = vunpack.c.l.bf16 %v328
      %v1049 = vunpack.c.l.bf16 %v329
      %v1050 = vunpack.c.l.bf16 %v330
      %v1051 = vunpack.c.l.bf16 %v331
      %v1052 = vunpack.c.l.bf16 %v332
      %v1053 = vunpack.c.l.bf16 %v333
      %v1054 = vunpack.c.l.bf16 %v334
      %v1055 = vunpack.c.l.bf16 %v335
      %v1056 = vunpack.c.l.bf16 %v336
      %v1057 = vunpack.c.l.bf16 %v337
      %v1058 = vunpack.c.l.bf16 %v338
      %v1059 = vunpack.c.l.bf16 %v339
      %v1060 = vunpack.c.l.bf16 %v340
      %v1061 = vunpack.c.l.bf16 %v341
      %v1062 = vunpack.c.l.bf16 %v342
      %v1063 = vunpack.c.l.bf16 %v343
      %v1064 = vunpack.c.l.bf16 %v344
      %v1065 = vunpack.c.l.bf16 %v345
      %v1066 = vunpack.c.l.bf16 %v346
      %v1067 = vunpack.c.l.bf16 %v347
      %v1068 = vunpack.c.l.bf16 %v348
      %v1069 = vunpack.c.l.bf16 %v349
      %v1070 = vunpack.c.l.bf16 %v350
      %v1071 = vunpack.c.l.bf16 %v351
      %v1072 = vunpack.c.l.bf16 %v352
      %v1073 = vunpack.c.l.bf16 %v353
      %v1074 = vunpack.c.l.bf16 %v354
      %v1075 = vunpack.c.l.bf16 %v355
      %v1076 = vunpack.c.l.bf16 %v356
      %v1077 = vunpack.c.l.bf16 %v357
      %v1078 = vunpack.c.l.bf16 %v358
      %v1079 = vunpack.c.l.bf16 %v359
      %v1080 = vunpack.c.l.bf16 %v360
      %v1081 = vunpack.c.l.bf16 %v361
      %v1082 = vunpack.c.l.bf16 %v362
      %v1083 = vunpack.c.l.bf16 %v363
      %v1084 = vunpack.c.l.bf16 %v364
      %v1085 = vunpack.c.l.bf16 %v365
      %v1086 = vunpack.c.l.bf16 %v366
      %v1087 = vunpack.c.l.bf16 %v367
      %v1088 = vunpack.c.l.bf16 %v368
      %v1089 = vunpack.c.l.bf16 %v369
      %v1090 = vunpack.c.l.bf16 %v370
      %v1091 = vunpack.c.l.bf16 %v371
      %v1092 = vunpack.c.l.bf16 %v372
      %v1093 = vunpack.c.l.bf16 %v373
      %v1094 = vunpack.c.l.bf16 %v374
      %v1095 = vunpack.c.l.bf16 %v375
      %v1096 = vunpack.c.l.bf16 %v376
      %v1097 = vunpack.c.l.bf16 %v377
      %v1098 = vunpack.c.l.bf16 %v378
      %v1099 = vunpack.c.l.bf16 %v379
      %v1100 = vunpack.c.l.bf16 %v380
      %v1101 = vunpack.c.l.bf16 %v381
      %v1102 = vunpack.c.l.bf16 %v382
      %v1103 = vunpack.c.l.bf16 %v383
      %v1104 = vunpack.c.l.bf16 %v384
      %v1105 = vunpack.c.l.bf16 %v385
      %v1106 = vunpack.c.l.bf16 %v386
      %v1107 = vunpack.c.l.bf16 %v387
      %v1108 = vunpack.c.l.bf16 %v388
      %v1109 = vunpack.c.l.bf16 %v389
      %v1110 = vunpack.c.l.bf16 %v390
      %v1111 = vunpack.c.l.bf16 %v391
      %v1112 = vunpack.c.l.bf16 %v392
      %v1113 = vunpack.c.l.bf16 %v393
      %v1114 = vunpack.c.l.bf16 %v394
      %v1115 = vunpack.c.l.bf16 %v395
      %v1116 = vunpack.c.l.bf16 %v396
      %v1117 = vunpack.c.l.bf16 %v397
      %v1118 = vunpack.c.l.bf16 %v398
      %v1119 = vunpack.c.l.bf16 %v399
      %v1120 = vunpack.c.l.bf16 %v400
      %v1121 = vunpack.c.l.bf16 %v401
      %v1122 = vunpack.c.l.bf16 %v402
      %v1123 = vunpack.c.l.bf16 %v403
      %v1124 = vunpack.c.l.bf16 %v404
      %v1125 = vunpack.c.l.bf16 %v405
      %v1126 = vunpack.c.l.bf16 %v406
      %v1127 = vunpack.c.l.bf16 %v407
      %v1128 = vunpack.c.l.bf16 %v408
      %v1129 = vunpack.c.l.bf16 %v409
      %v1130 = vunpack.c.l.bf16 %v410
      %v1131 = vunpack.c.l.bf16 %v411
      %v1132 = vunpack.c.l.bf16 %v412
      %v1133 = vunpack.c.l.bf16 %v413
      %v1134 = vunpack.c.l.bf16 %v414
      %v1135 = vunpack.c.l.bf16 %v415
      %v1136 = vunpack.c.l.bf16 %v416
      %v1137 = vunpack.c.l.bf16 %v417
      %v1138 = vunpack.c.l.bf16 %v418
      %v1139 = vunpack.c.l.bf16 %v419
      %v1140 = vunpack.c.l.bf16 %v420
      %v1141 = vunpack.c.l.bf16 %v421
      %v1142 = vunpack.c.l.bf16 %v422
      %v1143 = vunpack.c.l.bf16 %v423
      %v1144 = vunpack.c.l.bf16 %v424
      %v1145 = vunpack.c.l.bf16 %v425
      %v1146 = vunpack.c.l.bf16 %v426
      %v1147 = vunpack.c.l.bf16 %v427
      %v1148 = vunpack.c.l.bf16 %v428
      %v1149 = vunpack.c.l.bf16 %v429
      %v1150 = vunpack.c.l.bf16 %v430
      %v1151 = vunpack.c.l.bf16 %v431
      %v1152 = vunpack.c.l.bf16 %v432
      %v1153 = vunpack.c.l.bf16 %v433
      %v1154 = vunpack.c.l.bf16 %v434
      %v1155 = vunpack.c.l.bf16 %v435
      %v1156 = vunpack.c.l.bf16 %v436
      %v1157 = vunpack.c.l.bf16 %v437
      %v1158 = vunpack.c.l.bf16 %v438
      %v1159 = vunpack.c.l.bf16 %v439
      %v1160 = vunpack.c.l.bf16 %v440
      %v1161 = vunpack.c.l.bf16 %v441
      %v1162 = vunpack.c.l.bf16 %v442
      %v1163 = vunpack.c.l.bf16 %v443
      %v1164 = vunpack.c.l.bf16 %v444
      %v1165 = vunpack.c.l.bf16 %v445
      %v1166 = vunpack.c.l.bf16 %v446
      %v1167 = vunpack.c.l.bf16 %v447
      %v1168 = vunpack.c.l.bf16 %v448
      %v1169 = vunpack.c.l.bf16 %v449
      %v1170 = vunpack.c.l.bf16 %v450
      %v1171 = vunpack.c.l.bf16 %v451
      %v1172 = vunpack.c.l.bf16 %v452
      %v1173 = vunpack.c.l.bf16 %v453
      %v1174 = vunpack.c.l.bf16 %v454
      %v1175 = vunpack.c.l.bf16 %v455
      %v1176 = vunpack.c.l.bf16 %v456
      %v1177 = vunpack.c.l.bf16 %v457
      %v1178 = vunpack.c.l.bf16 %v458
      %v1179 = vunpack.c.l.bf16 %v459
      %v1180 = vunpack.c.l.bf16 %v460
      %v1181 = vunpack.c.l.bf16 %v461
      %v1182 = vunpack.c.l.bf16 %v462
      %v1183 = vunpack.c.l.bf16 %v463
      %v1184 = vunpack.c.l.bf16 %v464
      %v1185 = vunpack.c.l.bf16 %v465
      %v1186 = vunpack.c.l.bf16 %v466
      %v1187 = vunpack.c.l.bf16 %v467
      %v1188 = vunpack.c.l.bf16 %v468
      %v1189 = vunpack.c.l.bf16 %v469
      %v1190 = vunpack.c.l.bf16 %v470
      %v1191 = vunpack.c.l.bf16 %v471
      %v1192 = vunpack.c.l.bf16 %v472
      %v1193 = vunpack.c.l.bf16 %v473
      %v1194 = vunpack.c.l.bf16 %v474
      %v1195 = vunpack.c.l.bf16 %v475
      %v1196 = vunpack.c.l.bf16 %v476
      %v1197 = vunpack.c.l.bf16 %v477
      %v1198 = vunpack.c.l.bf16 %v478
      %v1199 = vunpack.c.l.bf16 %v479
      %v1200 = vunpack.c.l.bf16 %v480
      %v1201 = vunpack.c.l.bf16 %v481
      %v1202 = vunpack.c.l.bf16 %v482
      %v1203 = vunpack.c.l.bf16 %v483
      %v1204 = vunpack.c.l.bf16 %v484
      %v1205 = vunpack.c.l.bf16 %v485
      %v1206 = vunpack.c.l.bf16 %v486
      %v1207 = vunpack.c.l.bf16 %v487
      %v1208 = vunpack.c.l.bf16 %v488
      %v1209 = vunpack.c.l.bf16 %v489
      %v1210 = vunpack.c.l.bf16 %v490
      %v1211 = vunpack.c.l.bf16 %v491
      %v1212 = vunpack.c.l.bf16 %v492
      %v1213 = vunpack.c.l.bf16 %v493
      %v1214 = vunpack.c.l.bf16 %v494
      %v1215 = vunpack.c.l.bf16 %v495
      %v1216 = vunpack.c.l.bf16 %v496
      %v1217 = vunpack.c.l.bf16 %v497
      %v1218 = vunpack.c.l.bf16 %v498
      %v1219 = vunpack.c.l.bf16 %v499
      %v1220 = vunpack.c.l.bf16 %v500
      %v1221 = vunpack.c.l.bf16 %v501
      %v1222 = vunpack.c.l.bf16 %v502
      %v1223 = vunpack.c.l.bf16 %v503
      %v1224 = vunpack.c.l.bf16 %v504
      %v1225 = vunpack.c.l.bf16 %v505
      %v1226 = vunpack.c.l.bf16 %v506
      %v1227 = vunpack.c.l.bf16 %v507
      %v1228 = vunpack.c.l.bf16 %v508
      %v1229 = vunpack.c.l.bf16 %v509
      %v1230 = vunpack.c.l.bf16 %v510
      %v1231 = vunpack.c.l.bf16 %v511
      %v1232 = vunpack.c.l.bf16 %v512
      %v1233 = vunpack.c.l.bf16 %v513
      %v1234 = vunpack.c.l.bf16 %v514
      %v1235 = vunpack.c.l.bf16 %v515
      %v1236 = vunpack.c.l.bf16 %v516
      %v1237 = vunpack.c.l.bf16 %v517
      %v1238 = vunpack.c.l.bf16 %v518
      %v1239 = vunpack.c.l.bf16 %v519
      %v1240 = vunpack.c.l.bf16 %v520
      %v1241 = vunpack.c.l.bf16 %v521
      %v1242 = vunpack.c.l.bf16 %v522
      %v1243 = vunpack.c.l.bf16 %v523
      %v1244 = vunpack.c.l.bf16 %v524
      %v1245 = vunpack.c.l.bf16 %v525
      %v1246 = vunpack.c.l.bf16 %v526
      %v1247 = vunpack.c.l.bf16 %v527
      %v1248 = vunpack.c.l.bf16 %v528
      %v1249 = vunpack.c.l.bf16 %v529
      %v1250 = vunpack.c.l.bf16 %v530
      %v1251 = vunpack.c.l.bf16 %v531
      %v1252 = vunpack.c.l.bf16 %v532
      %v1253 = vunpack.c.l.bf16 %v533
      %v1254 = vunpack.c.l.bf16 %v534
      %v1255 = vunpack.c.l.bf16 %v535
      %v1256 = vunpack.c.l.bf16 %v536
      %v1257 = vunpack.c.l.bf16 %v537
      %v1258 = vunpack.c.l.bf16 %v538
      %v1259 = vunpack.c.l.bf16 %v539
      %v1260 = vunpack.c.l.bf16 %v540
      %v1261 = vunpack.c.l.bf16 %v541
      %v1262 = vunpack.c.l.bf16 %v542
      %v1263 = vunpack.c.l.bf16 %v543
      %v1264 = vunpack.c.l.bf16 %v544
      %v1265 = vunpack.c.l.bf16 %v545
      %v1266 = vunpack.c.l.bf16 %v546
      %v1267 = vunpack.c.l.bf16 %v547
      %v1268 = vunpack.c.l.bf16 %v548
      %v1269 = vunpack.c.l.bf16 %v549
      %v1270 = vunpack.c.l.bf16 %v550
      %v1271 = vunpack.c.l.bf16 %v551
      %v1272 = vunpack.c.l.bf16 %v552
      %v1273 = vunpack.c.l.bf16 %v553
      %v1274 = vunpack.c.l.bf16 %v554
      %v1275 = vunpack.c.l.bf16 %v555
      %v1276 = vunpack.c.l.bf16 %v556
      %v1277 = vunpack.c.l.bf16 %v557
      %v1278 = vunpack.c.l.bf16 %v558
      %v1279 = vunpack.c.l.bf16 %v559
      %v1280 = vunpack.c.l.bf16 %v560
      %v1281 = vunpack.c.l.bf16 %v561
      %v1282 = vunpack.c.l.bf16 %v562
      %v1283 = vunpack.c.l.bf16 %v563
      %v1284 = vunpack.c.l.bf16 %v564
      %v1285 = vunpack.c.l.bf16 %v565
      %v1286 = vunpack.c.l.bf16 %v566
      %v1287 = vunpack.c.l.bf16 %v567
      %v1288 = vunpack.c.l.bf16 %v568
      %v1289 = vunpack.c.l.bf16 %v569
      %v1290 = vunpack.c.l.bf16 %v570
      %v1291 = vunpack.c.l.bf16 %v571
      %v1292 = vunpack.c.l.bf16 %v572
      %v1293 = vunpack.c.l.bf16 %v573
      %v1294 = vunpack.c.l.bf16 %v574
      %v1295 = vunpack.c.l.bf16 %v575
      %v1296 = vunpack.c.l.bf16 %v576
      %v1297 = vunpack.c.l.bf16 %v577
      %v1298 = vunpack.c.l.bf16 %v578
      %v1299 = vunpack.c.l.bf16 %v579
      %v1300 = vunpack.c.l.bf16 %v580
      %v1301 = vunpack.c.l.bf16 %v581
      %v1302 = vunpack.c.l.bf16 %v582
      %v1303 = vunpack.c.l.bf16 %v583
      %v1304 = vunpack.c.l.bf16 %v584
      %v1305 = vunpack.c.l.bf16 %v585
      %v1306 = vunpack.c.l.bf16 %v586
      %v1307 = vunpack.c.l.bf16 %v587
      %v1308 = vunpack.c.l.bf16 %v588
      %v1309 = vunpack.c.l.bf16 %v589
      %v1310 = vunpack.c.l.bf16 %v590
      %v1311 = vunpack.c.l.bf16 %v591
      %v1312 = vunpack.c.l.bf16 %v592
      %v1313 = vunpack.c.l.bf16 %v593
      %v1314 = vunpack.c.l.bf16 %v594
      %v1315 = vunpack.c.l.bf16 %v595
      %v1316 = vunpack.c.l.bf16 %v596
      %v1317 = vunpack.c.l.bf16 %v597
      %v1318 = vunpack.c.l.bf16 %v598
      %v1319 = vunpack.c.l.bf16 %v599
      %v1320 = vunpack.c.l.bf16 %v600
      %v1321 = vunpack.c.l.bf16 %v601
      %v1322 = vunpack.c.l.bf16 %v602
      %v1323 = vunpack.c.l.bf16 %v603
      %v1324 = vunpack.c.l.bf16 %v604
      %v1325 = vunpack.c.l.bf16 %v605
      %v1326 = vunpack.c.l.bf16 %v606
      %v1327 = vunpack.c.l.bf16 %v607
      %v1328 = vunpack.c.l.bf16 %v608
      %v1329 = vunpack.c.l.bf16 %v609
      %v1330 = vunpack.c.l.bf16 %v610
      %v1331 = vunpack.c.l.bf16 %v611
      %v1332 = vunpack.c.l.bf16 %v612
      %v1333 = vunpack.c.l.bf16 %v613
      %v1334 = vunpack.c.l.bf16 %v614
      %v1335 = vunpack.c.l.bf16 %v615
      %v1336 = vunpack.c.l.bf16 %v616
      %v1337 = vunpack.c.l.bf16 %v617
      %v1338 = vunpack.c.l.bf16 %v618
      %v1339 = vunpack.c.l.bf16 %v619
      %v1340 = vunpack.c.l.bf16 %v620
      %v1341 = vunpack.c.l.bf16 %v621
      %v1342 = vunpack.c.l.bf16 %v622
      %v1343 = vunpack.c.l.bf16 %v623
      %v1344 = vunpack.c.l.bf16 %v624
      %v1345 = vunpack.c.l.bf16 %v625
      %v1346 = vunpack.c.l.bf16 %v626
      %v1347 = vunpack.c.l.bf16 %v627
      %v1348 = vunpack.c.l.bf16 %v628
      %v1349 = vunpack.c.l.bf16 %v629
      %v1350 = vunpack.c.l.bf16 %v630
      %v1351 = vunpack.c.l.bf16 %v631
      %v1352 = vunpack.c.l.bf16 %v632
      %v1353 = vunpack.c.l.bf16 %v633
      %v1354 = vunpack.c.l.bf16 %v634
      %v1355 = vunpack.c.l.bf16 %v635
      %v1356 = vunpack.c.l.bf16 %v636
      %v1357 = vunpack.c.l.bf16 %v637
      %v1358 = vunpack.c.l.bf16 %v638
      %v1359 = vunpack.c.l.bf16 %v639
      %v1360 = vunpack.c.l.bf16 %v640
      %v1361 = vunpack.c.l.bf16 %v641
      %v1362 = vunpack.c.l.bf16 %v642
      %v1363 = vunpack.c.l.bf16 %v643
      %v1364 = vunpack.c.l.bf16 %v644
      %v1365 = vunpack.c.l.bf16 %v645
      %v1366 = vunpack.c.l.bf16 %v646
      %v1367 = vunpack.c.l.bf16 %v647
      %v1368 = vunpack.c.l.bf16 %v648
      %v1369 = vunpack.c.l.bf16 %v649
      %v1370 = vunpack.c.l.bf16 %v650
      %v1371 = vunpack.c.l.bf16 %v651
      %v1372 = vunpack.c.l.bf16 %v652
      %v1373 = vunpack.c.l.bf16 %v653
      %v1374 = vunpack.c.l.bf16 %v654
      %v1375 = vunpack.c.l.bf16 %v655
      %v1376 = vunpack.c.l.bf16 %v656
      %v1377 = vunpack.c.l.bf16 %v657
      %v1378 = vunpack.c.l.bf16 %v658
      %v1379 = vunpack.c.l.bf16 %v659
      %v1380 = vunpack.c.l.bf16 %v660
      %v1381 = vunpack.c.l.bf16 %v661
      %v1382 = vunpack.c.l.bf16 %v662
      %v1383 = vunpack.c.l.bf16 %v663
      %v1384 = vunpack.c.l.bf16 %v664
      %v1385 = vunpack.c.l.bf16 %v665
      %v1386 = vunpack.c.l.bf16 %v666
      %v1387 = vunpack.c.l.bf16 %v667
      %v1388 = vunpack.c.l.bf16 %v668
      %v1389 = vunpack.c.l.bf16 %v669
      %v1390 = vunpack.c.l.bf16 %v670
      %v1391 = vunpack.c.l.bf16 %v671
      %v1392 = vunpack.c.l.bf16 %v672
      %v1393 = vunpack.c.l.bf16 %v673
      %v1394 = vunpack.c.l.bf16 %v674
      %v1395 = vunpack.c.l.bf16 %v675
      %v1396 = vunpack.c.l.bf16 %v676
      %v1397 = vunpack.c.l.bf16 %v677
      %v1398 = vunpack.c.l.bf16 %v678
      %v1399 = vunpack.c.l.bf16 %v679
      %v1400 = vunpack.c.l.bf16 %v680
      %v1401 = vunpack.c.l.bf16 %v681
      %v1402 = vunpack.c.l.bf16 %v682
      %v1403 = vunpack.c.l.bf16 %v683
      %v1404 = vunpack.c.l.bf16 %v684
      %v1405 = vunpack.c.l.bf16 %v685
      %v1406 = vunpack.c.l.bf16 %v686
      %v1407 = vunpack.c.l.bf16 %v687
      %v1408 = vunpack.c.l.bf16 %v688
      %v1409 = vunpack.c.l.bf16 %v689
      %v1410 = vunpack.c.l.bf16 %v690
      %v1411 = vunpack.c.l.bf16 %v691
      %v1412 = vunpack.c.l.bf16 %v692
      %v1413 = vunpack.c.l.bf16 %v693
      %v1414 = vunpack.c.l.bf16 %v694
      %v1415 = vunpack.c.l.bf16 %v695
      %v1416 = vunpack.c.l.bf16 %v696
      %v1417 = vunpack.c.l.bf16 %v697
      %v1418 = vunpack.c.l.bf16 %v698
      %v1419 = vunpack.c.l.bf16 %v699
      %v1420 = vunpack.c.l.bf16 %v700
      %v1421 = vunpack.c.l.bf16 %v701
      %v1422 = vunpack.c.l.bf16 %v702
      %v1423 = vunpack.c.l.bf16 %v703
      %v1424 = vunpack.c.l.bf16 %v704
      %v1425 = vunpack.c.l.bf16 %v705
      %v1426 = vunpack.c.l.bf16 %v706
      %v1427 = vunpack.c.l.bf16 %v707
      %v1428 = vunpack.c.l.bf16 %v708
      %v1429 = vunpack.c.l.bf16 %v709
      %v1430 = vunpack.c.l.bf16 %v710
      %v1431 = vunpack.c.l.bf16 %v711
      %v1432 = vunpack.c.l.bf16 %v712
      %v1433 = vunpack.c.l.bf16 %v713
      %v1434 = vunpack.c.l.bf16 %v714
      %v1435 = vunpack.c.l.bf16 %v715
      %v1436 = vunpack.c.l.bf16 %v716
      %v1437 = vunpack.c.l.bf16 %v717
      %v1438 = vunpack.c.l.bf16 %v718
      %v1439 = vunpack.c.l.bf16 %v719
      %v1440 = vunpack.c.l.bf16 %v720
      %v1441 = vunpack.c.l.bf16 %v721
      %v1442 = vunpack.c.l.bf16 %v722
      %v1443 = vunpack.c.l.bf16 %v723
      %v1444 = vunpack.c.l.bf16 %v724
      %v1445 = vunpack.c.l.bf16 %v725
      %v1446 = vunpack.c.l.bf16 %v726
      %v1447 = vunpack.c.l.bf16 %v727
      %v1448 = vunpack.c.l.bf16 %v728
      %v1449 = vunpack.c.l.bf16 %v729
      %v1450 = vunpack.c.l.bf16 %v730
      %v1451 = vunpack.c.l.bf16 %v731
      %v1452 = vunpack.c.l.bf16 %v732
      %v1453 = vunpack.c.l.bf16 %v733
      %v1454 = vunpack.c.l.bf16 %v734
      %v1455 = vunpack.c.l.bf16 %v735
      %v1456 = vunpack.c.l.bf16 %v736
      %v1457 = vunpack.c.l.bf16 %v737
      %v1458 = vunpack.c.l.bf16 %v738
      %v1459 = vunpack.c.l.bf16 %v739
      %v1460 = vunpack.c.l.bf16 %v740
      %v1461 = vunpack.c.l.bf16 %v741
      %v1462 = vunpack.c.l.bf16 %v742
      %v1463 = vunpack.c.l.bf16 %v743
      %v1464 = vunpack.c.l.bf16 %v744
      %v1465 = vunpack.c.l.bf16 %v745
      %v1466 = vunpack.c.l.bf16 %v746
      %v1467 = vunpack.c.l.bf16 %v747
      %v1468 = vunpack.c.l.bf16 %v748
      %v1469 = vunpack.c.l.bf16 %v749
      %v1470 = vunpack.c.l.bf16 %v750
      %v1471 = vunpack.c.l.bf16 %v751
      %v1472 = vunpack.c.l.bf16 %v752
      %v1473 = vunpack.c.l.bf16 %v753
      %v1474 = vunpack.c.l.bf16 %v754
      %v1475 = vunpack.c.l.bf16 %v755
      %v1476 = vunpack.c.l.bf16 %v756
      %v1477 = vunpack.c.l.bf16 %v757
      %v1478 = vunpack.c.l.bf16 %v758
      %v1479 = vunpack.c.l.bf16 %v759
      %v1480 = vunpack.c.l.bf16 %v760
      %v1481 = vunpack.c.l.bf16 %v761
      %v1482 = vunpack.c.l.bf16 %v762
      %v1483 = vunpack.c.l.bf16 %v763
      %v1484 = vunpack.c.l.bf16 %v764
      %v1485 = vunpack.c.l.bf16 %v765
      %v1486 = vunpack.c.l.bf16 %v766
      %v1487 = vunpack.c.l.bf16 %v767
      %v1488 = vunpack.c.l.bf16 %v768
      %v1489 = vunpack.c.l.bf16 %v769
      %v1490 = vunpack.c.l.bf16 %v770
      %v1491 = vunpack.c.l.bf16 %v771
      %v1492 = vunpack.c.l.bf16 %v772
      %v1493 = vunpack.c.l.bf16 %v773
      %v1494 = vunpack.c.l.bf16 %v774
      %v1495 = vunpack.c.l.bf16 %v775
      %v1496 = vunpack.c.l.bf16 %v776
      %v1497 = vunpack.c.l.bf16 %v777
      %v1498 = vunpack.c.l.bf16 %v778
      %v1499 = vunpack.c.l.bf16 %v779
      %v1500 = vunpack.c.l.bf16 %v780
      %v1501 = vunpack.c.l.bf16 %v781
      %v1502 = vunpack.c.l.bf16 %v782
      %v1503 = vunpack.c.l.bf16 %v783
      %v1504 = vunpack.c.l.bf16 %v784
      %v1505 = vunpack.c.l.bf16 %v785
      %v1506 = vunpack.c.l.bf16 %v786
      %v1507 = vunpack.c.l.bf16 %v787
      %v1508 = vunpack.c.l.bf16 %v788
      %v1509 = vunpack.c.l.bf16 %v789
      %v1510 = vunpack.c.l.bf16 %v790
      %v1511 = vunpack.c.l.bf16 %v791
      %v1512 = vunpack.c.l.bf16 %v792
      %v1513 = vunpack.c.l.bf16 %v793
      %v1514 = vunpack.c.l.bf16 %v794
      %v1515 = vunpack.c.l.bf16 %v795
      %v1516 = vunpack.c.l.bf16 %v796
      %v1517 = vunpack.c.l.bf16 %v797
      %v1518 = vunpack.c.l.bf16 %v798
      %v1519 = vunpack.c.l.bf16 %v799
      %v1520 = vunpack.c.l.bf16 %v800
      %v1521 = vunpack.c.l.bf16 %v801
      %v1522 = vunpack.c.l.bf16 %v802
      %v1523 = vunpack.c.l.bf16 %v803
      %v1524 = vunpack.c.l.bf16 %v804
      %v1525 = vunpack.c.l.bf16 %v805
      %v1526 = vunpack.c.l.bf16 %v806
      %v1527 = vunpack.c.l.bf16 %v807
      %v1528 = vunpack.c.l.bf16 %v808
      %v1529 = vunpack.c.l.bf16 %v809
      %v1530 = vunpack.c.l.bf16 %v810
      %v1531 = vunpack.c.l.bf16 %v811
      %v1532 = vunpack.c.l.bf16 %v812
      %v1533 = vunpack.c.l.bf16 %v813
      %v1534 = vunpack.c.l.bf16 %v814
      %v1535 = vunpack.c.l.bf16 %v815
      %v1536 = vunpack.c.l.bf16 %v816
      %v1537 = vunpack.c.l.bf16 %v817
      %v1538 = vunpack.c.l.bf16 %v818
      %v1539 = vunpack.c.l.bf16 %v819
      %v1540 = vunpack.c.l.bf16 %v820
      %v1541 = vunpack.c.l.bf16 %v821
      %v1542 = vunpack.c.l.bf16 %v822
      %v1543 = vunpack.c.l.bf16 %v823
      %v1544 = vunpack.c.l.bf16 %v824
      %v1545 = vunpack.c.l.bf16 %v825
      %v1546 = vunpack.c.l.bf16 %v826
      %v1547 = vunpack.c.l.bf16 %v827
      %v1548 = vunpack.c.l.bf16 %v828
      %v1549 = vunpack.c.l.bf16 %v829
      %v1550 = vunpack.c.l.bf16 %v830
      %v1551 = vunpack.c.l.bf16 %v831
      %v1552 = vunpack.c.l.bf16 %v832
      %v1553 = vunpack.c.l.bf16 %v833
      %v1554 = vunpack.c.l.bf16 %v834
      %v1555 = vunpack.c.l.bf16 %v835
      %v1556 = vunpack.c.l.bf16 %v836
      %v1557 = vunpack.c.l.bf16 %v837
      %v1558 = vunpack.c.l.bf16 %v838
      %v1559 = vunpack.c.l.bf16 %v839
      %v1560 = vunpack.c.l.bf16 %v840
      %v1561 = vunpack.c.l.bf16 %v841
      %v1562 = vunpack.c.l.bf16 %v842
      %v1563 = vunpack.c.l.bf16 %v843
      %v1564 = vunpack.c.l.bf16 %v844
      %v1565 = vunpack.c.l.bf16 %v845
      %v1566 = vunpack.c.l.bf16 %v846
      %v1567 = vunpack.c.l.bf16 %v847
      %v1568 = vunpack.c.l.bf16 %v848
      %v1569 = vunpack.c.l.bf16 %v849
      %v1570 = vunpack.c.l.bf16 %v850
      %v1571 = vunpack.c.l.bf16 %v851
      %v1572 = vunpack.c.l.bf16 %v852
      %v1573 = vunpack.c.l.bf16 %v853
      %v1574 = vunpack.c.l.bf16 %v854
      %v1575 = vunpack.c.l.bf16 %v855
      %v1576 = vunpack.c.l.bf16 %v856
      %v1577 = vunpack.c.l.bf16 %v857
      %v1578 = vunpack.c.l.bf16 %v858
      %v1579 = vunpack.c.l.bf16 %v859
      %v1580 = vunpack.c.l.bf16 %v860
      %v1581 = vunpack.c.l.bf16 %v861
      %v1582 = vunpack.c.l.bf16 %v862
      %v1583 = vunpack.c.l.bf16 %v863
      %v1584 = vunpack.c.l.bf16 %v864
      %v1585 = vunpack.c.l.bf16 %v865
      %v1586 = vunpack.c.l.bf16 %v866
      %v1587 = vunpack.c.l.bf16 %v867
      %v1588 = vunpack.c.l.bf16 %v868
      %v1589 = vunpack.c.l.bf16 %v869
      %v1590 = vunpack.c.l.bf16 %v870
      %v1591 = vunpack.c.l.bf16 %v871
      %v1592 = vunpack.c.l.bf16 %v872
      %v1593 = vunpack.c.l.bf16 %v873
      %v1594 = vunpack.c.l.bf16 %v874
      %v1595 = vunpack.c.l.bf16 %v875
      %v1596 = vunpack.c.l.bf16 %v876
      %v1597 = vunpack.c.l.bf16 %v877
      %v1598 = vunpack.c.l.bf16 %v878
      %v1599 = vunpack.c.l.bf16 %v879
      %v1600 = vunpack.c.l.bf16 %v880
      %v1601 = vunpack.c.l.bf16 %v881
      %v1602 = vunpack.c.l.bf16 %v882
      %v1603 = vunpack.c.l.bf16 %v883
      %v1604 = vunpack.c.l.bf16 %v884
      %v1605 = vunpack.c.l.bf16 %v885
      %v1606 = vunpack.c.l.bf16 %v886
      %v1607 = vunpack.c.l.bf16 %v887
      %v1608 = vunpack.c.l.bf16 %v888
      %v1609 = vunpack.c.l.bf16 %v889
      %v1610 = vunpack.c.l.bf16 %v890
      %v1611 = vunpack.c.l.bf16 %v891
      %v1612 = vunpack.c.l.bf16 %v892
      %v1613 = vunpack.c.l.bf16 %v893
      %v1614 = vunpack.c.l.bf16 %v894
      %v1615 = vunpack.c.l.bf16 %v895
      %v1616 = vunpack.c.l.bf16 %v896
      %v1617 = vunpack.c.l.bf16 %v897
      %v1618 = vunpack.c.l.bf16 %v898
      %v1619 = vunpack.c.l.bf16 %v899
      %v1620 = vunpack.c.l.bf16 %v900
      %v1621 = vunpack.c.l.bf16 %v901
      %v1622 = vunpack.c.l.bf16 %v902
      %v1623 = vunpack.c.l.bf16 %v903
      %v1624 = vunpack.c.l.bf16 %v904
      %v1625 = vunpack.c.l.bf16 %v905
      %v1626 = vunpack.c.l.bf16 %v906
      %v1627 = vunpack.c.l.bf16 %v907
      %v1628 = vunpack.c.l.bf16 %v908
      %v1629 = vunpack.c.l.bf16 %v909
      %v1631 = vcombine.high %v175, %v175
      %v1633 = vunpack.c.l.s4 1983009808
      %v1634 = vunpack.c.0.s8 %v1633
      %v1635 = vlaneseq
      %v1636 = vshrl.u32 %v1635, 7
      %v1637 = vsub.s32 %v1634, %v1636
      %v1638 = vrot.slane %v175, %v1637
      %v1640 = vunpack.c.l.s4 1983009808
      %v1641 = vunpack.c.0.s8 %v1640
      %v1642 = vlaneseq
      %v1643 = vshrl.u32 %v1642, 7
      %v1644 = vsub.s32 %v1641, %v1643
      %v1645 = vrot.slane %v1631, %v1644
      %v1646 = vcombine.high %v1638, %v1638
      %1650 = vmatprep.subr.mxu0 0.0
      %1651 = vmatpush1.msra.mxu0 %v910
      %1652 = vmatprep.subr.mxu0 0.0
      %1653 = vmatpush1.msra.mxu0 %v911
      %1654 = vmatprep.subr.mxu0 0.0
      %1655 = vmatpush1.msra.mxu0 %v912
      %1656 = vmatprep.subr.mxu0 0.0
      %1657 = vmatpush1.msra.mxu0 %v913
      %1658 = vmatprep.subr.mxu0 0.0
      %1659 = vmatpush1.msra.mxu0 %v914
      %1660 = vmatprep.subr.mxu0 0.0
      %1661 = vmatpush1.msra.mxu0 %v915
      %1662 = vmatprep.subr.mxu0 0.0
      %1663 = vmatpush1.msra.mxu0 %v916
      %1664 = vmatprep.subr.mxu0 0.0
      %1665 = vmatpush1.msra.mxu0 %v917
      %1666 = vmatprep.subr.mxu0 0.0
      %1667 = vmatpush1.msra.mxu0 %v918
      %1668 = vmatprep.subr.mxu0 0.0
      %1669 = vmatpush1.msra.mxu0 %v919
      %1670 = vmatprep.subr.mxu0 0.0
      %1671 = vmatpush1.msra.mxu0 %v920
      %1672 = vmatprep.subr.mxu0 0.0
      %1673 = vmatpush1.msra.mxu0 %v921
      %1674 = vmatprep.subr.mxu0 0.0
      %1675 = vmatpush1.msra.mxu0 %v922
      %1676 = vmatprep.subr.mxu0 0.0
      %1677 = vmatpush1.msra.mxu0 %v923
      %1678 = vmatprep.subr.mxu0 0.0
      %1679 = vmatpush1.msra.mxu0 %v924
      %1680 = vmatprep.subr.mxu0 0.0
      %1681 = vmatpush1.msra.mxu0 %v925
      %1682 = vmatprep.subr.mxu0 0.0
      %1683 = vmatpush1.msra.mxu0 %v926
      %1684 = vmatprep.subr.mxu0 0.0
      %1685 = vmatpush1.msra.mxu0 %v927
      %1686 = vmatprep.subr.mxu0 0.0
      %1687 = vmatpush1.msra.mxu0 %v928
      %1688 = vmatprep.subr.mxu0 0.0
      %1689 = vmatpush1.msra.mxu0 %v929
      %1690 = vmatprep.subr.mxu0 0.0
      %1691 = vmatpush1.msra.mxu0 %v930
      %1692 = vmatprep.subr.mxu0 0.0
      %1693 = vmatpush1.msra.mxu0 %v931
      %1694 = vmatprep.subr.mxu0 0.0
      %1695 = vmatpush1.msra.mxu0 %v932
      %1696 = vmatprep.subr.mxu0 0.0
      %1697 = vmatpush1.msra.mxu0 %v933
      %1698 = vmatprep.subr.mxu0 0.0
      %1699 = vmatpush1.msra.mxu0 %v934
      %1700 = vmatprep.subr.mxu0 0.0
      %1701 = vmatpush1.msra.mxu0 %v935
      %1702 = vmatprep.subr.mxu0 0.0
      %1703 = vmatpush1.msra.mxu0 %v936
      %1704 = vmatprep.subr.mxu0 0.0
      %1705 = vmatpush1.msra.mxu0 %v937
      %1706 = vmatprep.subr.mxu0 0.0
      %1707 = vmatpush1.msra.mxu0 %v938
      %1708 = vmatprep.subr.mxu0 0.0
      %1709 = vmatpush1.msra.mxu0 %v939
      %1710 = vmatprep.subr.mxu0 0.0
      %1711 = vmatpush1.msra.mxu0 %v940
      %1712 = vmatprep.subr.mxu0 0.0
      %1713 = vmatpush1.msra.mxu0 %v941
      %1714 = vmatprep.mubr.f32.mxu0 %v1646
      %1715 = vmatmul.mubr.f32.gmra.mrb[0].mxu0 %v1638
      %v1716 = vpop.f32.mrb[0].mxu0
      %v1717 = vadd.f32 0.0, %v1716
      %v1718 = vpop.f32.mrb[0].mxu0
      %1719 = vdwg.mxu0
      %1720 = vmatprep.subr.mxu0 0.0
      %1721 = vmatpush1.msra.mxu0 %v942
      %1722 = vmatprep.subr.mxu0 0.0
      %1723 = vmatpush1.msra.mxu0 %v943
      %1724 = vmatprep.subr.mxu0 0.0
      %1725 = vmatpush1.msra.mxu0 %v944
      %1726 = vmatprep.subr.mxu0 0.0
      %1727 = vmatpush1.msra.mxu0 %v945
      %1728 = vmatprep.subr.mxu0 0.0
      %1729 = vmatpush1.msra.mxu0 %v946
      %1730 = vmatprep.subr.mxu0 0.0
      %1731 = vmatpush1.msra.mxu0 %v947
      %1732 = vmatprep.subr.mxu0 0.0
      %1733 = vmatpush1.msra.mxu0 %v948
      %1734 = vmatprep.subr.mxu0 0.0
      %1735 = vmatpush1.msra.mxu0 %v949
      %1736 = vmatprep.subr.mxu0 0.0
      %1737 = vmatpush1.msra.mxu0 %v950
      %1738 = vmatprep.subr.mxu0 0.0
      %1739 = vmatpush1.msra.mxu0 %v951
      %1740 = vmatprep.subr.mxu0 0.0
      %1741 = vmatpush1.msra.mxu0 %v952
      %1742 = vmatprep.subr.mxu0 0.0
      %1743 = vmatpush1.msra.mxu0 %v953
      %1744 = vmatprep.subr.mxu0 0.0
      %1745 = vmatpush1.msra.mxu0 %v954
      %1746 = vmatprep.subr.mxu0 0.0
      %1747 = vmatpush1.msra.mxu0 %v955
      %1748 = vmatprep.subr.mxu0 0.0
      %1749 = vmatpush1.msra.mxu0 %v956
      %1750 = vmatprep.subr.mxu0 0.0
      %1751 = vmatpush1.msra.mxu0 %v957
      %1752 = vmatprep.subr.mxu0 0.0
      %1753 = vmatpush1.msra.mxu0 0.0
      %1754 = vmatprep.subr.mxu0 0.0
      %1755 = vmatpush1.msra.mxu0 0.0
      %1756 = vmatprep.subr.mxu0 0.0
      %1757 = vmatpush1.msra.mxu0 0.0
      %1758 = vmatprep.subr.mxu0 0.0
      %1759 = vmatpush1.msra.mxu0 0.0
      %1760 = vmatprep.subr.mxu0 0.0
      %1761 = vmatpush1.msra.mxu0 0.0
      %1762 = vmatprep.subr.mxu0 0.0
      %1763 = vmatpush1.msra.mxu0 0.0
      %1764 = vmatprep.subr.mxu0 0.0
      %1765 = vmatpush1.msra.mxu0 0.0
      %1766 = vmatprep.subr.mxu0 0.0
      %1767 = vmatpush1.msra.mxu0 0.0
      %1768 = vmatprep.subr.mxu0 0.0
      %1769 = vmatpush1.msra.mxu0 0.0
      %1770 = vmatprep.subr.mxu0 0.0
      %1771 = vmatpush1.msra.mxu0 0.0
      %1772 = vmatprep.subr.mxu0 0.0
      %1773 = vmatpush1.msra.mxu0 0.0
      %1774 = vmatprep.subr.mxu0 0.0
      %1775 = vmatpush1.msra.mxu0 0.0
      %1776 = vmatprep.subr.mxu0 0.0
      %1777 = vmatpush1.msra.mxu0 0.0
      %1778 = vmatprep.subr.mxu0 0.0
      %1779 = vmatpush1.msra.mxu0 0.0
      %1780 = vmatprep.subr.mxu0 0.0
      %1781 = vmatpush1.msra.mxu0 0.0
      %1782 = vmatprep.subr.mxu0 0.0
      %1783 = vmatpush1.msra.mxu0 0.0
      %1784 = vmatprep.mubr.f32.mxu0 0.0
      %1785 = vmatmul.mubr.f32.gmra.mrb[0].mxu0 %v1645
      %v1786 = vpop.f32.mrb[0].mxu0
      %v1787 = vadd.f32 %v1717, %v1786
      %v1788 = vpop.f32.mrb[0].mxu0
      %1789 = vdwg.mxu0
      %v1791 = vcombine.high %v176, %v176
      %v1793 = vunpack.c.l.s4 1983009808
      %v1794 = vunpack.c.0.s8 %v1793
      %v1795 = vlaneseq
      %v1796 = vshrl.u32 %v1795, 7
      %v1797 = vsub.s32 %v1794, %v1796
      %v1798 = vrot.slane %v176, %v1797
      %v1800 = vunpack.c.l.s4 1983009808
      %v1801 = vunpack.c.0.s8 %v1800
      %v1802 = vlaneseq
      %v1803 = vshrl.u32 %v1802, 7
      %v1804 = vsub.s32 %v1801, %v1803
      %v1805 = vrot.slane %v1791, %v1804
      %v1806 = vcombine.high %v1798, %v1798
      %1810 = vmatprep.subr.mxu0 0.0
      %1811 = vmatpush1.msra.mxu0 %v958
      %1812 = vmatprep.subr.mxu0 0.0
      %1813 = vmatpush1.msra.mxu0 %v959
      %1814 = vmatprep.subr.mxu0 0.0
      %1815 = vmatpush1.msra.mxu0 %v960
      %1816 = vmatprep.subr.mxu0 0.0
      %1817 = vmatpush1.msra.mxu0 %v961
      %1818 = vmatprep.subr.mxu0 0.0
      %1819 = vmatpush1.msra.mxu0 %v962
      %1820 = vmatprep.subr.mxu0 0.0
      %1821 = vmatpush1.msra.mxu0 %v963
      %1822 = vmatprep.subr.mxu0 0.0
      %1823 = vmatpush1.msra.mxu0 %v964
      %1824 = vmatprep.subr.mxu0 0.0
      %1825 = vmatpush1.msra.mxu0 %v965
      %1826 = vmatprep.subr.mxu0 0.0
      %1827 = vmatpush1.msra.mxu0 %v966
      %1828 = vmatprep.subr.mxu0 0.0
      %1829 = vmatpush1.msra.mxu0 %v967
      %1830 = vmatprep.subr.mxu0 0.0
      %1831 = vmatpush1.msra.mxu0 %v968
      %1832 = vmatprep.subr.mxu0 0.0
      %1833 = vmatpush1.msra.mxu0 %v969
      %1834 = vmatprep.subr.mxu0 0.0
      %1835 = vmatpush1.msra.mxu0 %v970
      %1836 = vmatprep.subr.mxu0 0.0
      %1837 = vmatpush1.msra.mxu0 %v971
      %1838 = vmatprep.subr.mxu0 0.0
      %1839 = vmatpush1.msra.mxu0 %v972
      %1840 = vmatprep.subr.mxu0 0.0
      %1841 = vmatpush1.msra.mxu0 %v973
      %1842 = vmatprep.subr.mxu0 0.0
      %1843 = vmatpush1.msra.mxu0 %v974
      %1844 = vmatprep.subr.mxu0 0.0
      %1845 = vmatpush1.msra.mxu0 %v975
      %1846 = vmatprep.subr.mxu0 0.0
      %1847 = vmatpush1.msra.mxu0 %v976
      %1848 = vmatprep.subr.mxu0 0.0
      %1849 = vmatpush1.msra.mxu0 %v977
      %1850 = vmatprep.subr.mxu0 0.0
      %1851 = vmatpush1.msra.mxu0 %v978
      %1852 = vmatprep.subr.mxu0 0.0
      %1853 = vmatpush1.msra.mxu0 %v979
      %1854 = vmatprep.subr.mxu0 0.0
      %1855 = vmatpush1.msra.mxu0 %v980
      %1856 = vmatprep.subr.mxu0 0.0
      %1857 = vmatpush1.msra.mxu0 %v981
      %1858 = vmatprep.subr.mxu0 0.0
      %1859 = vmatpush1.msra.mxu0 %v982
      %1860 = vmatprep.subr.mxu0 0.0
      %1861 = vmatpush1.msra.mxu0 %v983
      %1862 = vmatprep.subr.mxu0 0.0
      %1863 = vmatpush1.msra.mxu0 %v984
      %1864 = vmatprep.subr.mxu0 0.0
      %1865 = vmatpush1.msra.mxu0 %v985
      %1866 = vmatprep.subr.mxu0 0.0
      %1867 = vmatpush1.msra.mxu0 %v986
      %1868 = vmatprep.subr.mxu0 0.0
      %1869 = vmatpush1.msra.mxu0 %v987
      %1870 = vmatprep.subr.mxu0 0.0
      %1871 = vmatpush1.msra.mxu0 %v988
      %1872 = vmatprep.subr.mxu0 0.0
      %1873 = vmatpush1.msra.mxu0 %v989
      %1874 = vmatprep.mubr.f32.mxu0 %v1806
      %1875 = vmatmul.mubr.f32.gmra.mrb[0].mxu0 %v1798
      %v1876 = vpop.f32.mrb[0].mxu0
      %v1877 = vadd.f32 0.0, %v1876
      %v1878 = vpop.f32.mrb[0].mxu0
      %1879 = vdwg.mxu0
      %1880 = vmatprep.subr.mxu0 0.0
      %1881 = vmatpush1.msra.mxu0 %v990
      %1882 = vmatprep.subr.mxu0 0.0
      %1883 = vmatpush1.msra.mxu0 %v991
      %1884 = vmatprep.subr.mxu0 0.0
      %1885 = vmatpush1.msra.mxu0 %v992
      %1886 = vmatprep.subr.mxu0 0.0
      %1887 = vmatpush1.msra.mxu0 %v993
      %1888 = vmatprep.subr.mxu0 0.0
      %1889 = vmatpush1.msra.mxu0 %v994
      %1890 = vmatprep.subr.mxu0 0.0
      %1891 = vmatpush1.msra.mxu0 %v995
      %1892 = vmatprep.subr.mxu0 0.0
      %1893 = vmatpush1.msra.mxu0 %v996
      %1894 = vmatprep.subr.mxu0 0.0
      %1895 = vmatpush1.msra.mxu0 %v997
      %1896 = vmatprep.subr.mxu0 0.0
      %1897 = vmatpush1.msra.mxu0 %v998
      %1898 = vmatprep.subr.mxu0 0.0
      %1899 = vmatpush1.msra.mxu0 %v999
      %1900 = vmatprep.subr.mxu0 0.0
      %1901 = vmatpush1.msra.mxu0 %v1000
      %1902 = vmatprep.subr.mxu0 0.0
      %1903 = vmatpush1.msra.mxu0 %v1001
      %1904 = vmatprep.subr.mxu0 0.0
      %1905 = vmatpush1.msra.mxu0 %v1002
      %1906 = vmatprep.subr.mxu0 0.0
      %1907 = vmatpush1.msra.mxu0 %v1003
      %1908 = vmatprep.subr.mxu0 0.0
      %1909 = vmatpush1.msra.mxu0 %v1004
      %1910 = vmatprep.subr.mxu0 0.0
      %1911 = vmatpush1.msra.mxu0 %v1005
      %1912 = vmatprep.subr.mxu0 0.0
      %1913 = vmatpush1.msra.mxu0 0.0
      %1914 = vmatprep.subr.mxu0 0.0
      %1915 = vmatpush1.msra.mxu0 0.0
      %1916 = vmatprep.subr.mxu0 0.0
      %1917 = vmatpush1.msra.mxu0 0.0
      %1918 = vmatprep.subr.mxu0 0.0
      %1919 = vmatpush1.msra.mxu0 0.0
      %1920 = vmatprep.subr.mxu0 0.0
      %1921 = vmatpush1.msra.mxu0 0.0
      %1922 = vmatprep.subr.mxu0 0.0
      %1923 = vmatpush1.msra.mxu0 0.0
      %1924 = vmatprep.subr.mxu0 0.0
      %1925 = vmatpush1.msra.mxu0 0.0
      %1926 = vmatprep.subr.mxu0 0.0
      %1927 = vmatpush1.msra.mxu0 0.0
      %1928 = vmatprep.subr.mxu0 0.0
      %1929 = vmatpush1.msra.mxu0 0.0
      %1930 = vmatprep.subr.mxu0 0.0
      %1931 = vmatpush1.msra.mxu0 0.0
      %1932 = vmatprep.subr.mxu0 0.0
      %1933 = vmatpush1.msra.mxu0 0.0
      %1934 = vmatprep.subr.mxu0 0.0
      %1935 = vmatpush1.msra.mxu0 0.0
      %1936 = vmatprep.subr.mxu0 0.0
      %1937 = vmatpush1.msra.mxu0 0.0
      %1938 = vmatprep.subr.mxu0 0.0
      %1939 = vmatpush1.msra.mxu0 0.0
      %1940 = vmatprep.subr.mxu0 0.0
      %1941 = vmatpush1.msra.mxu0 0.0
      %1942 = vmatprep.subr.mxu0 0.0
      %1943 = vmatpush1.msra.mxu0 0.0
      %1944 = vmatprep.mubr.f32.mxu0 0.0
      %1945 = vmatmul.mubr.f32.gmra.mrb[0].mxu0 %v1805
      %v1946 = vpop.f32.mrb[0].mxu0
      %v1947 = vadd.f32 %v1877, %v1946
      %v1948 = vpop.f32.mrb[0].mxu0
      %1949 = vdwg.mxu0
      %v1951 = vcombine.high %v177, %v177
      %v1953 = vunpack.c.l.s4 1983009808
      %v1954 = vunpack.c.0.s8 %v1953
      %v1955 = vlaneseq
      %v1956 = vshrl.u32 %v1955, 7
      %v1957 = vsub.s32 %v1954, %v1956
      %v1958 = vrot.slane %v177, %v1957
      %v1960 = vunpack.c.l.s4 1983009808
      %v1961 = vunpack.c.0.s8 %v1960
      %v1962 = vlaneseq
      %v1963 = vshrl.u32 %v1962, 7
      %v1964 = vsub.s32 %v1961, %v1963
      %v1965 = vrot.slane %v1951, %v1964
      %v1966 = vcombine.high %v1958, %v1958
      %1970 = vmatprep.subr.mxu0 0.0
      %1971 = vmatpush1.msra.mxu0 %v1006
      %1972 = vmatprep.subr.mxu0 0.0
      %1973 = vmatpush1.msra.mxu0 %v1007
      %1974 = vmatprep.subr.mxu0 0.0
      %1975 = vmatpush1.msra.mxu0 %v1008
      %1976 = vmatprep.subr.mxu0 0.0
      %1977 = vmatpush1.msra.mxu0 %v1009
      %1978 = vmatprep.subr.mxu0 0.0
      %1979 = vmatpush1.msra.mxu0 %v1010
      %1980 = vmatprep.subr.mxu0 0.0
      %1981 = vmatpush1.msra.mxu0 %v1011
      %1982 = vmatprep.subr.mxu0 0.0
      %1983 = vmatpush1.msra.mxu0 %v1012
      %1984 = vmatprep.subr.mxu0 0.0
      %1985 = vmatpush1.msra.mxu0 %v1013
      %1986 = vmatprep.subr.mxu0 0.0
      %1987 = vmatpush1.msra.mxu0 %v1014
      %1988 = vmatprep.subr.mxu0 0.0
      %1989 = vmatpush1.msra.mxu0 %v1015
      %1990 = vmatprep.subr.mxu0 0.0
      %1991 = vmatpush1.msra.mxu0 %v1016
      %1992 = vmatprep.subr.mxu0 0.0
      %1993 = vmatpush1.msra.mxu0 %v1017
      %1994 = vmatprep.subr.mxu0 0.0
      %1995 = vmatpush1.msra.mxu0 %v1018
      %1996 = vmatprep.subr.mxu0 0.0
      %1997 = vmatpush1.msra.mxu0 %v1019
      %1998 = vmatprep.subr.mxu0 0.0
      %1999 = vmatpush1.msra.mxu0 %v1020
      %2000 = vmatprep.subr.mxu0 0.0
      %2001 = vmatpush1.msra.mxu0 %v1021
      %2002 = vmatprep.subr.mxu0 0.0
      %2003 = vmatpush1.msra.mxu0 %v1022
      %2004 = vmatprep.subr.mxu0 0.0
      %2005 = vmatpush1.msra.mxu0 %v1023
      %2006 = vmatprep.subr.mxu0 0.0
      %2007 = vmatpush1.msra.mxu0 %v1024
      %2008 = vmatprep.subr.mxu0 0.0
      %2009 = vmatpush1.msra.mxu0 %v1025
      %2010 = vmatprep.subr.mxu0 0.0
      %2011 = vmatpush1.msra.mxu0 %v1026
      %2012 = vmatprep.subr.mxu0 0.0
      %2013 = vmatpush1.msra.mxu0 %v1027
      %2014 = vmatprep.subr.mxu0 0.0
      %2015 = vmatpush1.msra.mxu0 %v1028
      %2016 = vmatprep.subr.mxu0 0.0
      %2017 = vmatpush1.msra.mxu0 %v1029
      %2018 = vmatprep.subr.mxu0 0.0
      %2019 = vmatpush1.msra.mxu0 %v1030
      %2020 = vmatprep.subr.mxu0 0.0
      %2021 = vmatpush1.msra.mxu0 %v1031
      %2022 = vmatprep.subr.mxu0 0.0
      %2023 = vmatpush1.msra.mxu0 %v1032
      %2024 = vmatprep.subr.mxu0 0.0
      %2025 = vmatpush1.msra.mxu0 %v1033
      %2026 = vmatprep.subr.mxu0 0.0
      %2027 = vmatpush1.msra.mxu0 %v1034
      %2028 = vmatprep.subr.mxu0 0.0
      %2029 = vmatpush1.msra.mxu0 %v1035
      %2030 = vmatprep.subr.mxu0 0.0
      %2031 = vmatpush1.msra.mxu0 %v1036
      %2032 = vmatprep.subr.mxu0 0.0
      %2033 = vmatpush1.msra.mxu0 %v1037
      %2034 = vmatprep.mubr.f32.mxu0 %v1966
      %2035 = vmatmul.mubr.f32.gmra.mrb[0].mxu0 %v1958
      %v2036 = vpop.f32.mrb[0].mxu0
      %v2037 = vadd.f32 0.0, %v2036
      %v2038 = vpop.f32.mrb[0].mxu0
      %2039 = vdwg.mxu0
      %2040 = vmatprep.subr.mxu0 0.0
      %2041 = vmatpush1.msra.mxu0 %v1038
      %2042 = vmatprep.subr.mxu0 0.0
      %2043 = vmatpush1.msra.mxu0 %v1039
      %2044 = vmatprep.subr.mxu0 0.0
      %2045 = vmatpush1.msra.mxu0 %v1040
      %2046 = vmatprep.subr.mxu0 0.0
      %2047 = vmatpush1.msra.mxu0 %v1041
      %2048 = vmatprep.subr.mxu0 0.0
      %2049 = vmatpush1.msra.mxu0 %v1042
      %2050 = vmatprep.subr.mxu0 0.0
      %2051 = vmatpush1.msra.mxu0 %v1043
      %2052 = vmatprep.subr.mxu0 0.0
      %2053 = vmatpush1.msra.mxu0 %v1044
      %2054 = vmatprep.subr.mxu0 0.0
      %2055 = vmatpush1.msra.mxu0 %v1045
      %2056 = vmatprep.subr.mxu0 0.0
      %2057 = vmatpush1.msra.mxu0 %v1046
      %2058 = vmatprep.subr.mxu0 0.0
      %2059 = vmatpush1.msra.mxu0 %v1047
      %2060 = vmatprep.subr.mxu0 0.0
      %2061 = vmatpush1.msra.mxu0 %v1048
      %2062 = vmatprep.subr.mxu0 0.0
      %2063 = vmatpush1.msra.mxu0 %v1049
      %2064 = vmatprep.subr.mxu0 0.0
      %2065 = vmatpush1.msra.mxu0 %v1050
      %2066 = vmatprep.subr.mxu0 0.0
      %2067 = vmatpush1.msra.mxu0 %v1051
      %2068 = vmatprep.subr.mxu0 0.0
      %2069 = vmatpush1.msra.mxu0 %v1052
      %2070 = vmatprep.subr.mxu0 0.0
      %2071 = vmatpush1.msra.mxu0 %v1053
      %2072 = vmatprep.subr.mxu0 0.0
      %2073 = vmatpush1.msra.mxu0 0.0
      %2074 = vmatprep.subr.mxu0 0.0
      %2075 = vmatpush1.msra.mxu0 0.0
      %2076 = vmatprep.subr.mxu0 0.0
      %2077 = vmatpush1.msra.mxu0 0.0
      %2078 = vmatprep.subr.mxu0 0.0
      %2079 = vmatpush1.msra.mxu0 0.0
      %2080 = vmatprep.subr.mxu0 0.0
      %2081 = vmatpush1.msra.mxu0 0.0
      %2082 = vmatprep.subr.mxu0 0.0
      %2083 = vmatpush1.msra.mxu0 0.0
      %2084 = vmatprep.subr.mxu0 0.0
      %2085 = vmatpush1.msra.mxu0 0.0
      %2086 = vmatprep.subr.mxu0 0.0
      %2087 = vmatpush1.msra.mxu0 0.0
      %2088 = vmatprep.subr.mxu0 0.0
      %2089 = vmatpush1.msra.mxu0 0.0
      %2090 = vmatprep.subr.mxu0 0.0
      %2091 = vmatpush1.msra.mxu0 0.0
      %2092 = vmatprep.subr.mxu0 0.0
      %2093 = vmatpush1.msra.mxu0 0.0
      %2094 = vmatprep.subr.mxu0 0.0
      %2095 = vmatpush1.msra.mxu0 0.0
      %2096 = vmatprep.subr.mxu0 0.0
      %2097 = vmatpush1.msra.mxu0 0.0
      %2098 = vmatprep.subr.mxu0 0.0
      %2099 = vmatpush1.msra.mxu0 0.0
      %2100 = vmatprep.subr.mxu0 0.0
      %2101 = vmatpush1.msra.mxu0 0.0
      %2102 = vmatprep.subr.mxu0 0.0
      %2103 = vmatpush1.msra.mxu0 0.0
      %2104 = vmatprep.mubr.f32.mxu0 0.0
      %2105 = vmatmul.mubr.f32.gmra.mrb[0].mxu0 %v1965
      %v2106 = vpop.f32.mrb[0].mxu0
      %v2107 = vadd.f32 %v2037, %v2106
      %v2108 = vpop.f32.mrb[0].mxu0
      %2109 = vdwg.mxu0
      %v2111 = vcombine.high %v178, %v178
      %v2113 = vunpack.c.l.s4 1983009808
      %v2114 = vunpack.c.0.s8 %v2113
      %v2115 = vlaneseq
      %v2116 = vshrl.u32 %v2115, 7
      %v2117 = vsub.s32 %v2114, %v2116
      %v2118 = vrot.slane %v178, %v2117
      %v2120 = vunpack.c.l.s4 1983009808
      %v2121 = vunpack.c.0.s8 %v2120
      %v2122 = vlaneseq
      %v2123 = vshrl.u32 %v2122, 7
      %v2124 = vsub.s32 %v2121, %v2123
      %v2125 = vrot.slane %v2111, %v2124
      %v2126 = vcombine.high %v2118, %v2118
      %2130 = vmatprep.subr.mxu0 0.0
      %2131 = vmatpush1.msra.mxu0 %v1054
      %2132 = vmatprep.subr.mxu0 0.0
      %2133 = vmatpush1.msra.mxu0 %v1055
      %2134 = vmatprep.subr.mxu0 0.0
      %2135 = vmatpush1.msra.mxu0 %v1056
      %2136 = vmatprep.subr.mxu0 0.0
      %2137 = vmatpush1.msra.mxu0 %v1057
      %2138 = vmatprep.subr.mxu0 0.0
      %2139 = vmatpush1.msra.mxu0 %v1058
      %2140 = vmatprep.subr.mxu0 0.0
      %2141 = vmatpush1.msra.mxu0 %v1059
      %2142 = vmatprep.subr.mxu0 0.0
      %2143 = vmatpush1.msra.mxu0 %v1060
      %2144 = vmatprep.subr.mxu0 0.0
      %2145 = vmatpush1.msra.mxu0 %v1061
      %2146 = vmatprep.subr.mxu0 0.0
      %2147 = vmatpush1.msra.mxu0 %v1062
      %2148 = vmatprep.subr.mxu0 0.0
      %2149 = vmatpush1.msra.mxu0 %v1063
      %2150 = vmatprep.subr.mxu0 0.0
      %2151 = vmatpush1.msra.mxu0 %v1064
      %2152 = vmatprep.subr.mxu0 0.0
      %2153 = vmatpush1.msra.mxu0 %v1065
      %2154 = vmatprep.subr.mxu0 0.0
      %2155 = vmatpush1.msra.mxu0 %v1066
      %2156 = vmatprep.subr.mxu0 0.0
      %2157 = vmatpush1.msra.mxu0 %v1067
      %2158 = vmatprep.subr.mxu0 0.0
      %2159 = vmatpush1.msra.mxu0 %v1068
      %2160 = vmatprep.subr.mxu0 0.0
      %2161 = vmatpush1.msra.mxu0 %v1069
      %2162 = vmatprep.subr.mxu0 0.0
      %2163 = vmatpush1.msra.mxu0 %v1070
      %2164 = vmatprep.subr.mxu0 0.0
      %2165 = vmatpush1.msra.mxu0 %v1071
      %2166 = vmatprep.subr.mxu0 0.0
      %2167 = vmatpush1.msra.mxu0 %v1072
      %2168 = vmatprep.subr.mxu0 0.0
      %2169 = vmatpush1.msra.mxu0 %v1073
      %2170 = vmatprep.subr.mxu0 0.0
      %2171 = vmatpush1.msra.mxu0 %v1074
      %2172 = vmatprep.subr.mxu0 0.0
      %2173 = vmatpush1.msra.mxu0 %v1075
      %2174 = vmatprep.subr.mxu0 0.0
      %2175 = vmatpush1.msra.mxu0 %v1076
      %2176 = vmatprep.subr.mxu0 0.0
      %2177 = vmatpush1.msra.mxu0 %v1077
      %2178 = vmatprep.subr.mxu0 0.0
      %2179 = vmatpush1.msra.mxu0 %v1078
      %2180 = vmatprep.subr.mxu0 0.0
      %2181 = vmatpush1.msra.mxu0 %v1079
      %2182 = vmatprep.subr.mxu0 0.0
      %2183 = vmatpush1.msra.mxu0 %v1080
      %2184 = vmatprep.subr.mxu0 0.0
      %2185 = vmatpush1.msra.mxu0 %v1081
      %2186 = vmatprep.subr.mxu0 0.0
      %2187 = vmatpush1.msra.mxu0 %v1082
      %2188 = vmatprep.subr.mxu0 0.0
      %2189 = vmatpush1.msra.mxu0 %v1083
      %2190 = vmatprep.subr.mxu0 0.0
      %2191 = vmatpush1.msra.mxu0 %v1084
      %2192 = vmatprep.subr.mxu0 0.0
      %2193 = vmatpush1.msra.mxu0 %v1085
      %2194 = vmatprep.mubr.f32.mxu0 %v2126
      %2195 = vmatmul.mubr.f32.gmra.mrb[0].mxu0 %v2118
      %v2196 = vpop.f32.mrb[0].mxu0
      %v2197 = vadd.f32 0.0, %v2196
      %v2198 = vpop.f32.mrb[0].mxu0
      %2199 = vdwg.mxu0
      %2200 = vmatprep.subr.mxu0 0.0
      %2201 = vmatpush1.msra.mxu0 %v1086
      %2202 = vmatprep.subr.mxu0 0.0
      %2203 = vmatpush1.msra.mxu0 %v1087
      %2204 = vmatprep.subr.mxu0 0.0
      %2205 = vmatpush1.msra.mxu0 %v1088
      %2206 = vmatprep.subr.mxu0 0.0
      %2207 = vmatpush1.msra.mxu0 %v1089
      %2208 = vmatprep.subr.mxu0 0.0
      %2209 = vmatpush1.msra.mxu0 %v1090
      %2210 = vmatprep.subr.mxu0 0.0
      %2211 = vmatpush1.msra.mxu0 %v1091
      %2212 = vmatprep.subr.mxu0 0.0
      %2213 = vmatpush1.msra.mxu0 %v1092
      %2214 = vmatprep.subr.mxu0 0.0
      %2215 = vmatpush1.msra.mxu0 %v1093
      %2216 = vmatprep.subr.mxu0 0.0
      %2217 = vmatpush1.msra.mxu0 %v1094
      %2218 = vmatprep.subr.mxu0 0.0
      %2219 = vmatpush1.msra.mxu0 %v1095
      %2220 = vmatprep.subr.mxu0 0.0
      %2221 = vmatpush1.msra.mxu0 %v1096
      %2222 = vmatprep.subr.mxu0 0.0
      %2223 = vmatpush1.msra.mxu0 %v1097
      %2224 = vmatprep.subr.mxu0 0.0
      %2225 = vmatpush1.msra.mxu0 %v1098
      %2226 = vmatprep.subr.mxu0 0.0
      %2227 = vmatpush1.msra.mxu0 %v1099
      %2228 = vmatprep.subr.mxu0 0.0
      %2229 = vmatpush1.msra.mxu0 %v1100
      %2230 = vmatprep.subr.mxu0 0.0
      %2231 = vmatpush1.msra.mxu0 %v1101
      %2232 = vmatprep.subr.mxu0 0.0
      %2233 = vmatpush1.msra.mxu0 0.0
      %2234 = vmatprep.subr.mxu0 0.0
      %2235 = vmatpush1.msra.mxu0 0.0
      %2236 = vmatprep.subr.mxu0 0.0
      %2237 = vmatpush1.msra.mxu0 0.0
      %2238 = vmatprep.subr.mxu0 0.0
      %2239 = vmatpush1.msra.mxu0 0.0
      %2240 = vmatprep.subr.mxu0 0.0
      %2241 = vmatpush1.msra.mxu0 0.0
      %2242 = vmatprep.subr.mxu0 0.0
      %2243 = vmatpush1.msra.mxu0 0.0
      %2244 = vmatprep.subr.mxu0 0.0
      %2245 = vmatpush1.msra.mxu0 0.0
      %2246 = vmatprep.subr.mxu0 0.0
      %2247 = vmatpush1.msra.mxu0 0.0
      %2248 = vmatprep.subr.mxu0 0.0
      %2249 = vmatpush1.msra.mxu0 0.0
      %2250 = vmatprep.subr.mxu0 0.0
      %2251 = vmatpush1.msra.mxu0 0.0
      %2252 = vmatprep.subr.mxu0 0.0
      %2253 = vmatpush1.msra.mxu0 0.0
      %2254 = vmatprep.subr.mxu0 0.0
      %2255 = vmatpush1.msra.mxu0 0.0
      %2256 = vmatprep.subr.mxu0 0.0
      %2257 = vmatpush1.msra.mxu0 0.0
      %2258 = vmatprep.subr.mxu0 0.0
      %2259 = vmatpush1.msra.mxu0 0.0
      %2260 = vmatprep.subr.mxu0 0.0
      %2261 = vmatpush1.msra.mxu0 0.0
      %2262 = vmatprep.subr.mxu0 0.0
      %2263 = vmatpush1.msra.mxu0 0.0
      %2264 = vmatprep.mubr.f32.mxu0 0.0
      %2265 = vmatmul.mubr.f32.gmra.mrb[0].mxu0 %v2125
      %v2266 = vpop.f32.mrb[0].mxu0
      %v2267 = vadd.f32 %v2197, %v2266
      %v2268 = vpop.f32.mrb[0].mxu0
      %2269 = vdwg.mxu0
      %v2271 = vcombine.high %v179, %v179
      %v2273 = vunpack.c.l.s4 1983009808
      %v2274 = vunpack.c.0.s8 %v2273
      %v2275 = vlaneseq
      %v2276 = vshrl.u32 %v2275, 7
      %v2277 = vsub.s32 %v2274, %v2276
      %v2278 = vrot.slane %v179, %v2277
      %v2280 = vunpack.c.l.s4 1983009808
      %v2281 = vunpack.c.0.s8 %v2280
      %v2282 = vlaneseq
      %v2283 = vshrl.u32 %v2282, 7
      %v2284 = vsub.s32 %v2281, %v2283
      %v2285 = vrot.slane %v2271, %v2284
      %v2286 = vcombine.high %v2278, %v2278
      %2290 = vmatprep.subr.mxu0 0.0
      %2291 = vmatpush1.msra.mxu0 %v1102
      %2292 = vmatprep.subr.mxu0 0.0
      %2293 = vmatpush1.msra.mxu0 %v1103
      %2294 = vmatprep.subr.mxu0 0.0
      %2295 = vmatpush1.msra.mxu0 %v1104
      %2296 = vmatprep.subr.mxu0 0.0
      %2297 = vmatpush1.msra.mxu0 %v1105
      %2298 = vmatprep.subr.mxu0 0.0
      %2299 = vmatpush1.msra.mxu0 %v1106
      %2300 = vmatprep.subr.mxu0 0.0
      %2301 = vmatpush1.msra.mxu0 %v1107
      %2302 = vmatprep.subr.mxu0 0.0
      %2303 = vmatpush1.msra.mxu0 %v1108
      %2304 = vmatprep.subr.mxu0 0.0
      %2305 = vmatpush1.msra.mxu0 %v1109
      %2306 = vmatprep.subr.mxu0 0.0
      %2307 = vmatpush1.msra.mxu0 %v1110
      %2308 = vmatprep.subr.mxu0 0.0
      %2309 = vmatpush1.msra.mxu0 %v1111
      %2310 = vmatprep.subr.mxu0 0.0
      %2311 = vmatpush1.msra.mxu0 %v1112
      %2312 = vmatprep.subr.mxu0 0.0
      %2313 = vmatpush1.msra.mxu0 %v1113
      %2314 = vmatprep.subr.mxu0 0.0
      %2315 = vmatpush1.msra.mxu0 %v1114
      %2316 = vmatprep.subr.mxu0 0.0
      %2317 = vmatpush1.msra.mxu0 %v1115
      %2318 = vmatprep.subr.mxu0 0.0
      %2319 = vmatpush1.msra.mxu0 %v1116
      %2320 = vmatprep.subr.mxu0 0.0
      %2321 = vmatpush1.msra.mxu0 %v1117
      %2322 = vmatprep.subr.mxu0 0.0
      %2323 = vmatpush1.msra.mxu0 %v1118
      %2324 = vmatprep.subr.mxu0 0.0
      %2325 = vmatpush1.msra.mxu0 %v1119
      %2326 = vmatprep.subr.mxu0 0.0
      %2327 = vmatpush1.msra.mxu0 %v1120
      %2328 = vmatprep.subr.mxu0 0.0
      %2329 = vmatpush1.msra.mxu0 %v1121
      %2330 = vmatprep.subr.mxu0 0.0
      %2331 = vmatpush1.msra.mxu0 %v1122
      %2332 = vmatprep.subr.mxu0 0.0
      %2333 = vmatpush1.msra.mxu0 %v1123
      %2334 = vmatprep.subr.mxu0 0.0
      %2335 = vmatpush1.msra.mxu0 %v1124
      %2336 = vmatprep.subr.mxu0 0.0
      %2337 = vmatpush1.msra.mxu0 %v1125
      %2338 = vmatprep.subr.mxu0 0.0
      %2339 = vmatpush1.msra.mxu0 %v1126
      %2340 = vmatprep.subr.mxu0 0.0
      %2341 = vmatpush1.msra.mxu0 %v1127
      %2342 = vmatprep.subr.mxu0 0.0
      %2343 = vmatpush1.msra.mxu0 %v1128
      %2344 = vmatprep.subr.mxu0 0.0
      %2345 = vmatpush1.msra.mxu0 %v1129
      %2346 = vmatprep.subr.mxu0 0.0
      %2347 = vmatpush1.msra.mxu0 %v1130
      %2348 = vmatprep.subr.mxu0 0.0
      %2349 = vmatpush1.msra.mxu0 %v1131
      %2350 = vmatprep.subr.mxu0 0.0
      %2351 = vmatpush1.msra.mxu0 %v1132
      %2352 = vmatprep.subr.mxu0 0.0
      %2353 = vmatpush1.msra.mxu0 %v1133
      %2354 = vmatprep.mubr.f32.mxu0 %v2286
      %2355 = vmatmul.mubr.f32.gmra.mrb[0].mxu0 %v2278
      %v2356 = vpop.f32.mrb[0].mxu0
      %v2357 = vadd.f32 0.0, %v2356
      %v2358 = vpop.f32.mrb[0].mxu0
      %2359 = vdwg.mxu0
      %2360 = vmatprep.subr.mxu0 0.0
      %2361 = vmatpush1.msra.mxu0 %v1134
      %2362 = vmatprep.subr.mxu0 0.0
      %2363 = vmatpush1.msra.mxu0 %v1135
      %2364 = vmatprep.subr.mxu0 0.0
      %2365 = vmatpush1.msra.mxu0 %v1136
      %2366 = vmatprep.subr.mxu0 0.0
      %2367 = vmatpush1.msra.mxu0 %v1137
      %2368 = vmatprep.subr.mxu0 0.0
      %2369 = vmatpush1.msra.mxu0 %v1138
      %2370 = vmatprep.subr.mxu0 0.0
      %2371 = vmatpush1.msra.mxu0 %v1139
      %2372 = vmatprep.subr.mxu0 0.0
      %2373 = vmatpush1.msra.mxu0 %v1140
      %2374 = vmatprep.subr.mxu0 0.0
      %2375 = vmatpush1.msra.mxu0 %v1141
      %2376 = vmatprep.subr.mxu0 0.0
      %2377 = vmatpush1.msra.mxu0 %v1142
      %2378 = vmatprep.subr.mxu0 0.0
      %2379 = vmatpush1.msra.mxu0 %v1143
      %2380 = vmatprep.subr.mxu0 0.0
      %2381 = vmatpush1.msra.mxu0 %v1144
      %2382 = vmatprep.subr.mxu0 0.0
      %2383 = vmatpush1.msra.mxu0 %v1145
      %2384 = vmatprep.subr.mxu0 0.0
      %2385 = vmatpush1.msra.mxu0 %v1146
      %2386 = vmatprep.subr.mxu0 0.0
      %2387 = vmatpush1.msra.mxu0 %v1147
      %2388 = vmatprep.subr.mxu0 0.0
      %2389 = vmatpush1.msra.mxu0 %v1148
      %2390 = vmatprep.subr.mxu0 0.0
      %2391 = vmatpush1.msra.mxu0 %v1149
      %2392 = vmatprep.subr.mxu0 0.0
      %2393 = vmatpush1.msra.mxu0 0.0
      %2394 = vmatprep.subr.mxu0 0.0
      %2395 = vmatpush1.msra.mxu0 0.0
      %2396 = vmatprep.subr.mxu0 0.0
      %2397 = vmatpush1.msra.mxu0 0.0
      %2398 = vmatprep.subr.mxu0 0.0
      %2399 = vmatpush1.msra.mxu0 0.0
      %2400 = vmatprep.subr.mxu0 0.0
      %2401 = vmatpush1.msra.mxu0 0.0
      %2402 = vmatprep.subr.mxu0 0.0
      %2403 = vmatpush1.msra.mxu0 0.0
      %2404 = vmatprep.subr.mxu0 0.0
      %2405 = vmatpush1.msra.mxu0 0.0
      %2406 = vmatprep.subr.mxu0 0.0
      %2407 = vmatpush1.msra.mxu0 0.0
      %2408 = vmatprep.subr.mxu0 0.0
      %2409 = vmatpush1.msra.mxu0 0.0
      %2410 = vmatprep.subr.mxu0 0.0
      %2411 = vmatpush1.msra.mxu0 0.0
      %2412 = vmatprep.subr.mxu0 0.0
      %2413 = vmatpush1.msra.mxu0 0.0
      %2414 = vmatprep.subr.mxu0 0.0
      %2415 = vmatpush1.msra.mxu0 0.0
      %2416 = vmatprep.subr.mxu0 0.0
      %2417 = vmatpush1.msra.mxu0 0.0
      %2418 = vmatprep.subr.mxu0 0.0
      %2419 = vmatpush1.msra.mxu0 0.0
      %2420 = vmatprep.subr.mxu0 0.0
      %2421 = vmatpush1.msra.mxu0 0.0
      %2422 = vmatprep.subr.mxu0 0.0
      %2423 = vmatpush1.msra.mxu0 0.0
      %2424 = vmatprep.mubr.f32.mxu0 0.0
      %2425 = vmatmul.mubr.f32.gmra.mrb[0].mxu0 %v2285
      %v2426 = vpop.f32.mrb[0].mxu0
      %v2427 = vadd.f32 %v2357, %v2426
      %v2428 = vpop.f32.mrb[0].mxu0
      %2429 = vdwg.mxu0
      %v2431 = vcombine.high %v180, %v180
      %v2433 = vunpack.c.l.s4 1983009808
      %v2434 = vunpack.c.0.s8 %v2433
      %v2435 = vlaneseq
      %v2436 = vshrl.u32 %v2435, 7
      %v2437 = vsub.s32 %v2434, %v2436
      %v2438 = vrot.slane %v180, %v2437
      %v2440 = vunpack.c.l.s4 1983009808
      %v2441 = vunpack.c.0.s8 %v2440
      %v2442 = vlaneseq
      %v2443 = vshrl.u32 %v2442, 7
      %v2444 = vsub.s32 %v2441, %v2443
      %v2445 = vrot.slane %v2431, %v2444
      %v2446 = vcombine.high %v2438, %v2438
      %2450 = vmatprep.subr.mxu0 0.0
      %2451 = vmatpush1.msra.mxu0 %v1150
      %2452 = vmatprep.subr.mxu0 0.0
      %2453 = vmatpush1.msra.mxu0 %v1151
      %2454 = vmatprep.subr.mxu0 0.0
      %2455 = vmatpush1.msra.mxu0 %v1152
      %2456 = vmatprep.subr.mxu0 0.0
      %2457 = vmatpush1.msra.mxu0 %v1153
      %2458 = vmatprep.subr.mxu0 0.0
      %2459 = vmatpush1.msra.mxu0 %v1154
      %2460 = vmatprep.subr.mxu0 0.0
      %2461 = vmatpush1.msra.mxu0 %v1155
      %2462 = vmatprep.subr.mxu0 0.0
      %2463 = vmatpush1.msra.mxu0 %v1156
      %2464 = vmatprep.subr.mxu0 0.0
      %2465 = vmatpush1.msra.mxu0 %v1157
      %2466 = vmatprep.subr.mxu0 0.0
      %2467 = vmatpush1.msra.mxu0 %v1158
      %2468 = vmatprep.subr.mxu0 0.0
      %2469 = vmatpush1.msra.mxu0 %v1159
      %2470 = vmatprep.subr.mxu0 0.0
      %2471 = vmatpush1.msra.mxu0 %v1160
      %2472 = vmatprep.subr.mxu0 0.0
      %2473 = vmatpush1.msra.mxu0 %v1161
      %2474 = vmatprep.subr.mxu0 0.0
      %2475 = vmatpush1.msra.mxu0 %v1162
      %2476 = vmatprep.subr.mxu0 0.0
      %2477 = vmatpush1.msra.mxu0 %v1163
      %2478 = vmatprep.subr.mxu0 0.0
      %2479 = vmatpush1.msra.mxu0 %v1164
      %2480 = vmatprep.subr.mxu0 0.0
      %2481 = vmatpush1.msra.mxu0 %v1165
      %2482 = vmatprep.subr.mxu0 0.0
      %2483 = vmatpush1.msra.mxu0 %v1166
      %2484 = vmatprep.subr.mxu0 0.0
      %2485 = vmatpush1.msra.mxu0 %v1167
      %2486 = vmatprep.subr.mxu0 0.0
      %2487 = vmatpush1.msra.mxu0 %v1168
      %2488 = vmatprep.subr.mxu0 0.0
      %2489 = vmatpush1.msra.mxu0 %v1169
      %2490 = vmatprep.subr.mxu0 0.0
      %2491 = vmatpush1.msra.mxu0 %v1170
      %2492 = vmatprep.subr.mxu0 0.0
      %2493 = vmatpush1.msra.mxu0 %v1171
      %2494 = vmatprep.subr.mxu0 0.0
      %2495 = vmatpush1.msra.mxu0 %v1172
      %2496 = vmatprep.subr.mxu0 0.0
      %2497 = vmatpush1.msra.mxu0 %v1173
      %2498 = vmatprep.subr.mxu0 0.0
      %2499 = vmatpush1.msra.mxu0 %v1174
      %2500 = vmatprep.subr.mxu0 0.0
      %2501 = vmatpush1.msra.mxu0 %v1175
      %2502 = vmatprep.subr.mxu0 0.0
      %2503 = vmatpush1.msra.mxu0 %v1176
      %2504 = vmatprep.subr.mxu0 0.0
      %2505 = vmatpush1.msra.mxu0 %v1177
      %2506 = vmatprep.subr.mxu0 0.0
      %2507 = vmatpush1.msra.mxu0 %v1178
      %2508 = vmatprep.subr.mxu0 0.0
      %2509 = vmatpush1.msra.mxu0 %v1179
      %2510 = vmatprep.subr.mxu0 0.0
      %2511 = vmatpush1.msra.mxu0 %v1180
      %2512 = vmatprep.subr.mxu0 0.0
      %2513 = vmatpush1.msra.mxu0 %v1181
      %2514 = vmatprep.mubr.f32.mxu0 %v2446
      %2515 = vmatmul.mubr.f32.gmra.mrb[0].mxu0 %v2438
      %v2516 = vpop.f32.mrb[0].mxu0
      %v2517 = vadd.f32 0.0, %v2516
      %v2518 = vpop.f32.mrb[0].mxu0
      %2519 = vdwg.mxu0
      %2520 = vmatprep.subr.mxu0 0.0
      %2521 = vmatpush1.msra.mxu0 %v1182
      %2522 = vmatprep.subr.mxu0 0.0
      %2523 = vmatpush1.msra.mxu0 %v1183
      %2524 = vmatprep.subr.mxu0 0.0
      %2525 = vmatpush1.msra.mxu0 %v1184
      %2526 = vmatprep.subr.mxu0 0.0
      %2527 = vmatpush1.msra.mxu0 %v1185
      %2528 = vmatprep.subr.mxu0 0.0
      %2529 = vmatpush1.msra.mxu0 %v1186
      %2530 = vmatprep.subr.mxu0 0.0
      %2531 = vmatpush1.msra.mxu0 %v1187
      %2532 = vmatprep.subr.mxu0 0.0
      %2533 = vmatpush1.msra.mxu0 %v1188
      %2534 = vmatprep.subr.mxu0 0.0
      %2535 = vmatpush1.msra.mxu0 %v1189
      %2536 = vmatprep.subr.mxu0 0.0
      %2537 = vmatpush1.msra.mxu0 %v1190
      %2538 = vmatprep.subr.mxu0 0.0
      %2539 = vmatpush1.msra.mxu0 %v1191
      %2540 = vmatprep.subr.mxu0 0.0
      %2541 = vmatpush1.msra.mxu0 %v1192
      %2542 = vmatprep.subr.mxu0 0.0
      %2543 = vmatpush1.msra.mxu0 %v1193
      %2544 = vmatprep.subr.mxu0 0.0
      %2545 = vmatpush1.msra.mxu0 %v1194
      %2546 = vmatprep.subr.mxu0 0.0
      %2547 = vmatpush1.msra.mxu0 %v1195
      %2548 = vmatprep.subr.mxu0 0.0
      %2549 = vmatpush1.msra.mxu0 %v1196
      %2550 = vmatprep.subr.mxu0 0.0
      %2551 = vmatpush1.msra.mxu0 %v1197
      %2552 = vmatprep.subr.mxu0 0.0
      %2553 = vmatpush1.msra.mxu0 0.0
      %2554 = vmatprep.subr.mxu0 0.0
      %2555 = vmatpush1.msra.mxu0 0.0
      %2556 = vmatprep.subr.mxu0 0.0
      %2557 = vmatpush1.msra.mxu0 0.0
      %2558 = vmatprep.subr.mxu0 0.0
      %2559 = vmatpush1.msra.mxu0 0.0
      %2560 = vmatprep.subr.mxu0 0.0
      %2561 = vmatpush1.msra.mxu0 0.0
      %2562 = vmatprep.subr.mxu0 0.0
      %2563 = vmatpush1.msra.mxu0 0.0
      %2564 = vmatprep.subr.mxu0 0.0
      %2565 = vmatpush1.msra.mxu0 0.0
      %2566 = vmatprep.subr.mxu0 0.0
      %2567 = vmatpush1.msra.mxu0 0.0
      %2568 = vmatprep.subr.mxu0 0.0
      %2569 = vmatpush1.msra.mxu0 0.0
      %2570 = vmatprep.subr.mxu0 0.0
      %2571 = vmatpush1.msra.mxu0 0.0
      %2572 = vmatprep.subr.mxu0 0.0
      %2573 = vmatpush1.msra.mxu0 0.0
      %2574 = vmatprep.subr.mxu0 0.0
      %2575 = vmatpush1.msra.mxu0 0.0
      %2576 = vmatprep.subr.mxu0 0.0
      %2577 = vmatpush1.msra.mxu0 0.0
      %2578 = vmatprep.subr.mxu0 0.0
      %2579 = vmatpush1.msra.mxu0 0.0
      %2580 = vmatprep.subr.mxu0 0.0
      %2581 = vmatpush1.msra.mxu0 0.0
      %2582 = vmatprep.subr.mxu0 0.0
      %2583 = vmatpush1.msra.mxu0 0.0
      %2584 = vmatprep.mubr.f32.mxu0 0.0
      %2585 = vmatmul.mubr.f32.gmra.mrb[0].mxu0 %v2445
      %v2586 = vpop.f32.mrb[0].mxu0
      %v2587 = vadd.f32 %v2517, %v2586
      %v2588 = vpop.f32.mrb[0].mxu0
      %2589 = vdwg.mxu0
      %v2591 = vcombine.high %v181, %v181
      %v2593 = vunpack.c.l.s4 1983009808
      %v2594 = vunpack.c.0.s8 %v2593
      %v2595 = vlaneseq
      %v2596 = vshrl.u32 %v2595, 7
      %v2597 = vsub.s32 %v2594, %v2596
      %v2598 = vrot.slane %v181, %v2597
      %v2600 = vunpack.c.l.s4 1983009808
      %v2601 = vunpack.c.0.s8 %v2600
      %v2602 = vlaneseq
      %v2603 = vshrl.u32 %v2602, 7
      %v2604 = vsub.s32 %v2601, %v2603
      %v2605 = vrot.slane %v2591, %v2604
      %v2606 = vcombine.high %v2598, %v2598
      %2610 = vmatprep.subr.mxu0 0.0
      %2611 = vmatpush1.msra.mxu0 %v1198
      %2612 = vmatprep.subr.mxu0 0.0
      %2613 = vmatpush1.msra.mxu0 %v1199
      %2614 = vmatprep.subr.mxu0 0.0
      %2615 = vmatpush1.msra.mxu0 %v1200
      %2616 = vmatprep.subr.mxu0 0.0
      %2617 = vmatpush1.msra.mxu0 %v1201
      %2618 = vmatprep.subr.mxu0 0.0
      %2619 = vmatpush1.msra.mxu0 %v1202
      %2620 = vmatprep.subr.mxu0 0.0
      %2621 = vmatpush1.msra.mxu0 %v1203
      %2622 = vmatprep.subr.mxu0 0.0
      %2623 = vmatpush1.msra.mxu0 %v1204
      %2624 = vmatprep.subr.mxu0 0.0
      %2625 = vmatpush1.msra.mxu0 %v1205
      %2626 = vmatprep.subr.mxu0 0.0
      %2627 = vmatpush1.msra.mxu0 %v1206
      %2628 = vmatprep.subr.mxu0 0.0
      %2629 = vmatpush1.msra.mxu0 %v1207
      %2630 = vmatprep.subr.mxu0 0.0
      %2631 = vmatpush1.msra.mxu0 %v1208
      %2632 = vmatprep.subr.mxu0 0.0
      %2633 = vmatpush1.msra.mxu0 %v1209
      %2634 = vmatprep.subr.mxu0 0.0
      %2635 = vmatpush1.msra.mxu0 %v1210
      %2636 = vmatprep.subr.mxu0 0.0
      %2637 = vmatpush1.msra.mxu0 %v1211
      %2638 = vmatprep.subr.mxu0 0.0
      %2639 = vmatpush1.msra.mxu0 %v1212
      %2640 = vmatprep.subr.mxu0 0.0
      %2641 = vmatpush1.msra.mxu0 %v1213
      %2642 = vmatprep.subr.mxu0 0.0
      %2643 = vmatpush1.msra.mxu0 %v1214
      %2644 = vmatprep.subr.mxu0 0.0
      %2645 = vmatpush1.msra.mxu0 %v1215
      %2646 = vmatprep.subr.mxu0 0.0
      %2647 = vmatpush1.msra.mxu0 %v1216
      %2648 = vmatprep.subr.mxu0 0.0
      %2649 = vmatpush1.msra.mxu0 %v1217
      %2650 = vmatprep.subr.mxu0 0.0
      %2651 = vmatpush1.msra.mxu0 %v1218
      %2652 = vmatprep.subr.mxu0 0.0
      %2653 = vmatpush1.msra.mxu0 %v1219
      %2654 = vmatprep.subr.mxu0 0.0
      %2655 = vmatpush1.msra.mxu0 %v1220
      %2656 = vmatprep.subr.mxu0 0.0
      %2657 = vmatpush1.msra.mxu0 %v1221
      %2658 = vmatprep.subr.mxu0 0.0
      %2659 = vmatpush1.msra.mxu0 %v1222
      %2660 = vmatprep.subr.mxu0 0.0
      %2661 = vmatpush1.msra.mxu0 %v1223
      %2662 = vmatprep.subr.mxu0 0.0
      %2663 = vmatpush1.msra.mxu0 %v1224
      %2664 = vmatprep.subr.mxu0 0.0
      %2665 = vmatpush1.msra.mxu0 %v1225
      %2666 = vmatprep.subr.mxu0 0.0
      %2667 = vmatpush1.msra.mxu0 %v1226
      %2668 = vmatprep.subr.mxu0 0.0
      %2669 = vmatpush1.msra.mxu0 %v1227
      %2670 = vmatprep.subr.mxu0 0.0
      %2671 = vmatpush1.msra.mxu0 %v1228
      %2672 = vmatprep.subr.mxu0 0.0
      %2673 = vmatpush1.msra.mxu0 %v1229
      %2674 = vmatprep.mubr.f32.mxu0 %v2606
      %2675 = vmatmul.mubr.f32.gmra.mrb[0].mxu0 %v2598
      %v2676 = vpop.f32.mrb[0].mxu0
      %v2677 = vadd.f32 0.0, %v2676
      %v2678 = vpop.f32.mrb[0].mxu0
      %2679 = vdwg.mxu0
      %2680 = vmatprep.subr.mxu0 0.0
      %2681 = vmatpush1.msra.mxu0 %v1230
      %2682 = vmatprep.subr.mxu0 0.0
      %2683 = vmatpush1.msra.mxu0 %v1231
      %2684 = vmatprep.subr.mxu0 0.0
      %2685 = vmatpush1.msra.mxu0 %v1232
      %2686 = vmatprep.subr.mxu0 0.0
      %2687 = vmatpush1.msra.mxu0 %v1233
      %2688 = vmatprep.subr.mxu0 0.0
      %2689 = vmatpush1.msra.mxu0 %v1234
      %2690 = vmatprep.subr.mxu0 0.0
      %2691 = vmatpush1.msra.mxu0 %v1235
      %2692 = vmatprep.subr.mxu0 0.0
      %2693 = vmatpush1.msra.mxu0 %v1236
      %2694 = vmatprep.subr.mxu0 0.0
      %2695 = vmatpush1.msra.mxu0 %v1237
      %2696 = vmatprep.subr.mxu0 0.0
      %2697 = vmatpush1.msra.mxu0 %v1238
      %2698 = vmatprep.subr.mxu0 0.0
      %2699 = vmatpush1.msra.mxu0 %v1239
      %2700 = vmatprep.subr.mxu0 0.0
      %2701 = vmatpush1.msra.mxu0 %v1240
      %2702 = vmatprep.subr.mxu0 0.0
      %2703 = vmatpush1.msra.mxu0 %v1241
      %2704 = vmatprep.subr.mxu0 0.0
      %2705 = vmatpush1.msra.mxu0 %v1242
      %2706 = vmatprep.subr.mxu0 0.0
      %2707 = vmatpush1.msra.mxu0 %v1243
      %2708 = vmatprep.subr.mxu0 0.0
      %2709 = vmatpush1.msra.mxu0 %v1244
      %2710 = vmatprep.subr.mxu0 0.0
      %2711 = vmatpush1.msra.mxu0 %v1245
      %2712 = vmatprep.subr.mxu0 0.0
      %2713 = vmatpush1.msra.mxu0 0.0
      %2714 = vmatprep.subr.mxu0 0.0
      %2715 = vmatpush1.msra.mxu0 0.0
      %2716 = vmatprep.subr.mxu0 0.0
      %2717 = vmatpush1.msra.mxu0 0.0
      %2718 = vmatprep.subr.mxu0 0.0
      %2719 = vmatpush1.msra.mxu0 0.0
      %2720 = vmatprep.subr.mxu0 0.0
      %2721 = vmatpush1.msra.mxu0 0.0
      %2722 = vmatprep.subr.mxu0 0.0
      %2723 = vmatpush1.msra.mxu0 0.0
      %2724 = vmatprep.subr.mxu0 0.0
      %2725 = vmatpush1.msra.mxu0 0.0
      %2726 = vmatprep.subr.mxu0 0.0
      %2727 = vmatpush1.msra.mxu0 0.0
      %2728 = vmatprep.subr.mxu0 0.0
      %2729 = vmatpush1.msra.mxu0 0.0
      %2730 = vmatprep.subr.mxu0 0.0
      %2731 = vmatpush1.msra.mxu0 0.0
      %2732 = vmatprep.subr.mxu0 0.0
      %2733 = vmatpush1.msra.mxu0 0.0
      %2734 = vmatprep.subr.mxu0 0.0
      %2735 = vmatpush1.msra.mxu0 0.0
      %2736 = vmatprep.subr.mxu0 0.0
      %2737 = vmatpush1.msra.mxu0 0.0
      %2738 = vmatprep.subr.mxu0 0.0
      %2739 = vmatpush1.msra.mxu0 0.0
      %2740 = vmatprep.subr.mxu0 0.0
      %2741 = vmatpush1.msra.mxu0 0.0
      %2742 = vmatprep.subr.mxu0 0.0
      %2743 = vmatpush1.msra.mxu0 0.0
      %2744 = vmatprep.mubr.f32.mxu0 0.0
      %2745 = vmatmul.mubr.f32.gmra.mrb[0].mxu0 %v2605
      %v2746 = vpop.f32.mrb[0].mxu0
      %v2747 = vadd.f32 %v2677, %v2746
      %v2748 = vpop.f32.mrb[0].mxu0
      %2749 = vdwg.mxu0
      %v2751 = vcombine.high %v182, %v182
      %v2753 = vunpack.c.l.s4 1983009808
      %v2754 = vunpack.c.0.s8 %v2753
      %v2755 = vlaneseq
      %v2756 = vshrl.u32 %v2755, 7
      %v2757 = vsub.s32 %v2754, %v2756
      %v2758 = vrot.slane %v182, %v2757
      %v2760 = vunpack.c.l.s4 1983009808
      %v2761 = vunpack.c.0.s8 %v2760
      %v2762 = vlaneseq
      %v2763 = vshrl.u32 %v2762, 7
      %v2764 = vsub.s32 %v2761, %v2763
      %v2765 = vrot.slane %v2751, %v2764
      %v2766 = vcombine.high %v2758, %v2758
      %2770 = vmatprep.subr.mxu0 0.0
      %2771 = vmatpush1.msra.mxu0 %v1246
      %2772 = vmatprep.subr.mxu0 0.0
      %2773 = vmatpush1.msra.mxu0 %v1247
      %2774 = vmatprep.subr.mxu0 0.0
      %2775 = vmatpush1.msra.mxu0 %v1248
      %2776 = vmatprep.subr.mxu0 0.0
      %2777 = vmatpush1.msra.mxu0 %v1249
      %2778 = vmatprep.subr.mxu0 0.0
      %2779 = vmatpush1.msra.mxu0 %v1250
      %2780 = vmatprep.subr.mxu0 0.0
      %2781 = vmatpush1.msra.mxu0 %v1251
      %2782 = vmatprep.subr.mxu0 0.0
      %2783 = vmatpush1.msra.mxu0 %v1252
      %2784 = vmatprep.subr.mxu0 0.0
      %2785 = vmatpush1.msra.mxu0 %v1253
      %2786 = vmatprep.subr.mxu0 0.0
      %2787 = vmatpush1.msra.mxu0 %v1254
      %2788 = vmatprep.subr.mxu0 0.0
      %2789 = vmatpush1.msra.mxu0 %v1255
      %2790 = vmatprep.subr.mxu0 0.0
      %2791 = vmatpush1.msra.mxu0 %v1256
      %2792 = vmatprep.subr.mxu0 0.0
      %2793 = vmatpush1.msra.mxu0 %v1257
      %2794 = vmatprep.subr.mxu0 0.0
      %2795 = vmatpush1.msra.mxu0 %v1258
      %2796 = vmatprep.subr.mxu0 0.0
      %2797 = vmatpush1.msra.mxu0 %v1259
      %2798 = vmatprep.subr.mxu0 0.0
      %2799 = vmatpush1.msra.mxu0 %v1260
      %2800 = vmatprep.subr.mxu0 0.0
      %2801 = vmatpush1.msra.mxu0 %v1261
      %2802 = vmatprep.subr.mxu0 0.0
      %2803 = vmatpush1.msra.mxu0 %v1262
      %2804 = vmatprep.subr.mxu0 0.0
      %2805 = vmatpush1.msra.mxu0 %v1263
      %2806 = vmatprep.subr.mxu0 0.0
      %2807 = vmatpush1.msra.mxu0 %v1264
      %2808 = vmatprep.subr.mxu0 0.0
      %2809 = vmatpush1.msra.mxu0 %v1265
      %2810 = vmatprep.subr.mxu0 0.0
      %2811 = vmatpush1.msra.mxu0 %v1266
      %2812 = vmatprep.subr.mxu0 0.0
      %2813 = vmatpush1.msra.mxu0 %v1267
      %2814 = vmatprep.subr.mxu0 0.0
      %2815 = vmatpush1.msra.mxu0 %v1268
      %2816 = vmatprep.subr.mxu0 0.0
      %2817 = vmatpush1.msra.mxu0 %v1269
      %2818 = vmatprep.subr.mxu0 0.0
      %2819 = vmatpush1.msra.mxu0 %v1270
      %2820 = vmatprep.subr.mxu0 0.0
      %2821 = vmatpush1.msra.mxu0 %v1271
      %2822 = vmatprep.subr.mxu0 0.0
      %2823 = vmatpush1.msra.mxu0 %v1272
      %2824 = vmatprep.subr.mxu0 0.0
      %2825 = vmatpush1.msra.mxu0 %v1273
      %2826 = vmatprep.subr.mxu0 0.0
      %2827 = vmatpush1.msra.mxu0 %v1274
      %2828 = vmatprep.subr.mxu0 0.0
      %2829 = vmatpush1.msra.mxu0 %v1275
      %2830 = vmatprep.subr.mxu0 0.0
      %2831 = vmatpush1.msra.mxu0 %v1276
      %2832 = vmatprep.subr.mxu0 0.0
      %2833 = vmatpush1.msra.mxu0 %v1277
      %2834 = vmatprep.mubr.f32.mxu0 %v2766
      %2835 = vmatmul.mubr.f32.gmra.mrb[0].mxu0 %v2758
      %v2836 = vpop.f32.mrb[0].mxu0
      %v2837 = vadd.f32 0.0, %v2836
      %v2838 = vpop.f32.mrb[0].mxu0
      %2839 = vdwg.mxu0
      %2840 = vmatprep.subr.mxu0 0.0
      %2841 = vmatpush1.msra.mxu0 %v1278
      %2842 = vmatprep.subr.mxu0 0.0
      %2843 = vmatpush1.msra.mxu0 %v1279
      %2844 = vmatprep.subr.mxu0 0.0
      %2845 = vmatpush1.msra.mxu0 %v1280
      %2846 = vmatprep.subr.mxu0 0.0
      %2847 = vmatpush1.msra.mxu0 %v1281
      %2848 = vmatprep.subr.mxu0 0.0
      %2849 = vmatpush1.msra.mxu0 %v1282
      %2850 = vmatprep.subr.mxu0 0.0
      %2851 = vmatpush1.msra.mxu0 %v1283
      %2852 = vmatprep.subr.mxu0 0.0
      %2853 = vmatpush1.msra.mxu0 %v1284
      %2854 = vmatprep.subr.mxu0 0.0
      %2855 = vmatpush1.msra.mxu0 %v1285
      %2856 = vmatprep.subr.mxu0 0.0
      %2857 = vmatpush1.msra.mxu0 %v1286
      %2858 = vmatprep.subr.mxu0 0.0
      %2859 = vmatpush1.msra.mxu0 %v1287
      %2860 = vmatprep.subr.mxu0 0.0
      %2861 = vmatpush1.msra.mxu0 %v1288
      %2862 = vmatprep.subr.mxu0 0.0
      %2863 = vmatpush1.msra.mxu0 %v1289
      %2864 = vmatprep.subr.mxu0 0.0
      %2865 = vmatpush1.msra.mxu0 %v1290
      %2866 = vmatprep.subr.mxu0 0.0
      %2867 = vmatpush1.msra.mxu0 %v1291
      %2868 = vmatprep.subr.mxu0 0.0
      %2869 = vmatpush1.msra.mxu0 %v1292
      %2870 = vmatprep.subr.mxu0 0.0
      %2871 = vmatpush1.msra.mxu0 %v1293
      %2872 = vmatprep.subr.mxu0 0.0
      %2873 = vmatpush1.msra.mxu0 0.0
      %2874 = vmatprep.subr.mxu0 0.0
      %2875 = vmatpush1.msra.mxu0 0.0
      %2876 = vmatprep.subr.mxu0 0.0
      %2877 = vmatpush1.msra.mxu0 0.0
      %2878 = vmatprep.subr.mxu0 0.0
      %2879 = vmatpush1.msra.mxu0 0.0
      %2880 = vmatprep.subr.mxu0 0.0
      %2881 = vmatpush1.msra.mxu0 0.0
      %2882 = vmatprep.subr.mxu0 0.0
      %2883 = vmatpush1.msra.mxu0 0.0
      %2884 = vmatprep.subr.mxu0 0.0
      %2885 = vmatpush1.msra.mxu0 0.0
      %2886 = vmatprep.subr.mxu0 0.0
      %2887 = vmatpush1.msra.mxu0 0.0
      %2888 = vmatprep.subr.mxu0 0.0
      %2889 = vmatpush1.msra.mxu0 0.0
      %2890 = vmatprep.subr.mxu0 0.0
      %2891 = vmatpush1.msra.mxu0 0.0
      %2892 = vmatprep.subr.mxu0 0.0
      %2893 = vmatpush1.msra.mxu0 0.0
      %2894 = vmatprep.subr.mxu0 0.0
      %2895 = vmatpush1.msra.mxu0 0.0
      %2896 = vmatprep.subr.mxu0 0.0
      %2897 = vmatpush1.msra.mxu0 0.0
      %2898 = vmatprep.subr.mxu0 0.0
      %2899 = vmatpush1.msra.mxu0 0.0
      %2900 = vmatprep.subr.mxu0 0.0
      %2901 = vmatpush1.msra.mxu0 0.0
      %2902 = vmatprep.subr.mxu0 0.0
      %2903 = vmatpush1.msra.mxu0 0.0
      %2904 = vmatprep.mubr.f32.mxu0 0.0
      %2905 = vmatmul.mubr.f32.gmra.mrb[0].mxu0 %v2765
      %v2906 = vpop.f32.mrb[0].mxu0
      %v2907 = vadd.f32 %v2837, %v2906
      %v2908 = vpop.f32.mrb[0].mxu0
      %2909 = vdwg.mxu0
      %v2911 = vcombine.high %v183, %v183
      %v2913 = vunpack.c.l.s4 1983009808
      %v2914 = vunpack.c.0.s8 %v2913
      %v2915 = vlaneseq
      %v2916 = vshrl.u32 %v2915, 7
      %v2917 = vsub.s32 %v2914, %v2916
      %v2918 = vrot.slane %v183, %v2917
      %v2920 = vunpack.c.l.s4 1983009808
      %v2921 = vunpack.c.0.s8 %v2920
      %v2922 = vlaneseq
      %v2923 = vshrl.u32 %v2922, 7
      %v2924 = vsub.s32 %v2921, %v2923
      %v2925 = vrot.slane %v2911, %v2924
      %v2926 = vcombine.high %v2918, %v2918
      %2930 = vmatprep.subr.mxu0 0.0
      %2931 = vmatpush1.msra.mxu0 %v1294
      %2932 = vmatprep.subr.mxu0 0.0
      %2933 = vmatpush1.msra.mxu0 %v1295
      %2934 = vmatprep.subr.mxu0 0.0
      %2935 = vmatpush1.msra.mxu0 %v1296
      %2936 = vmatprep.subr.mxu0 0.0
      %2937 = vmatpush1.msra.mxu0 %v1297
      %2938 = vmatprep.subr.mxu0 0.0
      %2939 = vmatpush1.msra.mxu0 %v1298
      %2940 = vmatprep.subr.mxu0 0.0
      %2941 = vmatpush1.msra.mxu0 %v1299
      %2942 = vmatprep.subr.mxu0 0.0
      %2943 = vmatpush1.msra.mxu0 %v1300
      %2944 = vmatprep.subr.mxu0 0.0
      %2945 = vmatpush1.msra.mxu0 %v1301
      %2946 = vmatprep.subr.mxu0 0.0
      %2947 = vmatpush1.msra.mxu0 %v1302
      %2948 = vmatprep.subr.mxu0 0.0
      %2949 = vmatpush1.msra.mxu0 %v1303
      %2950 = vmatprep.subr.mxu0 0.0
      %2951 = vmatpush1.msra.mxu0 %v1304
      %2952 = vmatprep.subr.mxu0 0.0
      %2953 = vmatpush1.msra.mxu0 %v1305
      %2954 = vmatprep.subr.mxu0 0.0
      %2955 = vmatpush1.msra.mxu0 %v1306
      %2956 = vmatprep.subr.mxu0 0.0
      %2957 = vmatpush1.msra.mxu0 %v1307
      %2958 = vmatprep.subr.mxu0 0.0
      %2959 = vmatpush1.msra.mxu0 %v1308
      %2960 = vmatprep.subr.mxu0 0.0
      %2961 = vmatpush1.msra.mxu0 %v1309
      %2962 = vmatprep.subr.mxu0 0.0
      %2963 = vmatpush1.msra.mxu0 %v1310
      %2964 = vmatprep.subr.mxu0 0.0
      %2965 = vmatpush1.msra.mxu0 %v1311
      %2966 = vmatprep.subr.mxu0 0.0
      %2967 = vmatpush1.msra.mxu0 %v1312
      %2968 = vmatprep.subr.mxu0 0.0
      %2969 = vmatpush1.msra.mxu0 %v1313
      %2970 = vmatprep.subr.mxu0 0.0
      %2971 = vmatpush1.msra.mxu0 %v1314
      %2972 = vmatprep.subr.mxu0 0.0
      %2973 = vmatpush1.msra.mxu0 %v1315
      %2974 = vmatprep.subr.mxu0 0.0
      %2975 = vmatpush1.msra.mxu0 %v1316
      %2976 = vmatprep.subr.mxu0 0.0
      %2977 = vmatpush1.msra.mxu0 %v1317
      %2978 = vmatprep.subr.mxu0 0.0
      %2979 = vmatpush1.msra.mxu0 %v1318
      %2980 = vmatprep.subr.mxu0 0.0
      %2981 = vmatpush1.msra.mxu0 %v1319
      %2982 = vmatprep.subr.mxu0 0.0
      %2983 = vmatpush1.msra.mxu0 %v1320
      %2984 = vmatprep.subr.mxu0 0.0
      %2985 = vmatpush1.msra.mxu0 %v1321
      %2986 = vmatprep.subr.mxu0 0.0
      %2987 = vmatpush1.msra.mxu0 %v1322
      %2988 = vmatprep.subr.mxu0 0.0
      %2989 = vmatpush1.msra.mxu0 %v1323
      %2990 = vmatprep.subr.mxu0 0.0
      %2991 = vmatpush1.msra.mxu0 %v1324
      %2992 = vmatprep.subr.mxu0 0.0
      %2993 = vmatpush1.msra.mxu0 %v1325
      %2994 = vmatprep.mubr.f32.mxu0 %v2926
      %2995 = vmatmul.mubr.f32.gmra.mrb[0].mxu0 %v2918
      %v2996 = vpop.f32.mrb[0].mxu0
      %v2997 = vadd.f32 0.0, %v2996
      %v2998 = vpop.f32.mrb[0].mxu0
      %2999 = vdwg.mxu0
      %3000 = vmatprep.subr.mxu0 0.0
      %3001 = vmatpush1.msra.mxu0 %v1326
      %3002 = vmatprep.subr.mxu0 0.0
      %3003 = vmatpush1.msra.mxu0 %v1327
      %3004 = vmatprep.subr.mxu0 0.0
      %3005 = vmatpush1.msra.mxu0 %v1328
      %3006 = vmatprep.subr.mxu0 0.0
      %3007 = vmatpush1.msra.mxu0 %v1329
      %3008 = vmatprep.subr.mxu0 0.0
      %3009 = vmatpush1.msra.mxu0 %v1330
      %3010 = vmatprep.subr.mxu0 0.0
      %3011 = vmatpush1.msra.mxu0 %v1331
      %3012 = vmatprep.subr.mxu0 0.0
      %3013 = vmatpush1.msra.mxu0 %v1332
      %3014 = vmatprep.subr.mxu0 0.0
      %3015 = vmatpush1.msra.mxu0 %v1333
      %3016 = vmatprep.subr.mxu0 0.0
      %3017 = vmatpush1.msra.mxu0 %v1334
      %3018 = vmatprep.subr.mxu0 0.0
      %3019 = vmatpush1.msra.mxu0 %v1335
      %3020 = vmatprep.subr.mxu0 0.0
      %3021 = vmatpush1.msra.mxu0 %v1336
      %3022 = vmatprep.subr.mxu0 0.0
      %3023 = vmatpush1.msra.mxu0 %v1337
      %3024 = vmatprep.subr.mxu0 0.0
      %3025 = vmatpush1.msra.mxu0 %v1338
      %3026 = vmatprep.subr.mxu0 0.0
      %3027 = vmatpush1.msra.mxu0 %v1339
      %3028 = vmatprep.subr.mxu0 0.0
      %3029 = vmatpush1.msra.mxu0 %v1340
      %3030 = vmatprep.subr.mxu0 0.0
      %3031 = vmatpush1.msra.mxu0 %v1341
      %3032 = vmatprep.subr.mxu0 0.0
      %3033 = vmatpush1.msra.mxu0 0.0
      %3034 = vmatprep.subr.mxu0 0.0
      %3035 = vmatpush1.msra.mxu0 0.0
      %3036 = vmatprep.subr.mxu0 0.0
      %3037 = vmatpush1.msra.mxu0 0.0
      %3038 = vmatprep.subr.mxu0 0.0
      %3039 = vmatpush1.msra.mxu0 0.0
      %3040 = vmatprep.subr.mxu0 0.0
      %3041 = vmatpush1.msra.mxu0 0.0
      %3042 = vmatprep.subr.mxu0 0.0
      %3043 = vmatpush1.msra.mxu0 0.0
      %3044 = vmatprep.subr.mxu0 0.0
      %3045 = vmatpush1.msra.mxu0 0.0
      %3046 = vmatprep.subr.mxu0 0.0
      %3047 = vmatpush1.msra.mxu0 0.0
      %3048 = vmatprep.subr.mxu0 0.0
      %3049 = vmatpush1.msra.mxu0 0.0
      %3050 = vmatprep.subr.mxu0 0.0
      %3051 = vmatpush1.msra.mxu0 0.0
      %3052 = vmatprep.subr.mxu0 0.0
      %3053 = vmatpush1.msra.mxu0 0.0
      %3054 = vmatprep.subr.mxu0 0.0
      %3055 = vmatpush1.msra.mxu0 0.0
      %3056 = vmatprep.subr.mxu0 0.0
      %3057 = vmatpush1.msra.mxu0 0.0
      %3058 = vmatprep.subr.mxu0 0.0
      %3059 = vmatpush1.msra.mxu0 0.0
      %3060 = vmatprep.subr.mxu0 0.0
      %3061 = vmatpush1.msra.mxu0 0.0
      %3062 = vmatprep.subr.mxu0 0.0
      %3063 = vmatpush1.msra.mxu0 0.0
      %3064 = vmatprep.mubr.f32.mxu0 0.0
      %3065 = vmatmul.mubr.f32.gmra.mrb[0].mxu0 %v2925
      %v3066 = vpop.f32.mrb[0].mxu0
      %v3067 = vadd.f32 %v2997, %v3066
      %v3068 = vpop.f32.mrb[0].mxu0
      %3069 = vdwg.mxu0
      %v3071 = vcombine.high %v184, %v184
      %v3073 = vunpack.c.l.s4 1983009808
      %v3074 = vunpack.c.0.s8 %v3073
      %v3075 = vlaneseq
      %v3076 = vshrl.u32 %v3075, 7
      %v3077 = vsub.s32 %v3074, %v3076
      %v3078 = vrot.slane %v184, %v3077
      %v3080 = vunpack.c.l.s4 1983009808
      %v3081 = vunpack.c.0.s8 %v3080
      %v3082 = vlaneseq
      %v3083 = vshrl.u32 %v3082, 7
      %v3084 = vsub.s32 %v3081, %v3083
      %v3085 = vrot.slane %v3071, %v3084
      %v3086 = vcombine.high %v3078, %v3078
      %3090 = vmatprep.subr.mxu0 0.0
      %3091 = vmatpush1.msra.mxu0 %v1342
      %3092 = vmatprep.subr.mxu0 0.0
      %3093 = vmatpush1.msra.mxu0 %v1343
      %3094 = vmatprep.subr.mxu0 0.0
      %3095 = vmatpush1.msra.mxu0 %v1344
      %3096 = vmatprep.subr.mxu0 0.0
      %3097 = vmatpush1.msra.mxu0 %v1345
      %3098 = vmatprep.subr.mxu0 0.0
      %3099 = vmatpush1.msra.mxu0 %v1346
      %3100 = vmatprep.subr.mxu0 0.0
      %3101 = vmatpush1.msra.mxu0 %v1347
      %3102 = vmatprep.subr.mxu0 0.0
      %3103 = vmatpush1.msra.mxu0 %v1348
      %3104 = vmatprep.subr.mxu0 0.0
      %3105 = vmatpush1.msra.mxu0 %v1349
      %3106 = vmatprep.subr.mxu0 0.0
      %3107 = vmatpush1.msra.mxu0 %v1350
      %3108 = vmatprep.subr.mxu0 0.0
      %3109 = vmatpush1.msra.mxu0 %v1351
      %3110 = vmatprep.subr.mxu0 0.0
      %3111 = vmatpush1.msra.mxu0 %v1352
      %3112 = vmatprep.subr.mxu0 0.0
      %3113 = vmatpush1.msra.mxu0 %v1353
      %3114 = vmatprep.subr.mxu0 0.0
      %3115 = vmatpush1.msra.mxu0 %v1354
      %3116 = vmatprep.subr.mxu0 0.0
      %3117 = vmatpush1.msra.mxu0 %v1355
      %3118 = vmatprep.subr.mxu0 0.0
      %3119 = vmatpush1.msra.mxu0 %v1356
      %3120 = vmatprep.subr.mxu0 0.0
      %3121 = vmatpush1.msra.mxu0 %v1357
      %3122 = vmatprep.subr.mxu0 0.0
      %3123 = vmatpush1.msra.mxu0 %v1358
      %3124 = vmatprep.subr.mxu0 0.0
      %3125 = vmatpush1.msra.mxu0 %v1359
      %3126 = vmatprep.subr.mxu0 0.0
      %3127 = vmatpush1.msra.mxu0 %v1360
      %3128 = vmatprep.subr.mxu0 0.0
      %3129 = vmatpush1.msra.mxu0 %v1361
      %3130 = vmatprep.subr.mxu0 0.0
      %3131 = vmatpush1.msra.mxu0 %v1362
      %3132 = vmatprep.subr.mxu0 0.0
      %3133 = vmatpush1.msra.mxu0 %v1363
      %3134 = vmatprep.subr.mxu0 0.0
      %3135 = vmatpush1.msra.mxu0 %v1364
      %3136 = vmatprep.subr.mxu0 0.0
      %3137 = vmatpush1.msra.mxu0 %v1365
      %3138 = vmatprep.subr.mxu0 0.0
      %3139 = vmatpush1.msra.mxu0 %v1366
      %3140 = vmatprep.subr.mxu0 0.0
      %3141 = vmatpush1.msra.mxu0 %v1367
      %3142 = vmatprep.subr.mxu0 0.0
      %3143 = vmatpush1.msra.mxu0 %v1368
      %3144 = vmatprep.subr.mxu0 0.0
      %3145 = vmatpush1.msra.mxu0 %v1369
      %3146 = vmatprep.subr.mxu0 0.0
      %3147 = vmatpush1.msra.mxu0 %v1370
      %3148 = vmatprep.subr.mxu0 0.0
      %3149 = vmatpush1.msra.mxu0 %v1371
      %3150 = vmatprep.subr.mxu0 0.0
      %3151 = vmatpush1.msra.mxu0 %v1372
      %3152 = vmatprep.subr.mxu0 0.0
      %3153 = vmatpush1.msra.mxu0 %v1373
      %3154 = vmatprep.mubr.f32.mxu0 %v3086
      %3155 = vmatmul.mubr.f32.gmra.mrb[0].mxu0 %v3078
      %v3156 = vpop.f32.mrb[0].mxu0
      %v3157 = vadd.f32 0.0, %v3156
      %v3158 = vpop.f32.mrb[0].mxu0
      %3159 = vdwg.mxu0
      %3160 = vmatprep.subr.mxu0 0.0
      %3161 = vmatpush1.msra.mxu0 %v1374
      %3162 = vmatprep.subr.mxu0 0.0
      %3163 = vmatpush1.msra.mxu0 %v1375
      %3164 = vmatprep.subr.mxu0 0.0
      %3165 = vmatpush1.msra.mxu0 %v1376
      %3166 = vmatprep.subr.mxu0 0.0
      %3167 = vmatpush1.msra.mxu0 %v1377
      %3168 = vmatprep.subr.mxu0 0.0
      %3169 = vmatpush1.msra.mxu0 %v1378
      %3170 = vmatprep.subr.mxu0 0.0
      %3171 = vmatpush1.msra.mxu0 %v1379
      %3172 = vmatprep.subr.mxu0 0.0
      %3173 = vmatpush1.msra.mxu0 %v1380
      %3174 = vmatprep.subr.mxu0 0.0
      %3175 = vmatpush1.msra.mxu0 %v1381
      %3176 = vmatprep.subr.mxu0 0.0
      %3177 = vmatpush1.msra.mxu0 %v1382
      %3178 = vmatprep.subr.mxu0 0.0
      %3179 = vmatpush1.msra.mxu0 %v1383
      %3180 = vmatprep.subr.mxu0 0.0
      %3181 = vmatpush1.msra.mxu0 %v1384
      %3182 = vmatprep.subr.mxu0 0.0
      %3183 = vmatpush1.msra.mxu0 %v1385
      %3184 = vmatprep.subr.mxu0 0.0
      %3185 = vmatpush1.msra.mxu0 %v1386
      %3186 = vmatprep.subr.mxu0 0.0
      %3187 = vmatpush1.msra.mxu0 %v1387
      %3188 = vmatprep.subr.mxu0 0.0
      %3189 = vmatpush1.msra.mxu0 %v1388
      %3190 = vmatprep.subr.mxu0 0.0
      %3191 = vmatpush1.msra.mxu0 %v1389
      %3192 = vmatprep.subr.mxu0 0.0
      %3193 = vmatpush1.msra.mxu0 0.0
      %3194 = vmatprep.subr.mxu0 0.0
      %3195 = vmatpush1.msra.mxu0 0.0
      %3196 = vmatprep.subr.mxu0 0.0
      %3197 = vmatpush1.msra.mxu0 0.0
      %3198 = vmatprep.subr.mxu0 0.0
      %3199 = vmatpush1.msra.mxu0 0.0
      %3200 = vmatprep.subr.mxu0 0.0
      %3201 = vmatpush1.msra.mxu0 0.0
      %3202 = vmatprep.subr.mxu0 0.0
      %3203 = vmatpush1.msra.mxu0 0.0
      %3204 = vmatprep.subr.mxu0 0.0
      %3205 = vmatpush1.msra.mxu0 0.0
      %3206 = vmatprep.subr.mxu0 0.0
      %3207 = vmatpush1.msra.mxu0 0.0
      %3208 = vmatprep.subr.mxu0 0.0
      %3209 = vmatpush1.msra.mxu0 0.0
      %3210 = vmatprep.subr.mxu0 0.0
      %3211 = vmatpush1.msra.mxu0 0.0
      %3212 = vmatprep.subr.mxu0 0.0
      %3213 = vmatpush1.msra.mxu0 0.0
      %3214 = vmatprep.subr.mxu0 0.0
      %3215 = vmatpush1.msra.mxu0 0.0
      %3216 = vmatprep.subr.mxu0 0.0
      %3217 = vmatpush1.msra.mxu0 0.0
      %3218 = vmatprep.subr.mxu0 0.0
      %3219 = vmatpush1.msra.mxu0 0.0
      %3220 = vmatprep.subr.mxu0 0.0
      %3221 = vmatpush1.msra.mxu0 0.0
      %3222 = vmatprep.subr.mxu0 0.0
      %3223 = vmatpush1.msra.mxu0 0.0
      %3224 = vmatprep.mubr.f32.mxu0 0.0
      %3225 = vmatmul.mubr.f32.gmra.mrb[0].mxu0 %v3085
      %v3226 = vpop.f32.mrb[0].mxu0
      %v3227 = vadd.f32 %v3157, %v3226
      %v3228 = vpop.f32.mrb[0].mxu0
      %3229 = vdwg.mxu0
      %v3231 = vcombine.high %v185, %v185
      %v3233 = vunpack.c.l.s4 1983009808
      %v3234 = vunpack.c.0.s8 %v3233
      %v3235 = vlaneseq
      %v3236 = vshrl.u32 %v3235, 7
      %v3237 = vsub.s32 %v3234, %v3236
      %v3238 = vrot.slane %v185, %v3237
      %v3240 = vunpack.c.l.s4 1983009808
      %v3241 = vunpack.c.0.s8 %v3240
      %v3242 = vlaneseq
      %v3243 = vshrl.u32 %v3242, 7
      %v3244 = vsub.s32 %v3241, %v3243
      %v3245 = vrot.slane %v3231, %v3244
      %v3246 = vcombine.high %v3238, %v3238
      %3250 = vmatprep.subr.mxu0 0.0
      %3251 = vmatpush1.msra.mxu0 %v1390
      %3252 = vmatprep.subr.mxu0 0.0
      %3253 = vmatpush1.msra.mxu0 %v1391
      %3254 = vmatprep.subr.mxu0 0.0
      %3255 = vmatpush1.msra.mxu0 %v1392
      %3256 = vmatprep.subr.mxu0 0.0
      %3257 = vmatpush1.msra.mxu0 %v1393
      %3258 = vmatprep.subr.mxu0 0.0
      %3259 = vmatpush1.msra.mxu0 %v1394
      %3260 = vmatprep.subr.mxu0 0.0
      %3261 = vmatpush1.msra.mxu0 %v1395
      %3262 = vmatprep.subr.mxu0 0.0
      %3263 = vmatpush1.msra.mxu0 %v1396
      %3264 = vmatprep.subr.mxu0 0.0
      %3265 = vmatpush1.msra.mxu0 %v1397
      %3266 = vmatprep.subr.mxu0 0.0
      %3267 = vmatpush1.msra.mxu0 %v1398
      %3268 = vmatprep.subr.mxu0 0.0
      %3269 = vmatpush1.msra.mxu0 %v1399
      %3270 = vmatprep.subr.mxu0 0.0
      %3271 = vmatpush1.msra.mxu0 %v1400
      %3272 = vmatprep.subr.mxu0 0.0
      %3273 = vmatpush1.msra.mxu0 %v1401
      %3274 = vmatprep.subr.mxu0 0.0
      %3275 = vmatpush1.msra.mxu0 %v1402
      %3276 = vmatprep.subr.mxu0 0.0
      %3277 = vmatpush1.msra.mxu0 %v1403
      %3278 = vmatprep.subr.mxu0 0.0
      %3279 = vmatpush1.msra.mxu0 %v1404
      %3280 = vmatprep.subr.mxu0 0.0
      %3281 = vmatpush1.msra.mxu0 %v1405
      %3282 = vmatprep.subr.mxu0 0.0
      %3283 = vmatpush1.msra.mxu0 %v1406
      %3284 = vmatprep.subr.mxu0 0.0
      %3285 = vmatpush1.msra.mxu0 %v1407
      %3286 = vmatprep.subr.mxu0 0.0
      %3287 = vmatpush1.msra.mxu0 %v1408
      %3288 = vmatprep.subr.mxu0 0.0
      %3289 = vmatpush1.msra.mxu0 %v1409
      %3290 = vmatprep.subr.mxu0 0.0
      %3291 = vmatpush1.msra.mxu0 %v1410
      %3292 = vmatprep.subr.mxu0 0.0
      %3293 = vmatpush1.msra.mxu0 %v1411
      %3294 = vmatprep.subr.mxu0 0.0
      %3295 = vmatpush1.msra.mxu0 %v1412
      %3296 = vmatprep.subr.mxu0 0.0
      %3297 = vmatpush1.msra.mxu0 %v1413
      %3298 = vmatprep.subr.mxu0 0.0
      %3299 = vmatpush1.msra.mxu0 %v1414
      %3300 = vmatprep.subr.mxu0 0.0
      %3301 = vmatpush1.msra.mxu0 %v1415
      %3302 = vmatprep.subr.mxu0 0.0
      %3303 = vmatpush1.msra.mxu0 %v1416
      %3304 = vmatprep.subr.mxu0 0.0
      %3305 = vmatpush1.msra.mxu0 %v1417
      %3306 = vmatprep.subr.mxu0 0.0
      %3307 = vmatpush1.msra.mxu0 %v1418
      %3308 = vmatprep.subr.mxu0 0.0
      %3309 = vmatpush1.msra.mxu0 %v1419
      %3310 = vmatprep.subr.mxu0 0.0
      %3311 = vmatpush1.msra.mxu0 %v1420
      %3312 = vmatprep.subr.mxu0 0.0
      %3313 = vmatpush1.msra.mxu0 %v1421
      %3314 = vmatprep.mubr.f32.mxu0 %v3246
      %3315 = vmatmul.mubr.f32.gmra.mrb[0].mxu0 %v3238
      %v3316 = vpop.f32.mrb[0].mxu0
      %v3317 = vadd.f32 0.0, %v3316
      %v3318 = vpop.f32.mrb[0].mxu0
      %3319 = vdwg.mxu0
      %3320 = vmatprep.subr.mxu0 0.0
      %3321 = vmatpush1.msra.mxu0 %v1422
      %3322 = vmatprep.subr.mxu0 0.0
      %3323 = vmatpush1.msra.mxu0 %v1423
      %3324 = vmatprep.subr.mxu0 0.0
      %3325 = vmatpush1.msra.mxu0 %v1424
      %3326 = vmatprep.subr.mxu0 0.0
      %3327 = vmatpush1.msra.mxu0 %v1425
      %3328 = vmatprep.subr.mxu0 0.0
      %3329 = vmatpush1.msra.mxu0 %v1426
      %3330 = vmatprep.subr.mxu0 0.0
      %3331 = vmatpush1.msra.mxu0 %v1427
      %3332 = vmatprep.subr.mxu0 0.0
      %3333 = vmatpush1.msra.mxu0 %v1428
      %3334 = vmatprep.subr.mxu0 0.0
      %3335 = vmatpush1.msra.mxu0 %v1429
      %3336 = vmatprep.subr.mxu0 0.0
      %3337 = vmatpush1.msra.mxu0 %v1430
      %3338 = vmatprep.subr.mxu0 0.0
      %3339 = vmatpush1.msra.mxu0 %v1431
      %3340 = vmatprep.subr.mxu0 0.0
      %3341 = vmatpush1.msra.mxu0 %v1432
      %3342 = vmatprep.subr.mxu0 0.0
      %3343 = vmatpush1.msra.mxu0 %v1433
      %3344 = vmatprep.subr.mxu0 0.0
      %3345 = vmatpush1.msra.mxu0 %v1434
      %3346 = vmatprep.subr.mxu0 0.0
      %3347 = vmatpush1.msra.mxu0 %v1435
      %3348 = vmatprep.subr.mxu0 0.0
      %3349 = vmatpush1.msra.mxu0 %v1436
      %3350 = vmatprep.subr.mxu0 0.0
      %3351 = vmatpush1.msra.mxu0 %v1437
      %3352 = vmatprep.subr.mxu0 0.0
      %3353 = vmatpush1.msra.mxu0 0.0
      %3354 = vmatprep.subr.mxu0 0.0
      %3355 = vmatpush1.msra.mxu0 0.0
      %3356 = vmatprep.subr.mxu0 0.0
      %3357 = vmatpush1.msra.mxu0 0.0
      %3358 = vmatprep.subr.mxu0 0.0
      %3359 = vmatpush1.msra.mxu0 0.0
      %3360 = vmatprep.subr.mxu0 0.0
      %3361 = vmatpush1.msra.mxu0 0.0
      %3362 = vmatprep.subr.mxu0 0.0
      %3363 = vmatpush1.msra.mxu0 0.0
      %3364 = vmatprep.subr.mxu0 0.0
      %3365 = vmatpush1.msra.mxu0 0.0
      %3366 = vmatprep.subr.mxu0 0.0
      %3367 = vmatpush1.msra.mxu0 0.0
      %3368 = vmatprep.subr.mxu0 0.0
      %3369 = vmatpush1.msra.mxu0 0.0
      %3370 = vmatprep.subr.mxu0 0.0
      %3371 = vmatpush1.msra.mxu0 0.0
      %3372 = vmatprep.subr.mxu0 0.0
      %3373 = vmatpush1.msra.mxu0 0.0
      %3374 = vmatprep.subr.mxu0 0.0
      %3375 = vmatpush1.msra.mxu0 0.0
      %3376 = vmatprep.subr.mxu0 0.0
      %3377 = vmatpush1.msra.mxu0 0.0
      %3378 = vmatprep.subr.mxu0 0.0
      %3379 = vmatpush1.msra.mxu0 0.0
      %3380 = vmatprep.subr.mxu0 0.0
      %3381 = vmatpush1.msra.mxu0 0.0
      %3382 = vmatprep.subr.mxu0 0.0
      %3383 = vmatpush1.msra.mxu0 0.0
      %3384 = vmatprep.mubr.f32.mxu0 0.0
      %3385 = vmatmul.mubr.f32.gmra.mrb[0].mxu0 %v3245
      %v3386 = vpop.f32.mrb[0].mxu0
      %v3387 = vadd.f32 %v3317, %v3386
      %v3388 = vpop.f32.mrb[0].mxu0
      %3389 = vdwg.mxu0
      %v3391 = vcombine.high %v186, %v186
      %v3393 = vunpack.c.l.s4 1983009808
      %v3394 = vunpack.c.0.s8 %v3393
      %v3395 = vlaneseq
      %v3396 = vshrl.u32 %v3395, 7
      %v3397 = vsub.s32 %v3394, %v3396
      %v3398 = vrot.slane %v186, %v3397
      %v3400 = vunpack.c.l.s4 1983009808
      %v3401 = vunpack.c.0.s8 %v3400
      %v3402 = vlaneseq
      %v3403 = vshrl.u32 %v3402, 7
      %v3404 = vsub.s32 %v3401, %v3403
      %v3405 = vrot.slane %v3391, %v3404
      %v3406 = vcombine.high %v3398, %v3398
      %3410 = vmatprep.subr.mxu0 0.0
      %3411 = vmatpush1.msra.mxu0 %v1438
      %3412 = vmatprep.subr.mxu0 0.0
      %3413 = vmatpush1.msra.mxu0 %v1439
      %3414 = vmatprep.subr.mxu0 0.0
      %3415 = vmatpush1.msra.mxu0 %v1440
      %3416 = vmatprep.subr.mxu0 0.0
      %3417 = vmatpush1.msra.mxu0 %v1441
      %3418 = vmatprep.subr.mxu0 0.0
      %3419 = vmatpush1.msra.mxu0 %v1442
      %3420 = vmatprep.subr.mxu0 0.0
      %3421 = vmatpush1.msra.mxu0 %v1443
      %3422 = vmatprep.subr.mxu0 0.0
      %3423 = vmatpush1.msra.mxu0 %v1444
      %3424 = vmatprep.subr.mxu0 0.0
      %3425 = vmatpush1.msra.mxu0 %v1445
      %3426 = vmatprep.subr.mxu0 0.0
      %3427 = vmatpush1.msra.mxu0 %v1446
      %3428 = vmatprep.subr.mxu0 0.0
      %3429 = vmatpush1.msra.mxu0 %v1447
      %3430 = vmatprep.subr.mxu0 0.0
      %3431 = vmatpush1.msra.mxu0 %v1448
      %3432 = vmatprep.subr.mxu0 0.0
      %3433 = vmatpush1.msra.mxu0 %v1449
      %3434 = vmatprep.subr.mxu0 0.0
      %3435 = vmatpush1.msra.mxu0 %v1450
      %3436 = vmatprep.subr.mxu0 0.0
      %3437 = vmatpush1.msra.mxu0 %v1451
      %3438 = vmatprep.subr.mxu0 0.0
      %3439 = vmatpush1.msra.mxu0 %v1452
      %3440 = vmatprep.subr.mxu0 0.0
      %3441 = vmatpush1.msra.mxu0 %v1453
      %3442 = vmatprep.subr.mxu0 0.0
      %3443 = vmatpush1.msra.mxu0 %v1454
      %3444 = vmatprep.subr.mxu0 0.0
      %3445 = vmatpush1.msra.mxu0 %v1455
      %3446 = vmatprep.subr.mxu0 0.0
      %3447 = vmatpush1.msra.mxu0 %v1456
      %3448 = vmatprep.subr.mxu0 0.0
      %3449 = vmatpush1.msra.mxu0 %v1457
      %3450 = vmatprep.subr.mxu0 0.0
      %3451 = vmatpush1.msra.mxu0 %v1458
      %3452 = vmatprep.subr.mxu0 0.0
      %3453 = vmatpush1.msra.mxu0 %v1459
      %3454 = vmatprep.subr.mxu0 0.0
      %3455 = vmatpush1.msra.mxu0 %v1460
      %3456 = vmatprep.subr.mxu0 0.0
      %3457 = vmatpush1.msra.mxu0 %v1461
      %3458 = vmatprep.subr.mxu0 0.0
      %3459 = vmatpush1.msra.mxu0 %v1462
      %3460 = vmatprep.subr.mxu0 0.0
      %3461 = vmatpush1.msra.mxu0 %v1463
      %3462 = vmatprep.subr.mxu0 0.0
      %3463 = vmatpush1.msra.mxu0 %v1464
      %3464 = vmatprep.subr.mxu0 0.0
      %3465 = vmatpush1.msra.mxu0 %v1465
      %3466 = vmatprep.subr.mxu0 0.0
      %3467 = vmatpush1.msra.mxu0 %v1466
      %3468 = vmatprep.subr.mxu0 0.0
      %3469 = vmatpush1.msra.mxu0 %v1467
      %3470 = vmatprep.subr.mxu0 0.0
      %3471 = vmatpush1.msra.mxu0 %v1468
      %3472 = vmatprep.subr.mxu0 0.0
      %3473 = vmatpush1.msra.mxu0 %v1469
      %3474 = vmatprep.mubr.f32.mxu0 %v3406
      %3475 = vmatmul.mubr.f32.gmra.mrb[0].mxu0 %v3398
      %v3476 = vpop.f32.mrb[0].mxu0
      %v3477 = vadd.f32 0.0, %v3476
      %v3478 = vpop.f32.mrb[0].mxu0
      %3479 = vdwg.mxu0
      %3480 = vmatprep.subr.mxu0 0.0
      %3481 = vmatpush1.msra.mxu0 %v1470
      %3482 = vmatprep.subr.mxu0 0.0
      %3483 = vmatpush1.msra.mxu0 %v1471
      %3484 = vmatprep.subr.mxu0 0.0
      %3485 = vmatpush1.msra.mxu0 %v1472
      %3486 = vmatprep.subr.mxu0 0.0
      %3487 = vmatpush1.msra.mxu0 %v1473
      %3488 = vmatprep.subr.mxu0 0.0
      %3489 = vmatpush1.msra.mxu0 %v1474
      %3490 = vmatprep.subr.mxu0 0.0
      %3491 = vmatpush1.msra.mxu0 %v1475
      %3492 = vmatprep.subr.mxu0 0.0
      %3493 = vmatpush1.msra.mxu0 %v1476
      %3494 = vmatprep.subr.mxu0 0.0
      %3495 = vmatpush1.msra.mxu0 %v1477
      %3496 = vmatprep.subr.mxu0 0.0
      %3497 = vmatpush1.msra.mxu0 %v1478
      %3498 = vmatprep.subr.mxu0 0.0
      %3499 = vmatpush1.msra.mxu0 %v1479
      %3500 = vmatprep.subr.mxu0 0.0
      %3501 = vmatpush1.msra.mxu0 %v1480
      %3502 = vmatprep.subr.mxu0 0.0
      %3503 = vmatpush1.msra.mxu0 %v1481
      %3504 = vmatprep.subr.mxu0 0.0
      %3505 = vmatpush1.msra.mxu0 %v1482
      %3506 = vmatprep.subr.mxu0 0.0
      %3507 = vmatpush1.msra.mxu0 %v1483
      %3508 = vmatprep.subr.mxu0 0.0
      %3509 = vmatpush1.msra.mxu0 %v1484
      %3510 = vmatprep.subr.mxu0 0.0
      %3511 = vmatpush1.msra.mxu0 %v1485
      %3512 = vmatprep.subr.mxu0 0.0
      %3513 = vmatpush1.msra.mxu0 0.0
      %3514 = vmatprep.subr.mxu0 0.0
      %3515 = vmatpush1.msra.mxu0 0.0
      %3516 = vmatprep.subr.mxu0 0.0
      %3517 = vmatpush1.msra.mxu0 0.0
      %3518 = vmatprep.subr.mxu0 0.0
      %3519 = vmatpush1.msra.mxu0 0.0
      %3520 = vmatprep.subr.mxu0 0.0
      %3521 = vmatpush1.msra.mxu0 0.0
      %3522 = vmatprep.subr.mxu0 0.0
      %3523 = vmatpush1.msra.mxu0 0.0
      %3524 = vmatprep.subr.mxu0 0.0
      %3525 = vmatpush1.msra.mxu0 0.0
      %3526 = vmatprep.subr.mxu0 0.0
      %3527 = vmatpush1.msra.mxu0 0.0
      %3528 = vmatprep.subr.mxu0 0.0
      %3529 = vmatpush1.msra.mxu0 0.0
      %3530 = vmatprep.subr.mxu0 0.0
      %3531 = vmatpush1.msra.mxu0 0.0
      %3532 = vmatprep.subr.mxu0 0.0
      %3533 = vmatpush1.msra.mxu0 0.0
      %3534 = vmatprep.subr.mxu0 0.0
      %3535 = vmatpush1.msra.mxu0 0.0
      %3536 = vmatprep.subr.mxu0 0.0
      %3537 = vmatpush1.msra.mxu0 0.0
      %3538 = vmatprep.subr.mxu0 0.0
      %3539 = vmatpush1.msra.mxu0 0.0
      %3540 = vmatprep.subr.mxu0 0.0
      %3541 = vmatpush1.msra.mxu0 0.0
      %3542 = vmatprep.subr.mxu0 0.0
      %3543 = vmatpush1.msra.mxu0 0.0
      %3544 = vmatprep.mubr.f32.mxu0 0.0
      %3545 = vmatmul.mubr.f32.gmra.mrb[0].mxu0 %v3405
      %v3546 = vpop.f32.mrb[0].mxu0
      %v3547 = vadd.f32 %v3477, %v3546
      %v3548 = vpop.f32.mrb[0].mxu0
      %3549 = vdwg.mxu0
      %v3551 = vcombine.high %v187, %v187
      %v3553 = vunpack.c.l.s4 1983009808
      %v3554 = vunpack.c.0.s8 %v3553
      %v3555 = vlaneseq
      %v3556 = vshrl.u32 %v3555, 7
      %v3557 = vsub.s32 %v3554, %v3556
      %v3558 = vrot.slane %v187, %v3557
      %v3560 = vunpack.c.l.s4 1983009808
      %v3561 = vunpack.c.0.s8 %v3560
      %v3562 = vlaneseq
      %v3563 = vshrl.u32 %v3562, 7
      %v3564 = vsub.s32 %v3561, %v3563
      %v3565 = vrot.slane %v3551, %v3564
      %v3566 = vcombine.high %v3558, %v3558
      %3570 = vmatprep.subr.mxu0 0.0
      %3571 = vmatpush1.msra.mxu0 %v1486
      %3572 = vmatprep.subr.mxu0 0.0
      %3573 = vmatpush1.msra.mxu0 %v1487
      %3574 = vmatprep.subr.mxu0 0.0
      %3575 = vmatpush1.msra.mxu0 %v1488
      %3576 = vmatprep.subr.mxu0 0.0
      %3577 = vmatpush1.msra.mxu0 %v1489
      %3578 = vmatprep.subr.mxu0 0.0
      %3579 = vmatpush1.msra.mxu0 %v1490
      %3580 = vmatprep.subr.mxu0 0.0
      %3581 = vmatpush1.msra.mxu0 %v1491
      %3582 = vmatprep.subr.mxu0 0.0
      %3583 = vmatpush1.msra.mxu0 %v1492
      %3584 = vmatprep.subr.mxu0 0.0
      %3585 = vmatpush1.msra.mxu0 %v1493
      %3586 = vmatprep.subr.mxu0 0.0
      %3587 = vmatpush1.msra.mxu0 %v1494
      %3588 = vmatprep.subr.mxu0 0.0
      %3589 = vmatpush1.msra.mxu0 %v1495
      %3590 = vmatprep.subr.mxu0 0.0
      %3591 = vmatpush1.msra.mxu0 %v1496
      %3592 = vmatprep.subr.mxu0 0.0
      %3593 = vmatpush1.msra.mxu0 %v1497
      %3594 = vmatprep.subr.mxu0 0.0
      %3595 = vmatpush1.msra.mxu0 %v1498
      %3596 = vmatprep.subr.mxu0 0.0
      %3597 = vmatpush1.msra.mxu0 %v1499
      %3598 = vmatprep.subr.mxu0 0.0
      %3599 = vmatpush1.msra.mxu0 %v1500
      %3600 = vmatprep.subr.mxu0 0.0
      %3601 = vmatpush1.msra.mxu0 %v1501
      %3602 = vmatprep.subr.mxu0 0.0
      %3603 = vmatpush1.msra.mxu0 %v1502
      %3604 = vmatprep.subr.mxu0 0.0
      %3605 = vmatpush1.msra.mxu0 %v1503
      %3606 = vmatprep.subr.mxu0 0.0
      %3607 = vmatpush1.msra.mxu0 %v1504
      %3608 = vmatprep.subr.mxu0 0.0
      %3609 = vmatpush1.msra.mxu0 %v1505
      %3610 = vmatprep.subr.mxu0 0.0
      %3611 = vmatpush1.msra.mxu0 %v1506
      %3612 = vmatprep.subr.mxu0 0.0
      %3613 = vmatpush1.msra.mxu0 %v1507
      %3614 = vmatprep.subr.mxu0 0.0
      %3615 = vmatpush1.msra.mxu0 %v1508
      %3616 = vmatprep.subr.mxu0 0.0
      %3617 = vmatpush1.msra.mxu0 %v1509
      %3618 = vmatprep.subr.mxu0 0.0
      %3619 = vmatpush1.msra.mxu0 %v1510
      %3620 = vmatprep.subr.mxu0 0.0
      %3621 = vmatpush1.msra.mxu0 %v1511
      %3622 = vmatprep.subr.mxu0 0.0
      %3623 = vmatpush1.msra.mxu0 %v1512
      %3624 = vmatprep.subr.mxu0 0.0
      %3625 = vmatpush1.msra.mxu0 %v1513
      %3626 = vmatprep.subr.mxu0 0.0
      %3627 = vmatpush1.msra.mxu0 %v1514
      %3628 = vmatprep.subr.mxu0 0.0
      %3629 = vmatpush1.msra.mxu0 %v1515
      %3630 = vmatprep.subr.mxu0 0.0
      %3631 = vmatpush1.msra.mxu0 %v1516
      %3632 = vmatprep.subr.mxu0 0.0
      %3633 = vmatpush1.msra.mxu0 %v1517
      %3634 = vmatprep.mubr.f32.mxu0 %v3566
      %3635 = vmatmul.mubr.f32.gmra.mrb[0].mxu0 %v3558
      %v3636 = vpop.f32.mrb[0].mxu0
      %v3637 = vadd.f32 0.0, %v3636
      %v3638 = vpop.f32.mrb[0].mxu0
      %3639 = vdwg.mxu0
      %3640 = vmatprep.subr.mxu0 0.0
      %3641 = vmatpush1.msra.mxu0 %v1518
      %3642 = vmatprep.subr.mxu0 0.0
      %3643 = vmatpush1.msra.mxu0 %v1519
      %3644 = vmatprep.subr.mxu0 0.0
      %3645 = vmatpush1.msra.mxu0 %v1520
      %3646 = vmatprep.subr.mxu0 0.0
      %3647 = vmatpush1.msra.mxu0 %v1521
      %3648 = vmatprep.subr.mxu0 0.0
      %3649 = vmatpush1.msra.mxu0 %v1522
      %3650 = vmatprep.subr.mxu0 0.0
      %3651 = vmatpush1.msra.mxu0 %v1523
      %3652 = vmatprep.subr.mxu0 0.0
      %3653 = vmatpush1.msra.mxu0 %v1524
      %3654 = vmatprep.subr.mxu0 0.0
      %3655 = vmatpush1.msra.mxu0 %v1525
      %3656 = vmatprep.subr.mxu0 0.0
      %3657 = vmatpush1.msra.mxu0 %v1526
      %3658 = vmatprep.subr.mxu0 0.0
      %3659 = vmatpush1.msra.mxu0 %v1527
      %3660 = vmatprep.subr.mxu0 0.0
      %3661 = vmatpush1.msra.mxu0 %v1528
      %3662 = vmatprep.subr.mxu0 0.0
      %3663 = vmatpush1.msra.mxu0 %v1529
      %3664 = vmatprep.subr.mxu0 0.0
      %3665 = vmatpush1.msra.mxu0 %v1530
      %3666 = vmatprep.subr.mxu0 0.0
      %3667 = vmatpush1.msra.mxu0 %v1531
      %3668 = vmatprep.subr.mxu0 0.0
      %3669 = vmatpush1.msra.mxu0 %v1532
      %3670 = vmatprep.subr.mxu0 0.0
      %3671 = vmatpush1.msra.mxu0 %v1533
      %3672 = vmatprep.subr.mxu0 0.0
      %3673 = vmatpush1.msra.mxu0 0.0
      %3674 = vmatprep.subr.mxu0 0.0
      %3675 = vmatpush1.msra.mxu0 0.0
      %3676 = vmatprep.subr.mxu0 0.0
      %3677 = vmatpush1.msra.mxu0 0.0
      %3678 = vmatprep.subr.mxu0 0.0
      %3679 = vmatpush1.msra.mxu0 0.0
      %3680 = vmatprep.subr.mxu0 0.0
      %3681 = vmatpush1.msra.mxu0 0.0
      %3682 = vmatprep.subr.mxu0 0.0
      %3683 = vmatpush1.msra.mxu0 0.0
      %3684 = vmatprep.subr.mxu0 0.0
      %3685 = vmatpush1.msra.mxu0 0.0
      %3686 = vmatprep.subr.mxu0 0.0
      %3687 = vmatpush1.msra.mxu0 0.0
      %3688 = vmatprep.subr.mxu0 0.0
      %3689 = vmatpush1.msra.mxu0 0.0
      %3690 = vmatprep.subr.mxu0 0.0
      %3691 = vmatpush1.msra.mxu0 0.0
      %3692 = vmatprep.subr.mxu0 0.0
      %3693 = vmatpush1.msra.mxu0 0.0
      %3694 = vmatprep.subr.mxu0 0.0
      %3695 = vmatpush1.msra.mxu0 0.0
      %3696 = vmatprep.subr.mxu0 0.0
      %3697 = vmatpush1.msra.mxu0 0.0
      %3698 = vmatprep.subr.mxu0 0.0
      %3699 = vmatpush1.msra.mxu0 0.0
      %3700 = vmatprep.subr.mxu0 0.0
      %3701 = vmatpush1.msra.mxu0 0.0
      %3702 = vmatprep.subr.mxu0 0.0
      %3703 = vmatpush1.msra.mxu0 0.0
      %3704 = vmatprep.mubr.f32.mxu0 0.0
      %3705 = vmatmul.mubr.f32.gmra.mrb[0].mxu0 %v3565
      %v3706 = vpop.f32.mrb[0].mxu0
      %v3707 = vadd.f32 %v3637, %v3706
      %v3708 = vpop.f32.mrb[0].mxu0
      %3709 = vdwg.mxu0
      %v3711 = vcombine.high %v188, %v188
      %v3713 = vunpack.c.l.s4 1983009808
      %v3714 = vunpack.c.0.s8 %v3713
      %v3715 = vlaneseq
      %v3716 = vshrl.u32 %v3715, 7
      %v3717 = vsub.s32 %v3714, %v3716
      %v3718 = vrot.slane %v188, %v3717
      %v3720 = vunpack.c.l.s4 1983009808
      %v3721 = vunpack.c.0.s8 %v3720
      %v3722 = vlaneseq
      %v3723 = vshrl.u32 %v3722, 7
      %v3724 = vsub.s32 %v3721, %v3723
      %v3725 = vrot.slane %v3711, %v3724
      %v3726 = vcombine.high %v3718, %v3718
      %3730 = vmatprep.subr.mxu0 0.0
      %3731 = vmatpush1.msra.mxu0 %v1534
      %3732 = vmatprep.subr.mxu0 0.0
      %3733 = vmatpush1.msra.mxu0 %v1535
      %3734 = vmatprep.subr.mxu0 0.0
      %3735 = vmatpush1.msra.mxu0 %v1536
      %3736 = vmatprep.subr.mxu0 0.0
      %3737 = vmatpush1.msra.mxu0 %v1537
      %3738 = vmatprep.subr.mxu0 0.0
      %3739 = vmatpush1.msra.mxu0 %v1538
      %3740 = vmatprep.subr.mxu0 0.0
      %3741 = vmatpush1.msra.mxu0 %v1539
      %3742 = vmatprep.subr.mxu0 0.0
      %3743 = vmatpush1.msra.mxu0 %v1540
      %3744 = vmatprep.subr.mxu0 0.0
      %3745 = vmatpush1.msra.mxu0 %v1541
      %3746 = vmatprep.subr.mxu0 0.0
      %3747 = vmatpush1.msra.mxu0 %v1542
      %3748 = vmatprep.subr.mxu0 0.0
      %3749 = vmatpush1.msra.mxu0 %v1543
      %3750 = vmatprep.subr.mxu0 0.0
      %3751 = vmatpush1.msra.mxu0 %v1544
      %3752 = vmatprep.subr.mxu0 0.0
      %3753 = vmatpush1.msra.mxu0 %v1545
      %3754 = vmatprep.subr.mxu0 0.0
      %3755 = vmatpush1.msra.mxu0 %v1546
      %3756 = vmatprep.subr.mxu0 0.0
      %3757 = vmatpush1.msra.mxu0 %v1547
      %3758 = vmatprep.subr.mxu0 0.0
      %3759 = vmatpush1.msra.mxu0 %v1548
      %3760 = vmatprep.subr.mxu0 0.0
      %3761 = vmatpush1.msra.mxu0 %v1549
      %3762 = vmatprep.subr.mxu0 0.0
      %3763 = vmatpush1.msra.mxu0 %v1550
      %3764 = vmatprep.subr.mxu0 0.0
      %3765 = vmatpush1.msra.mxu0 %v1551
      %3766 = vmatprep.subr.mxu0 0.0
      %3767 = vmatpush1.msra.mxu0 %v1552
      %3768 = vmatprep.subr.mxu0 0.0
      %3769 = vmatpush1.msra.mxu0 %v1553
      %3770 = vmatprep.subr.mxu0 0.0
      %3771 = vmatpush1.msra.mxu0 %v1554
      %3772 = vmatprep.subr.mxu0 0.0
      %3773 = vmatpush1.msra.mxu0 %v1555
      %3774 = vmatprep.subr.mxu0 0.0
      %3775 = vmatpush1.msra.mxu0 %v1556
      %3776 = vmatprep.subr.mxu0 0.0
      %3777 = vmatpush1.msra.mxu0 %v1557
      %3778 = vmatprep.subr.mxu0 0.0
      %3779 = vmatpush1.msra.mxu0 %v1558
      %3780 = vmatprep.subr.mxu0 0.0
      %3781 = vmatpush1.msra.mxu0 %v1559
      %3782 = vmatprep.subr.mxu0 0.0
      %3783 = vmatpush1.msra.mxu0 %v1560
      %3784 = vmatprep.subr.mxu0 0.0
      %3785 = vmatpush1.msra.mxu0 %v1561
      %3786 = vmatprep.subr.mxu0 0.0
      %3787 = vmatpush1.msra.mxu0 %v1562
      %3788 = vmatprep.subr.mxu0 0.0
      %3789 = vmatpush1.msra.mxu0 %v1563
      %3790 = vmatprep.subr.mxu0 0.0
      %3791 = vmatpush1.msra.mxu0 %v1564
      %3792 = vmatprep.subr.mxu0 0.0
      %3793 = vmatpush1.msra.mxu0 %v1565
      %3794 = vmatprep.mubr.f32.mxu0 %v3726
      %3795 = vmatmul.mubr.f32.gmra.mrb[0].mxu0 %v3718
      %v3796 = vpop.f32.mrb[0].mxu0
      %v3797 = vadd.f32 0.0, %v3796
      %v3798 = vpop.f32.mrb[0].mxu0
      %3799 = vdwg.mxu0
      %3800 = vmatprep.subr.mxu0 0.0
      %3801 = vmatpush1.msra.mxu0 %v1566
      %3802 = vmatprep.subr.mxu0 0.0
      %3803 = vmatpush1.msra.mxu0 %v1567
      %3804 = vmatprep.subr.mxu0 0.0
      %3805 = vmatpush1.msra.mxu0 %v1568
      %3806 = vmatprep.subr.mxu0 0.0
      %3807 = vmatpush1.msra.mxu0 %v1569
      %3808 = vmatprep.subr.mxu0 0.0
      %3809 = vmatpush1.msra.mxu0 %v1570
      %3810 = vmatprep.subr.mxu0 0.0
      %3811 = vmatpush1.msra.mxu0 %v1571
      %3812 = vmatprep.subr.mxu0 0.0
      %3813 = vmatpush1.msra.mxu0 %v1572
      %3814 = vmatprep.subr.mxu0 0.0
      %3815 = vmatpush1.msra.mxu0 %v1573
      %3816 = vmatprep.subr.mxu0 0.0
      %3817 = vmatpush1.msra.mxu0 %v1574
      %3818 = vmatprep.subr.mxu0 0.0
      %3819 = vmatpush1.msra.mxu0 %v1575
      %3820 = vmatprep.subr.mxu0 0.0
      %3821 = vmatpush1.msra.mxu0 %v1576
      %3822 = vmatprep.subr.mxu0 0.0
      %3823 = vmatpush1.msra.mxu0 %v1577
      %3824 = vmatprep.subr.mxu0 0.0
      %3825 = vmatpush1.msra.mxu0 %v1578
      %3826 = vmatprep.subr.mxu0 0.0
      %3827 = vmatpush1.msra.mxu0 %v1579
      %3828 = vmatprep.subr.mxu0 0.0
      %3829 = vmatpush1.msra.mxu0 %v1580
      %3830 = vmatprep.subr.mxu0 0.0
      %3831 = vmatpush1.msra.mxu0 %v1581
      %3832 = vmatprep.subr.mxu0 0.0
      %3833 = vmatpush1.msra.mxu0 0.0
      %3834 = vmatprep.subr.mxu0 0.0
      %3835 = vmatpush1.msra.mxu0 0.0
      %3836 = vmatprep.subr.mxu0 0.0
      %3837 = vmatpush1.msra.mxu0 0.0
      %3838 = vmatprep.subr.mxu0 0.0
      %3839 = vmatpush1.msra.mxu0 0.0
      %3840 = vmatprep.subr.mxu0 0.0
      %3841 = vmatpush1.msra.mxu0 0.0
      %3842 = vmatprep.subr.mxu0 0.0
      %3843 = vmatpush1.msra.mxu0 0.0
      %3844 = vmatprep.subr.mxu0 0.0
      %3845 = vmatpush1.msra.mxu0 0.0
      %3846 = vmatprep.subr.mxu0 0.0
      %3847 = vmatpush1.msra.mxu0 0.0
      %3848 = vmatprep.subr.mxu0 0.0
      %3849 = vmatpush1.msra.mxu0 0.0
      %3850 = vmatprep.subr.mxu0 0.0
      %3851 = vmatpush1.msra.mxu0 0.0
      %3852 = vmatprep.subr.mxu0 0.0
      %3853 = vmatpush1.msra.mxu0 0.0
      %3854 = vmatprep.subr.mxu0 0.0
      %3855 = vmatpush1.msra.mxu0 0.0
      %3856 = vmatprep.subr.mxu0 0.0
      %3857 = vmatpush1.msra.mxu0 0.0
      %3858 = vmatprep.subr.mxu0 0.0
      %3859 = vmatpush1.msra.mxu0 0.0
      %3860 = vmatprep.subr.mxu0 0.0
      %3861 = vmatpush1.msra.mxu0 0.0
      %3862 = vmatprep.subr.mxu0 0.0
      %3863 = vmatpush1.msra.mxu0 0.0
      %3864 = vmatprep.mubr.f32.mxu0 0.0
      %3865 = vmatmul.mubr.f32.gmra.mrb[0].mxu0 %v3725
      %v3866 = vpop.f32.mrb[0].mxu0
      %v3867 = vadd.f32 %v3797, %v3866
      %v3868 = vpop.f32.mrb[0].mxu0
      %3869 = vdwg.mxu0
      %v3871 = vcombine.high %v189, %v189
      %v3873 = vunpack.c.l.s4 1983009808
      %v3874 = vunpack.c.0.s8 %v3873
      %v3875 = vlaneseq
      %v3876 = vshrl.u32 %v3875, 7
      %v3877 = vsub.s32 %v3874, %v3876
      %v3878 = vrot.slane %v189, %v3877
      %v3880 = vunpack.c.l.s4 1983009808
      %v3881 = vunpack.c.0.s8 %v3880
      %v3882 = vlaneseq
      %v3883 = vshrl.u32 %v3882, 7
      %v3884 = vsub.s32 %v3881, %v3883
      %v3885 = vrot.slane %v3871, %v3884
      %v3886 = vcombine.high %v3878, %v3878
      %3890 = vmatprep.subr.mxu0 0.0
      %3891 = vmatpush1.msra.mxu0 %v1582
      %3892 = vmatprep.subr.mxu0 0.0
      %3893 = vmatpush1.msra.mxu0 %v1583
      %3894 = vmatprep.subr.mxu0 0.0
      %3895 = vmatpush1.msra.mxu0 %v1584
      %3896 = vmatprep.subr.mxu0 0.0
      %3897 = vmatpush1.msra.mxu0 %v1585
      %3898 = vmatprep.subr.mxu0 0.0
      %3899 = vmatpush1.msra.mxu0 %v1586
      %3900 = vmatprep.subr.mxu0 0.0
      %3901 = vmatpush1.msra.mxu0 %v1587
      %3902 = vmatprep.subr.mxu0 0.0
      %3903 = vmatpush1.msra.mxu0 %v1588
      %3904 = vmatprep.subr.mxu0 0.0
      %3905 = vmatpush1.msra.mxu0 %v1589
      %3906 = vmatprep.subr.mxu0 0.0
      %3907 = vmatpush1.msra.mxu0 %v1590
      %3908 = vmatprep.subr.mxu0 0.0
      %3909 = vmatpush1.msra.mxu0 %v1591
      %3910 = vmatprep.subr.mxu0 0.0
      %3911 = vmatpush1.msra.mxu0 %v1592
      %3912 = vmatprep.subr.mxu0 0.0
      %3913 = vmatpush1.msra.mxu0 %v1593
      %3914 = vmatprep.subr.mxu0 0.0
      %3915 = vmatpush1.msra.mxu0 %v1594
      %3916 = vmatprep.subr.mxu0 0.0
      %3917 = vmatpush1.msra.mxu0 %v1595
      %3918 = vmatprep.subr.mxu0 0.0
      %3919 = vmatpush1.msra.mxu0 %v1596
      %3920 = vmatprep.subr.mxu0 0.0
      %3921 = vmatpush1.msra.mxu0 %v1597
      %3922 = vmatprep.subr.mxu0 0.0
      %3923 = vmatpush1.msra.mxu0 %v1598
      %3924 = vmatprep.subr.mxu0 0.0
      %3925 = vmatpush1.msra.mxu0 %v1599
      %3926 = vmatprep.subr.mxu0 0.0
      %3927 = vmatpush1.msra.mxu0 %v1600
      %3928 = vmatprep.subr.mxu0 0.0
      %3929 = vmatpush1.msra.mxu0 %v1601
      %3930 = vmatprep.subr.mxu0 0.0
      %3931 = vmatpush1.msra.mxu0 %v1602
      %3932 = vmatprep.subr.mxu0 0.0
      %3933 = vmatpush1.msra.mxu0 %v1603
      %3934 = vmatprep.subr.mxu0 0.0
      %3935 = vmatpush1.msra.mxu0 %v1604
      %3936 = vmatprep.subr.mxu0 0.0
      %3937 = vmatpush1.msra.mxu0 %v1605
      %3938 = vmatprep.subr.mxu0 0.0
      %3939 = vmatpush1.msra.mxu0 %v1606
      %3940 = vmatprep.subr.mxu0 0.0
      %3941 = vmatpush1.msra.mxu0 %v1607
      %3942 = vmatprep.subr.mxu0 0.0
      %3943 = vmatpush1.msra.mxu0 %v1608
      %3944 = vmatprep.subr.mxu0 0.0
      %3945 = vmatpush1.msra.mxu0 %v1609
      %3946 = vmatprep.subr.mxu0 0.0
      %3947 = vmatpush1.msra.mxu0 %v1610
      %3948 = vmatprep.subr.mxu0 0.0
      %3949 = vmatpush1.msra.mxu0 %v1611
      %3950 = vmatprep.subr.mxu0 0.0
      %3951 = vmatpush1.msra.mxu0 %v1612
      %3952 = vmatprep.subr.mxu0 0.0
      %3953 = vmatpush1.msra.mxu0 %v1613
      %3954 = vmatprep.mubr.f32.mxu0 %v3886
      %3955 = vmatmul.mubr.f32.gmra.mrb[0].mxu0 %v3878
      %v3956 = vpop.f32.mrb[0].mxu0
      %v3957 = vadd.f32 0.0, %v3956
      %v3958 = vpop.f32.mrb[0].mxu0
      %3959 = vdwg.mxu0
      %3960 = vmatprep.subr.mxu0 0.0
      %3961 = vmatpush1.msra.mxu0 %v1614
      %3962 = vmatprep.subr.mxu0 0.0
      %3963 = vmatpush1.msra.mxu0 %v1615
      %3964 = vmatprep.subr.mxu0 0.0
      %3965 = vmatpush1.msra.mxu0 %v1616
      %3966 = vmatprep.subr.mxu0 0.0
      %3967 = vmatpush1.msra.mxu0 %v1617
      %3968 = vmatprep.subr.mxu0 0.0
      %3969 = vmatpush1.msra.mxu0 %v1618
      %3970 = vmatprep.subr.mxu0 0.0
      %3971 = vmatpush1.msra.mxu0 %v1619
      %3972 = vmatprep.subr.mxu0 0.0
      %3973 = vmatpush1.msra.mxu0 %v1620
      %3974 = vmatprep.subr.mxu0 0.0
      %3975 = vmatpush1.msra.mxu0 %v1621
      %3976 = vmatprep.subr.mxu0 0.0
      %3977 = vmatpush1.msra.mxu0 %v1622
      %3978 = vmatprep.subr.mxu0 0.0
      %3979 = vmatpush1.msra.mxu0 %v1623
      %3980 = vmatprep.subr.mxu0 0.0
      %3981 = vmatpush1.msra.mxu0 %v1624
      %3982 = vmatprep.subr.mxu0 0.0
      %3983 = vmatpush1.msra.mxu0 %v1625
      %3984 = vmatprep.subr.mxu0 0.0
      %3985 = vmatpush1.msra.mxu0 %v1626
      %3986 = vmatprep.subr.mxu0 0.0
      %3987 = vmatpush1.msra.mxu0 %v1627
      %3988 = vmatprep.subr.mxu0 0.0
      %3989 = vmatpush1.msra.mxu0 %v1628
      %3990 = vmatprep.subr.mxu0 0.0
      %3991 = vmatpush1.msra.mxu0 %v1629
      %3992 = vmatprep.subr.mxu0 0.0
      %3993 = vmatpush1.msra.mxu0 0.0
      %3994 = vmatprep.subr.mxu0 0.0
      %3995 = vmatpush1.msra.mxu0 0.0
      %3996 = vmatprep.subr.mxu0 0.0
      %3997 = vmatpush1.msra.mxu0 0.0
      %3998 = vmatprep.subr.mxu0 0.0
      %3999 = vmatpush1.msra.mxu0 0.0
      %4000 = vmatprep.subr.mxu0 0.0
      %4001 = vmatpush1.msra.mxu0 0.0
      %4002 = vmatprep.subr.mxu0 0.0
      %4003 = vmatpush1.msra.mxu0 0.0
      %4004 = vmatprep.subr.mxu0 0.0
      %4005 = vmatpush1.msra.mxu0 0.0
      %4006 = vmatprep.subr.mxu0 0.0
      %4007 = vmatpush1.msra.mxu0 0.0
      %4008 = vmatprep.subr.mxu0 0.0
      %4009 = vmatpush1.msra.mxu0 0.0
      %4010 = vmatprep.subr.mxu0 0.0
      %4011 = vmatpush1.msra.mxu0 0.0
      %4012 = vmatprep.subr.mxu0 0.0
      %4013 = vmatpush1.msra.mxu0 0.0
      %4014 = vmatprep.subr.mxu0 0.0
      %4015 = vmatpush1.msra.mxu0 0.0
      %4016 = vmatprep.subr.mxu0 0.0
      %4017 = vmatpush1.msra.mxu0 0.0
      %4018 = vmatprep.subr.mxu0 0.0
      %4019 = vmatpush1.msra.mxu0 0.0
      %4020 = vmatprep.subr.mxu0 0.0
      %4021 = vmatpush1.msra.mxu0 0.0
      %4022 = vmatprep.subr.mxu0 0.0
      %4023 = vmatpush1.msra.mxu0 0.0
      %4024 = vmatprep.mubr.f32.mxu0 0.0
      %4025 = vmatmul.mubr.f32.gmra.mrb[0].mxu0 %v3885
      %v4026 = vpop.f32.mrb[0].mxu0
      %v4027 = vadd.f32 %v3957, %v4026
      %v4028 = vpop.f32.mrb[0].mxu0
      %4029 = vdwg.mxu0
      %vm4030 = vcmask 254976
      %4031 = vst.msk [vmem:[%s173] sm:$0x3] %vm4030, %v1787
      %4032 = vst.msk [vmem:[%s173 + $0x2] sm:$0x3] %vm4030, %v1947
      %4033 = vst.msk [vmem:[%s173 + $0x4] sm:$0x3] %vm4030, %v2107
      %4034 = vst.msk [vmem:[%s173 + $0x6] sm:$0x3] %vm4030, %v2267
      %4035 = vst.msk [vmem:[%s173 + $0x8] sm:$0x3] %vm4030, %v2427
      %4036 = vst.msk [vmem:[%s173 + $0xa] sm:$0x3] %vm4030, %v2587
      %4037 = vst.msk [vmem:[%s173 + $0xc] sm:$0x3] %vm4030, %v2747
      %4038 = vst.msk [vmem:[%s173 + $0xe] sm:$0x3] %vm4030, %v2907
      %4039 = vst.msk [vmem:[%s173 + $0x10] sm:$0x3] %vm4030, %v3067
      %4040 = vst.msk [vmem:[%s173 + $0x12] sm:$0x3] %vm4030, %v3227
      %4041 = vst.msk [vmem:[%s173 + $0x14] sm:$0x3] %vm4030, %v3387
      %4042 = vst.msk [vmem:[%s173 + $0x16] sm:$0x3] %vm4030, %v3547
      %4043 = vst.msk [vmem:[%s173 + $0x18] sm:$0x3] %vm4030, %v3707
      %4044 = vst.msk [vmem:[%s173 + $0x1a] sm:$0x3] %vm4030, %v3867
      %4045 = vst.msk [vmem:[%s173 + $0x1c] sm:$0x3] %vm4030, %v4027
      %s4046 = smul.u32 15, %s13
      %p4047 = scmp.lt.s32.totalorder %s4046, 59
      %s4048 = scalar_select %p4047, %s4046, 59
      %s4049 = smul.addr %s4048, 2
      %s4050 = scalar_lea.vmem %s2, %s4049
      // Predicated region
      $region29: #{directional_freq_embed.1} parent=27 // pred_check
        %p4051 = pneg %p83
      $region30: #{directional_freq_embed.1} parent=27 // pred_check_branch
        %4053 = sbr.rel (%p4051) target = $region32
      $region31: #{directional_freq_embed.1} parent=27 // pred_region
        %s4054 = smul.u32 15, %s13
      $region32: #{directional_freq_embed.1} parent=27 // pred_fallthru
        _
    $region28: #{directional_freq_embed.1} parent=5 // pred_fallthru
      _
    %p4055 = scmp.le.s32.totalorder 2, %s8
    // Predicated region
    $region33: #{directional_freq_embed.1} parent=5 // pred_check
      %p4056 = pneg %p4055
    $region34: #{directional_freq_embed.1} parent=5 // pred_check_branch
      %4058 = sbr.rel (%p4056) target = $region36
    $region35: #{directional_freq_embed.1} parent=5 // pred_region
      %s4059 = ssub.s32 %s8, 2
      // Predicated region
      $region37: #{directional_freq_embed.1} parent=35 // pred_check
        %p4060 = pneg %p89
      $region38: #{directional_freq_embed.1} parent=35 // pred_check_branch
        %4062 = sbr.rel (%p4060) target = $region40
      $region39: #{directional_freq_embed.1} parent=35 // pred_region
        %s4063 = smul.u32 15, %s14
        %p4064 = scmp.lt.s32.totalorder %s4063, 59
        %s4065 = scalar_select %p4064, %s4063, 59
        %s4066 = smul.addr %s4065, 2
        %s4067 = scalar_lea.vmem %s2, %s4066
      $region40: #{directional_freq_embed.1} parent=35 // pred_fallthru
        _
    $region36: #{directional_freq_embed.1} parent=5 // pred_fallthru
      _
  $region6: #{directional_freq_embed.1} parent=0 // loop_footer
    %s12 = sadd.s32 1, %s8
  $region7: #{directional_freq_embed.1} parent=0 // loop_footer_branch
    %7 = sbr.rel target = $region3
  $region8: #{directional_freq_embed.1} parent=0 // loop_exit
    _

</llo_original>
